<compile_context>
chip_gen: v6e
topology: v6e:2x2x1
jax: 0.10.0
libtpu: 0.0.40
codegen_flags: <defaults>
</compile_context>

<pallas_src>
import math

import jax
import jax.numpy as jnp
from jax.experimental import pallas as pl
from jax.experimental.pallas import tpu as pltpu

_BN_EPS = 1e-5
_LANE = 128


# --------------------------- planning helpers --------------------------------


def _round_up(v, m):
    return -(-v // m) * m


def _round_down(v, m):
    return (v // m) * m


def _rp8(c):
    return _round_up(max(int(c), 1), 8)


def _vmem_capacity_bytes():
    try:
        return int(pltpu.get_tpu_info().vmem_capacity_bytes)
    except Exception:
        return 64 << 20  # v7x physical VMEM; conservative for v5e/v6e (128 MiB)


def _plan_launches(n, hw, stream_rows, cache_rows,
                   max_cache_bytes=20 << 20, max_tile_lanes=1 << 17):
    """Shared tiling plan for the two big (phase, batch, hw-tile) launches.

    Returns (t_hw, n_tiles, hwp, use_cache, vmem_limit_bytes), sized against the
    per-generation VMEM capacity so the same kernel is valid on v5e/v6e/v7x.
    """
    capacity = _vmem_capacity_bytes()
    budget = min(capacity // 2, 40 << 20)            # stay well under scoped/physical VMEM
    hw128 = _round_up(hw, _LANE)
    cache_bytes = 4 * _rp8(cache_rows) * n * hw128    # full pre-BN activation cache (f32)
    use_cache = cache_bytes <= min(max_cache_bytes, budget // 2)
    fixed = cache_bytes if use_cache else 0
    per_lane = 4 * 2 * stream_rows                    # double-buffered streamed blocks (f32)
    avail = max(budget - fixed, per_lane * _LANE)
    t0 = max(_LANE, min(hw128, max_tile_lanes,
                        _round_down(avail // per_lane, _LANE)))
    n_tiles = _round_up(hw128, t0) // t0
    t_hw = _round_up(_round_up(hw128, n_tiles) // n_tiles, _LANE)
    hwp = n_tiles * t_hw
    need = ((4 * _rp8(cache_rows) * n * hwp) if use_cache else 0) \
        + per_lane * t_hw + (4 << 20)
    vmem_limit = int(min(capacity - (4 << 20), max(need, 32 << 20)))
    return t_hw, n_tiles, hwp, use_cache, vmem_limit


# --------------------------- Pallas kernels ----------------------------------


def _make_conv1_kernel(count, relu_from, c_tot, c_l, n_tiles, use_cache):
    """Launch 1: fused [convl2l+convg2l -> BN_l] + [st.conv1 -> BN -> ReLU].

    Two-phase grid (phase, batch, hw-tile): phase 0 runs the (6,8)@(8,T) matmul
    once, accumulates global-batch BN sums and caches y in VMEM; phase 1
    normalizes from the cache and writes out_l / x2 (lane-dense, no junk writes).
    """
    inv_m = 1.0 / float(count)

    def kernel(x_ref, w_ref, g_ref, b_ref, ol_ref, x2_ref, s1_ref, s2_ref, *cache):
        phase = pl.program_id(0)
        step = pl.program_id(1) * n_tiles + pl.program_id(2)

        def conv():
            return jnp.dot(w_ref[...], x_ref[0], preferred_element_type=jnp.float32)

        @pl.when(jnp.logical_and(phase == 0, step == 0))
        def _init():
            s1_ref[...] = jnp.zeros_like(s1_ref)
            s2_ref[...] = jnp.zeros_like(s2_ref)

        @pl.when(phase == 0)
        def _stats():
            y = conv()
            s1_ref[...] += jnp.sum(y, axis=1, keepdims=True)
            s2_ref[...] += jnp.sum(y * y, axis=1, keepdims=True)
            if use_cache:
                cache[0][step] = y

        @pl.when(phase == 1)
        def _finalize():
            y = cache[0][step] if use_cache else conv()
            mean = s1_ref[...] * inv_m
            var = s2_ref[...] * inv_m - mean * mean
            scale = g_ref[...] * jax.lax.rsqrt(var + _BN_EPS)
            shift = b_ref[...] - mean * scale
            z = y * scale + shift                      # single FMA per element
            if relu_from < c_tot:                      # static per-row ReLU mask
                row = jax.lax.broadcasted_iota(jnp.int32, (c_tot, 1), 0)
                z = jnp.where(row >= relu_from, jnp.maximum(z, 0.0), z)
            ol_ref[0] = z[:c_l]
            x2_ref[0] = z[c_l:]

    return kernel


def _make_out_g_kernel(count, n_tiles, use_cache):
    """Launch 3: out = [out_l ; BN_g(convl2g(x_l) + st.conv2(x2+fu+lfu))].

    Same two-phase structure; the residual sum and both conv weights are fused
    in-kernel and the local rows are passed through so the full NCHW output is
    produced without an XLA concat.
    """
    inv_m = 1.0 / float(count)

    def kernel(x_ref, x2_ref, fu_ref, lfu_ref, ol_ref, wx_ref, ws_ref, g_ref,
               b_ref, o_ref, s1_ref, s2_ref, *cache):
        phase = pl.program_id(0)
        step = pl.program_id(1) * n_tiles + pl.program_id(2)

        def conv():
            s = x2_ref[0] + fu_ref[0] + lfu_ref[0]     # residual sum (half, T)
            return (jnp.dot(wx_ref[...], x_ref[0], preferred_element_type=jnp.float32)
                    + jnp.dot(ws_ref[...], s, preferred_element_type=jnp.float32))

        @pl.when(jnp.logical_and(phase == 0, step == 0))
        def _init():
            s1_ref[...] = jnp.zeros_like(s1_ref)
            s2_ref[...] = jnp.zeros_like(s2_ref)

        @pl.when(phase == 0)
        def _stats():
            y = conv()
            s1_ref[...] += jnp.sum(y, axis=1, keepdims=True)
            s2_ref[...] += jnp.sum(y * y, axis=1, keepdims=True)
            if use_cache:
                cache[0][step] = y

        @pl.when(phase == 1)
        def _finalize():
            y = cache[0][step] if use_cache else conv()
            mean = s1_ref[...] * inv_m
            var = s2_ref[...] * inv_m - mean * mean
            scale = g_ref[...] * jax.lax.rsqrt(var + _BN_EPS)
            shift = b_ref[...] - mean * scale
            z = y * scale + shift                      # act_g = Identity
            o_ref[0] = jnp.concatenate([ol_ref[0], z], axis=0)

    return kernel


def _make_fu_lfu_kernel(m_a, m_b):
    """FourierUnit + LFU FourierUnit conv+BN+ReLU fused into one launch.

    Single whole-array block per branch (fourier-domain tensors are small); the
    lane dims are zero-padded to multiples of 128 outside, and inv_m uses the
    true counts, so the BN statistics are exact.
    """

    def kernel(xa_ref, wa_ref, ga_ref, ba_ref,
               xb_ref, wb_ref, gb_ref, bb_ref, oa_ref, ob_ref):
        branches = ((xa_ref, wa_ref, ga_ref, ba_ref, oa_ref, m_a),
                    (xb_ref, wb_ref, gb_ref, bb_ref, ob_ref, m_b))
        for x_ref, w_ref, g_ref, b_ref, o_ref, m in branches:
            y = jnp.dot(w_ref[...], x_ref[...], preferred_element_type=jnp.float32)
            inv_m = 1.0 / float(m)
            mean = jnp.sum(y, axis=1, keepdims=True) * inv_m
            var = jnp.sum(y * y, axis=1, keepdims=True) * inv_m - mean * mean
            scale = g_ref[...] * jax.lax.rsqrt(var + _BN_EPS)
            shift = b_ref[...] - mean * scale
            o_ref[...] = jnp.maximum(y * scale + shift, 0.0)

    return kernel


# --------------------------- Pallas wrappers ---------------------------------


def conv1_bn_split(x3, w_a, g_a, b_a, *, relu_from, c_l, count, t_hw, n_tiles,
                   use_cache, vmem_lim):
    """Launch 1 wrapper: returns (out_l (N,c_l,HWp), x2 (N,c_tot-c_l,HWp))."""
    n, c_in, hwp = x3.shape
    c_tot = w_a.shape[0]
    c_x2 = c_tot - c_l
    g2 = g_a.reshape(c_tot, 1).astype(jnp.float32)
    b2 = b_a.reshape(c_tot, 1).astype(jnp.float32)
    kernel = _make_conv1_kernel(count, relu_from, c_tot, c_l, n_tiles, use_cache)

    if use_cache:
        xin_map = lambda p, i, t: (i * (1 - p), 0, t * (1 - p))   # phase 1: no re-DMA of x
    else:
        xin_map = lambda p, i, t: (i, 0, t)                       # recompute path streams x twice
    const2 = lambda p, i, t: (0, 0)
    out_map = lambda p, i, t: (i * p, 0, t * p)                   # phase 0 aliases block (0,0,0)

    scratch = [pltpu.VMEM((c_tot, 1), jnp.float32),
               pltpu.VMEM((c_tot, 1), jnp.float32)]
    if use_cache:
        scratch.append(pltpu.VMEM((n * n_tiles, c_tot, t_hw), jnp.float32))

    return pl.pallas_call(
        kernel,
        grid=(2, n, n_tiles),
        in_specs=[
            pl.BlockSpec((1, c_in, t_hw), xin_map),
            pl.BlockSpec((c_tot, c_in), const2),
            pl.BlockSpec((c_tot, 1), const2),
            pl.BlockSpec((c_tot, 1), const2),
        ],
        out_specs=(pl.BlockSpec((1, c_l, t_hw), out_map),
                   pl.BlockSpec((1, c_x2, t_hw), out_map)),
        out_shape=(jax.ShapeDtypeStruct((n, c_l, hwp), jnp.float32),
                   jax.ShapeDtypeStruct((n, c_x2, hwp), jnp.float32)),
        scratch_shapes=scratch,
        compiler_params=pltpu.CompilerParams(
            dimension_semantics=("arbitrary", "arbitrary", "arbitrary"),
            vmem_limit_bytes=vmem_lim),
    )(x3.astype(jnp.float32), w_a.astype(jnp.float32), g2, b2)


def out_g_call(x3, x2p, fup, lfup, out_l, wx, ws, gamma, beta, *, count, t_hw,
               n_tiles, use_cache, vmem_lim):
    """Launch 3 wrapper: returns the full (N, c_l+c_g, HWp) output."""
    n, c_in, hwp = x3.shape
    half = x2p.shape[1]
    c_l = out_l.shape[1]
    c_g = wx.shape[0]
    c_out = c_l + c_g
    g2 = gamma.reshape(c_g, 1).astype(jnp.float32)
    b2 = beta.reshape(c_g, 1).astype(jnp.float32)
    kernel = _make_out_g_kernel(count, n_tiles, use_cache)

    if use_cache:
        stream_map = lambda p, i, t: (i * (1 - p), 0, t * (1 - p))
    else:
        stream_map = lambda p, i, t: (i, 0, t)
    late_map = lambda p, i, t: (i * p, 0, t * p)   # out_l input & output: phase 1 only
    const2 = lambda p, i, t: (0, 0)

    scratch = [pltpu.VMEM((c_g, 1), jnp.float32),
               pltpu.VMEM((c_g, 1), jnp.float32)]
    if use_cache:
        scratch.append(pltpu.VMEM((n * n_tiles, c_g, t_hw), jnp.float32))

    return pl.pallas_call(
        kernel,
        grid=(2, n, n_tiles),
        in_specs=[
            pl.BlockSpec((1, c_in, t_hw), stream_map),
            pl.BlockSpec((1, half, t_hw), stream_map),
            pl.BlockSpec((1, half, t_hw), stream_map),
            pl.BlockSpec((1, half, t_hw), stream_map),
            pl.BlockSpec((1, c_l, t_hw), late_map),
            pl.BlockSpec((c_g, c_in), const2),
            pl.BlockSpec((c_g, half), const2),
            pl.BlockSpec((c_g, 1), const2),
            pl.BlockSpec((c_g, 1), const2),
        ],
        out_specs=pl.BlockSpec((1, c_out, t_hw), late_map),
        out_shape=jax.ShapeDtypeStruct((n, c_out, hwp), jnp.float32),
        scratch_shapes=scratch,
        compiler_params=pltpu.CompilerParams(
            dimension_semantics=("arbitrary", "arbitrary", "arbitrary"),
            vmem_limit_bytes=vmem_lim),
    )(x3.astype(jnp.float32), x2p, fup, lfup, out_l,
      wx.astype(jnp.float32), ws.astype(jnp.float32), g2, b2)


def _full_spec(shape):
    return pl.BlockSpec(shape, lambda i: (0,) * len(shape))


def fu_lfu_conv_bn_relu(xa, wa, ga, ba, m_a, xb, wb, gb, bb, m_b):
    """Both FourierUnit conv+BN+ReLU hot paths in a single pallas_call."""
    oa = (wa.shape[0], xa.shape[1])
    ob = (wb.shape[0], xb.shape[1])
    ga2 = ga.reshape(-1, 1).astype(jnp.float32)
    ba2 = ba.reshape(-1, 1).astype(jnp.float32)
    gb2 = gb.reshape(-1, 1).astype(jnp.float32)
    bb2 = bb.reshape(-1, 1).astype(jnp.float32)
    kernel = _make_fu_lfu_kernel(m_a, m_b)
    return pl.pallas_call(
        kernel,
        grid=(1,),
        in_specs=[_full_spec(xa.shape), _full_spec(wa.shape),
                  _full_spec(ga2.shape), _full_spec(ba2.shape),
                  _full_spec(xb.shape), _full_spec(wb.shape),
                  _full_spec(gb2.shape), _full_spec(bb2.shape)],
        out_specs=(_full_spec(oa), _full_spec(ob)),
        out_shape=(jax.ShapeDtypeStruct(oa, jnp.float32),
                   jax.ShapeDtypeStruct(ob, jnp.float32)),
    )(xa.astype(jnp.float32), wa.astype(jnp.float32), ga2, ba2,
      xb.astype(jnp.float32), wb.astype(jnp.float32), gb2, bb2)


# --------------------------- model forward -----------------------------------


def ffc_bn_act_forward(x, p):
    """FFC_BN_ACT(8, 8, 1, 0.5, 0.5, act=Identity, enable_lfu=True) forward."""
    n, c_in, h, w = x.shape
    in_cl = p["w_l2l"].shape[0]        # local input channels (4)
    out_cl = p["w_l2l"].shape[1]       # local output channels (4)
    out_cg = p["w_l2g"].shape[1]       # global output channels (4)
    half = p["st_conv1_w"].shape[1]    # SpectralTransform hidden channels (2)
    hw = h * w
    count = n * hw                     # true BN count (padded columns excluded)

    # Shared tile / cache / VMEM plan for launches 1 and 3 (worst case launch 3).
    stream_rows = _rp8(c_in) + 3 * _rp8(half) + _rp8(out_cl) + _rp8(out_cl + out_cg)
    cache_rows = max(out_cl + half, out_cg)
    t_hw, n_tiles, hwp, use_cache, vmem_lim = _plan_launches(
        n, hw, stream_rows, cache_rows)

    # Free trailing-dim reshape; zero-pad lanes only if hw is not 128-aligned
    # (zero columns contribute 0 to the BN sums, inv_m keeps the true count).
    x3 = x.reshape(n, c_in, hw).astype(jnp.float32)
    if hwp != hw:
        x3 = jnp.pad(x3, ((0, 0), (0, 0), (0, hwp - hw)))

    # --- launch 1: [convl2l+convg2l -> BN_l]  +  [st.conv1 -> BN -> ReLU] ----
    w_a = jnp.concatenate([
        jnp.concatenate([p["w_l2l"].T, p["w_g2l"].T], axis=1),           # rows 0..3
        jnp.concatenate([jnp.zeros((half, in_cl), jnp.float32),
                         p["st_conv1_w"].T], axis=1),                     # rows 4..5
    ], axis=0)                                                            # (6, 8)
    g_a = jnp.concatenate([p["bn_l_gamma"], p["st_bn1_gamma"]])
    b_a = jnp.concatenate([p["bn_l_beta"], p["st_bn1_beta"]])
    out_l, x2p = conv1_bn_split(
        x3, w_a, g_a, b_a, relu_from=out_cl, c_l=out_cl, count=count,
        t_hw=t_hw, n_tiles=n_tiles, use_cache=use_cache, vmem_lim=vmem_lim)

    # --- FourierUnit inputs (jnp.fft glue; small tensors) ---------------------
    x2 = x2p[..., :hw] if hwp != hw else x2p           # (n, half, hw)
    x2_sp = x2.reshape(n, half, h, w)
    ff = jnp.fft.rfft2(x2_sp, norm="ortho")            # (n, half, h, wr)
    wr = ff.shape[-1]
    ffc_ = jnp.transpose(ff, (1, 0, 2, 3))             # (half, n, h, wr)
    fu_cm = jnp.stack([ffc_.real, ffc_.imag], axis=1).reshape(2 * half, n * h * wr)

    # LFU spatial split (matches reference max(1, c // 4) + pad/trim logic)
    split_no = 2
    hs, ws_ = h // split_no, w // split_no
    ctu = max(1, half // (split_no ** 2))
    xs = x2_sp[:, :ctu]
    xs = jnp.concatenate(jnp.split(xs, split_no, axis=2), axis=1)
    xs = jnp.concatenate(jnp.split(xs, split_no, axis=3), axis=1)
    if xs.shape[1] < half:
        xs = jnp.concatenate(
            [xs, jnp.zeros((n, half - xs.shape[1], hs, ws_), xs.dtype)], axis=1)
    elif xs.shape[1] > half:
        xs = xs[:, :half]
    ffl = jnp.fft.rfft2(xs, norm="ortho")               # (n, half, hs, wl)
    wl = ffl.shape[-1]
    fflc = jnp.transpose(ffl, (1, 0, 2, 3))
    lfu_cm = jnp.stack([fflc.real, fflc.imag], axis=1).reshape(2 * half, n * hs * wl)

    # --- launch 2: FU and LFU conv+BN+ReLU, lane-dense via zero padding -------
    m_fu, m_lfu = fu_cm.shape[1], lfu_cm.shape[1]
    fu_padw = _round_up(m_fu, _LANE) - m_fu
    lfu_padw = _round_up(m_lfu, _LANE) - m_lfu
    fu_cm_p = jnp.pad(fu_cm, ((0, 0), (0, fu_padw))) if fu_padw else fu_cm
    lfu_cm_p = jnp.pad(lfu_cm, ((0, 0), (0, lfu_padw))) if lfu_padw else lfu_cm
    fu_y, lfu_y = fu_lfu_conv_bn_relu(
        fu_cm_p, p["fu_w"].T, p["fu_gamma"], p["fu_beta"], m_fu,
        lfu_cm_p, p["lfu_w"].T, p["lfu_gamma"], p["lfu_beta"], m_lfu)
    fu_y = fu_y[:, :m_fu]
    lfu_y = lfu_y[:, :m_lfu]

    fu_c = fu_y.reshape(half, 2, n, h, wr)
    fu_sp = jnp.fft.irfft2(fu_c[:, 0] + 1j * fu_c[:, 1], s=(h, w), norm="ortho")
    fu_nchw = jnp.transpose(fu_sp, (1, 0, 2, 3)).reshape(n, half, hw)
    lfu_c = lfu_y.reshape(half, 2, n, hs, wl)
    lfu_sp = jnp.fft.irfft2(lfu_c[:, 0] + 1j * lfu_c[:, 1], s=(hs, ws_), norm="ortho")
    lfu_t = jnp.tile(jnp.transpose(lfu_sp, (1, 0, 2, 3)),
                     (1, 1, split_no, split_no)).reshape(n, half, hw)

    if hwp != hw:
        padw = ((0, 0), (0, 0), (0, hwp - hw))
        fu_nchw = jnp.pad(fu_nchw, padw)
        lfu_t = jnp.pad(lfu_t, padw)
        x2_for3 = jnp.pad(x2, padw)     # clean (zero) padded columns keep BN_g exact
    else:
        x2_for3 = x2p

    # --- launch 3: out = [out_l ; BN_g(convl2g(x_l) + st.conv2(x2+fu+lfu))] ---
    # convl2g weight zero-padded over the global input channels so x streams
    # once, unsliced; st.conv2 applied to the in-kernel residual sum.
    wx = jnp.concatenate(
        [p["w_l2g"].T, jnp.zeros((out_cg, c_in - in_cl), jnp.float32)], axis=1)
    ws = p["st_conv2_w"].T
    out_full = out_g_call(
        x3, x2_for3, fu_nchw, lfu_t, out_l, wx, ws,
        p["bn_g_gamma"], p["bn_g_beta"], count=count,
        t_hw=t_hw, n_tiles=n_tiles, use_cache=use_cache, vmem_lim=vmem_lim)

    out = out_full[..., :hw] if hwp != hw else out_full
    return out.reshape(n, out_cl + out_cg, h, w)


# --------------------------- pure-JAX reference ------------------------------


def _reference_forward(x, p):
    """Straightforward JAX mirror of the PyTorch module (train-mode BN)."""
    hp = jax.lax.Precision.HIGHEST

    def conv(x, w):  # x: NCHW, w: (C_in, C_out)
        return jnp.einsum("nchw,co->nohw", x, w, precision=hp)

    def bn(y, g, b, relu):
        mean = jnp.mean(y, axis=(0, 2, 3), keepdims=True)
        var = jnp.mean((y - mean) ** 2, axis=(0, 2, 3), keepdims=True)
        y = (y - mean) * jax.lax.rsqrt(var + _BN_EPS)
        y = y * g.reshape(1, -1, 1, 1) + b.reshape(1, -1, 1, 1)
        return jnp.maximum(y, 0.0) if relu else y

    def fourier_unit(x, w, g, b):
        n, c, h, wd = x.shape
        ff = jnp.fft.rfft2(x, norm="ortho")
        wr = ff.shape[-1]
        ff = jnp.stack([ff.real, ff.imag], axis=2).reshape(n, 2 * c, h, wr)
        y = bn(conv(ff, w), g, b, True)
        cout = y.shape[1] // 2
        y = y.reshape(n, cout, 2, h, wr)
        return jnp.fft.irfft2(y[:, :, 0] + 1j * y[:, :, 1], s=(h, wd), norm="ortho")

    in_cl = p["w_l2l"].shape[0]
    x_l, x_g = x[:, :in_cl], x[:, in_cl:]
    out_l = bn(conv(x_l, p["w_l2l"]) + conv(x_g, p["w_g2l"]),
               p["bn_l_gamma"], p["bn_l_beta"], False)
    x2 = bn(conv(x_g, p["st_conv1_w"]), p["st_bn1_gamma"], p["st_bn1_beta"], True)
    output = fourier_unit(x2, p["fu_w"], p["fu_gamma"], p["fu_beta"])
    n, c, h, w = x2.shape
    split_no = 2
    ctu = max(1, c // (split_no ** 2))
    xs = x2[:, :ctu]
    xs = jnp.concatenate(jnp.split(xs, split_no, axis=2), axis=1)
    xs = jnp.concatenate(jnp.split(xs, split_no, axis=3), axis=1)
    if xs.shape[1] < c:
        xs = jnp.concatenate(
            [xs, jnp.zeros((n, c - xs.shape[1], xs.shape[2], xs.shape[3]), xs.dtype)],
            axis=1)
    elif xs.shape[1] > c:
        xs = xs[:, :c]
    xs = fourier_unit(xs, p["lfu_w"], p["lfu_gamma"], p["lfu_beta"])
    xs = jnp.tile(xs, (1, 1, split_no, split_no))
    st_out = conv(x2 + output + xs, p["st_conv2_w"])
    out_g = bn(conv(x_l, p["w_l2g"]) + st_out, p["bn_g_gamma"], p["bn_g_beta"], False)
    return jnp.concatenate([out_l, out_g], axis=1)


# --------------------------- parameters --------------------------------------


def init_params(key):
    ks = jax.random.split(key, 17)

    def w(k, cin, cout):
        return jax.random.normal(k, (cin, cout), jnp.float32) / math.sqrt(cin)

    def gamma(k, c):
        return 1.0 + 0.1 * jax.random.normal(k, (c,), jnp.float32)

    def beta(k, c):
        return 0.1 * jax.random.normal(k, (c,), jnp.float32)

    in_cl, in_cg, out_cl, out_cg = 4, 4, 4, 4
    half = out_cg // 2  # SpectralTransform hidden channels = 2
    return dict(
        w_l2l=w(ks[0], in_cl, out_cl),
        w_g2l=w(ks[1], in_cg, out_cl),
        w_l2g=w(ks[2], in_cl, out_cg),
        st_conv1_w=w(ks[3], in_cg, half),
        st_bn1_gamma=gamma(ks[4], half), st_bn1_beta=beta(ks[5], half),
        fu_w=w(ks[6], 2 * half, 2 * half),
        fu_gamma=gamma(ks[7], 2 * half), fu_beta=beta(ks[8], 2 * half),
        lfu_w=w(ks[9], 2 * half, 2 * half),
        lfu_gamma=gamma(ks[10], 2 * half), lfu_beta=beta(ks[11], 2 * half),
        st_conv2_w=w(ks[12], half, out_cg),
        bn_l_gamma=gamma(ks[13], out_cl), bn_l_beta=beta(ks[14], out_cl),
        bn_g_gamma=gamma(ks[15], out_cg), bn_g_beta=beta(ks[16], out_cg),
    )


if __name__ == "__main__":
    N, C_IN, H, W = 2, 8, 16, 16
    C_OUT = 8
    key = jax.random.PRNGKey(0)
    kx, kp = jax.random.split(key)
    x = jax.random.normal(kx, (N, C_IN, H, W), jnp.float32)
    params = init_params(kp)

    fwd = jax.jit(ffc_bn_act_forward)
    out = jax.block_until_ready(fwd(x, params))

    assert out.shape == (N, C_OUT, H, W), out.shape
    assert out.dtype == jnp.float32
    assert bool(jnp.all(jnp.isfinite(out)))

    ref = jax.block_until_ready(jax.jit(_reference_forward)(x, params))
    max_err = float(jnp.max(jnp.abs(out - ref)))
    assert max_err < 5e-2, f"max abs error vs pure-JAX reference: {max_err}"

    print("KERNEL_OK")
</pallas_src>

<mosaic_0001>
module attributes {stable_mosaic.version = 11 : i64} {
  func.func @kernel(%arg0: i32, %arg1: i32, %arg2: i32, %arg3: memref<1x8x256xf32, #tpu.memory_space<vmem>>, %arg4: memref<6x8xf32, #tpu.memory_space<vmem>>, %arg5: memref<6x1xf32, #tpu.memory_space<vmem>>, %arg6: memref<6x1xf32, #tpu.memory_space<vmem>>, %arg7: memref<1x4x256xf32, #tpu.memory_space<vmem>>, %arg8: memref<1x2x256xf32, #tpu.memory_space<vmem>>, %arg9: memref<6x1xf32, #tpu.memory_space<vmem>>, %arg10: memref<6x1xf32, #tpu.memory_space<vmem>>, %arg11: memref<2x6x256xf32, #tpu.memory_space<vmem>>) attributes {dimension_semantics = [#tpu.dimension_semantics<arbitrary>, #tpu.dimension_semantics<arbitrary>, #tpu.dimension_semantics<arbitrary>], iteration_bounds = array<i64: 2, 2, 1>, scalar_prefetch = 0 : i64, scratch_operands = 3 : i64, tpu.core_type = #tpu.core_type<tc>, window_params = [{transform_indices = @transform_0, window_bounds = array<i64: 1, 8, 256>}, {pipeline_mode = #tpu.pipeline_mode<synchronous>, transform_indices = @transform_1, window_bounds = array<i64: 6, 8>}, {pipeline_mode = #tpu.pipeline_mode<synchronous>, transform_indices = @transform_2, window_bounds = array<i64: 6, 1>}, {pipeline_mode = #tpu.pipeline_mode<synchronous>, transform_indices = @transform_3, window_bounds = array<i64: 6, 1>}, {transform_indices = @transform_4, window_bounds = array<i64: 1, 4, 256>}, {transform_indices = @transform_5, window_bounds = array<i64: 1, 2, 256>}]} {
    %c1_i32 = arith.constant 1 : i32
    %0 = arith.muli %arg1, %c1_i32 : i32
    %1 = arith.addi %0, %arg2 : i32
    %c0_i32 = arith.constant 0 : i32
    %2 = arith.cmpi eq, %arg0, %c0_i32 : i32
    %c0_i32_0 = arith.constant 0 : i32
    %3 = arith.cmpi eq, %1, %c0_i32_0 : i32
    %4 = arith.andi %2, %3 : i1
    %5 = arith.extui %4 : i1 to i32
    %c0_i32_1 = arith.constant 0 : i32
    %6 = arith.cmpi ne, %5, %c0_i32_1 : i32
    scf.if %6 {
      %cst = arith.constant 0.000000e+00 : f32
      %13 = vector.broadcast %cst : f32 to vector<6x1xf32>
      %c0 = arith.constant 0 : index
      %c0_6 = arith.constant 0 : index
      %14 = vector.load %arg9[%c0, %c0_6] : memref<6x1xf32, #tpu.memory_space<vmem>>, vector<6x1xf32>
      tpu.vector_store %arg9[%c0, %c0_6], %13 {strides = array<i32>} : memref<6x1xf32, #tpu.memory_space<vmem>>, vector<6x1xf32>,
      %cst_7 = arith.constant 0.000000e+00 : f32
      %15 = vector.broadcast %cst_7 : f32 to vector<6x1xf32>
      %c0_8 = arith.constant 0 : index
      %c0_9 = arith.constant 0 : index
      %16 = vector.load %arg10[%c0_8, %c0_9] : memref<6x1xf32, #tpu.memory_space<vmem>>, vector<6x1xf32>
      tpu.vector_store %arg10[%c0_8, %c0_9], %15 {strides = array<i32>} : memref<6x1xf32, #tpu.memory_space<vmem>>, vector<6x1xf32>,
    } else {
    }
    %c0_i32_2 = arith.constant 0 : i32
    %7 = arith.cmpi eq, %arg0, %c0_i32_2 : i32
    %8 = arith.extui %7 : i1 to i32
    %c0_i32_3 = arith.constant 0 : i32
    %9 = arith.cmpi ne, %8, %c0_i32_3 : i32
    scf.if %9 {
      %c0 = arith.constant 0 : index
      %c0_6 = arith.constant 0 : index
      %13 = vector.load %arg4[%c0, %c0_6] : memref<6x8xf32, #tpu.memory_space<vmem>>, vector<6x8xf32>
      %c0_7 = arith.constant 0 : index
      %c0_8 = arith.constant 0 : index
      %c0_9 = arith.constant 0 : index
      %14 = vector.load %arg3[%c0_7, %c0_8, %c0_9] : memref<1x8x256xf32, #tpu.memory_space<vmem>>, vector<1x8x256xf32>
      %15 = vector.shape_cast %14 : vector<1x8x256xf32> to vector<8x256xf32>
      %cst = arith.constant dense<0.000000e+00> : vector<6x256xf32>
      %16 = tpu.matmul %13, %15, %cst {dimension_numbers = #tpu.dot_dimension_numbers<[1], [0], [0], [1], [0, 0, 1, 1], [], []>} : vector<6x8xf32>, vector<8x256xf32>, vector<6x256xf32> -> vector<6x256xf32>
      %c0_10 = arith.constant 0 : index
      %c0_11 = arith.constant 0 : index
      %17 = vector.load %arg9[%c0_10, %c0_11] : memref<6x1xf32, #tpu.memory_space<vmem>>, vector<6x1xf32>
      %cst_12 = arith.constant dense<0.000000e+00> : vector<6xf32>
      %18 = vector.multi_reduction <add>, %16, %cst_12 [1] : vector<6x256xf32> to vector<6xf32>
      %19 = vector.shape_cast %18 : vector<6xf32> to vector<6x1xf32>
      %20 = arith.addf %17, %19 : vector<6x1xf32>
      %c0_13 = arith.constant 0 : index
      %c0_14 = arith.constant 0 : index
      %21 = vector.load %arg9[%c0_13, %c0_14] : memref<6x1xf32, #tpu.memory_space<vmem>>, vector<6x1xf32>
      tpu.vector_store %arg9[%c0_13, %c0_14], %20 {strides = array<i32>} : memref<6x1xf32, #tpu.memory_space<vmem>>, vector<6x1xf32>,
      %c0_15 = arith.constant 0 : index
      %c0_16 = arith.constant 0 : index
      %22 = vector.load %arg10[%c0_15, %c0_16] : memref<6x1xf32, #tpu.memory_space<vmem>>, vector<6x1xf32>
      %23 = arith.mulf %16, %16 : vector<6x256xf32>
      %cst_17 = arith.constant dense<0.000000e+00> : vector<6xf32>
      %24 = vector.multi_reduction <add>, %23, %cst_17 [1] : vector<6x256xf32> to vector<6xf32>
      %25 = vector.shape_cast %24 : vector<6xf32> to vector<6x1xf32>
      %26 = arith.addf %22, %25 : vector<6x1xf32>
      %c0_18 = arith.constant 0 : index
      %c0_19 = arith.constant 0 : index
      %27 = vector.load %arg10[%c0_18, %c0_19] : memref<6x1xf32, #tpu.memory_space<vmem>>, vector<6x1xf32>
      tpu.vector_store %arg10[%c0_18, %c0_19], %26 {strides = array<i32>} : memref<6x1xf32, #tpu.memory_space<vmem>>, vector<6x1xf32>,
      %28 = arith.index_cast %1 : i32 to index
      %c0_20 = arith.constant 0 : index
      %c0_21 = arith.constant 0 : index
      %29 = vector.load %arg11[%28, %c0_20, %c0_21] : memref<2x6x256xf32, #tpu.memory_space<vmem>>, vector<1x6x256xf32>
      %30 = vector.shape_cast %29 : vector<1x6x256xf32> to vector<6x256xf32>
      %31 = vector.shape_cast %16 : vector<6x256xf32> to vector<1x6x256xf32>
      tpu.vector_store %arg11[%28, %c0_20, %c0_21], %31 {strides = array<i32>} : memref<2x6x256xf32, #tpu.memory_space<vmem>>, vector<1x6x256xf32>,
    } else {
    }
    %c1_i32_4 = arith.constant 1 : i32
    %10 = arith.cmpi eq, %arg0, %c1_i32_4 : i32
    %11 = arith.extui %10 : i1 to i32
    %c0_i32_5 = arith.constant 0 : i32
    %12 = arith.cmpi ne, %11, %c0_i32_5 : i32
    scf.if %12 {
      %13 = arith.index_cast %1 : i32 to index
      %c0 = arith.constant 0 : index
      %c0_6 = arith.constant 0 : index
      %14 = vector.load %arg11[%13, %c0, %c0_6] : memref<2x6x256xf32, #tpu.memory_space<vmem>>, vector<1x6x256xf32>
      %15 = vector.shape_cast %14 : vector<1x6x256xf32> to vector<6x256xf32>
      %c0_7 = arith.constant 0 : index
      %c0_8 = arith.constant 0 : index
      %16 = vector.load %arg9[%c0_7, %c0_8] : memref<6x1xf32, #tpu.memory_space<vmem>>, vector<6x1xf32>
      %cst = arith.constant 0.001953125 : f32
      %17 = vector.broadcast %cst : f32 to vector<6x1xf32>
      %18 = arith.mulf %16, %17 : vector<6x1xf32>
      %c0_9 = arith.constant 0 : index
      %c0_10 = arith.constant 0 : index
      %19 = vector.load %arg10[%c0_9, %c0_10] : memref<6x1xf32, #tpu.memory_space<vmem>>, vector<6x1xf32>
      %cst_11 = arith.constant 0.001953125 : f32
      %20 = vector.broadcast %cst_11 : f32 to vector<6x1xf32>
      %21 = arith.mulf %19, %20 : vector<6x1xf32>
      %22 = arith.mulf %18, %18 : vector<6x1xf32>
      %23 = arith.subf %21, %22 : vector<6x1xf32>
      %c0_12 = arith.constant 0 : index
      %c0_13 = arith.constant 0 : index
      %24 = vector.load %arg5[%c0_12, %c0_13] : memref<6x1xf32, #tpu.memory_space<vmem>>, vector<6x1xf32>
      %cst_14 = arith.constant 9.99999974E-6 : f32
      %25 = vector.broadcast %cst_14 : f32 to vector<6x1xf32>
      %26 = arith.addf %23, %25 : vector<6x1xf32>
      %27 = math.rsqrt %26 : vector<6x1xf32>
      %28 = arith.mulf %24, %27 : vector<6x1xf32>
      %c0_15 = arith.constant 0 : index
      %c0_16 = arith.constant 0 : index
      %29 = vector.load %arg6[%c0_15, %c0_16] : memref<6x1xf32, #tpu.memory_space<vmem>>, vector<6x1xf32>
      %30 = arith.mulf %18, %28 : vector<6x1xf32>
      %31 = arith.subf %29, %30 : vector<6x1xf32>
      %32 = vector.broadcast %28 : vector<6x1xf32> to vector<6x256xf32>
      %33 = arith.mulf %15, %32 : vector<6x256xf32>
      %34 = vector.broadcast %31 : vector<6x1xf32> to vector<6x256xf32>
      %35 = arith.addf %33, %34 : vector<6x256xf32>
      %36 = tpu.iota {dimensions = array<i32: 0>} : vector<6x1xi32>
      %c4_i32 = arith.constant 4 : i32
      %37 = vector.broadcast %c4_i32 : i32 to vector<6x1xi32>
      %38 = arith.cmpi sge, %36, %37 : vector<6x1xi32>
      %cst_17 = arith.constant 0.000000e+00 : f32
      %39 = vector.broadcast %cst_17 : f32 to vector<6x256xf32>
      %40 = arith.maximumf %35, %39 : vector<6x256xf32>
      %41 = vector.shape_cast %38 : vector<6x1xi1> to vector<6x1xi1>
      %42 = vector.broadcast %41 : vector<6x1xi1> to vector<6x256xi1>
      %43 = arith.select %42, %40, %35 : vector<6x256xi1>, vector<6x256xf32>
      %44 = vector.extract_strided_slice %43 {offsets = [0, 0], sizes = [4, 256], strides = [1, 1]} : vector<6x256xf32> to vector<4x256xf32>
      %c0_18 = arith.constant 0 : index
      %c0_19 = arith.constant 0 : index
      %c0_20 = arith.constant 0 : index
      %45 = vector.load %arg7[%c0_18, %c0_19, %c0_20] : memref<1x4x256xf32, #tpu.memory_space<vmem>>, vector<1x4x256xf32>
      %46 = vector.shape_cast %45 : vector<1x4x256xf32> to vector<4x256xf32>
      %47 = vector.shape_cast %44 : vector<4x256xf32> to vector<1x4x256xf32>
      tpu.vector_store %arg7[%c0_18, %c0_19, %c0_20], %47 {strides = array<i32>} : memref<1x4x256xf32, #tpu.memory_space<vmem>>, vector<1x4x256xf32>,
      %48 = vector.extract_strided_slice %43 {offsets = [4, 0], sizes = [2, 256], strides = [1, 1]} : vector<6x256xf32> to vector<2x256xf32>
      %c0_21 = arith.constant 0 : index
      %c0_22 = arith.constant 0 : index
      %c0_23 = arith.constant 0 : index
      %49 = vector.load %arg8[%c0_21, %c0_22, %c0_23] : memref<1x2x256xf32, #tpu.memory_space<vmem>>, vector<1x2x256xf32>
      %50 = vector.shape_cast %49 : vector<1x2x256xf32> to vector<2x256xf32>
      %51 = vector.shape_cast %48 : vector<2x256xf32> to vector<1x2x256xf32>
      tpu.vector_store %arg8[%c0_21, %c0_22, %c0_23], %51 {strides = array<i32>} : memref<1x2x256xf32, #tpu.memory_space<vmem>>, vector<1x2x256xf32>,
    } else {
    }
    return
  }
  func.func @transform_0(%arg0: i32, %arg1: i32, %arg2: i32) -> (i32, i32, i32) {
    %c1_i32 = arith.constant 1 : i32
    %0 = arith.subi %c1_i32, %arg0 : i32
    %1 = arith.muli %arg1, %0 : i32
    %c1_i32_0 = arith.constant 1 : i32
    %2 = arith.subi %c1_i32_0, %arg0 : i32
    %3 = arith.muli %arg2, %2 : i32
    %c0_i32 = arith.constant 0 : i32
    %c0_i32_1 = arith.constant 0 : i32
    return %1, %c0_i32, %3 : i32, i32, i32
  }
  func.func @transform_1(%arg0: i32, %arg1: i32, %arg2: i32) -> (i32, i32) {
    %c0_i32 = arith.constant 0 : i32
    %c0_i32_0 = arith.constant 0 : i32
    %c0_i32_1 = arith.constant 0 : i32
    return %c0_i32, %c0_i32_0 : i32, i32
  }
  func.func @transform_2(%arg0: i32, %arg1: i32, %arg2: i32) -> (i32, i32) {
    %c0_i32 = arith.constant 0 : i32
    %c0_i32_0 = arith.constant 0 : i32
    %c0_i32_1 = arith.constant 0 : i32
    return %c0_i32, %c0_i32_0 : i32, i32
  }
  func.func @transform_3(%arg0: i32, %arg1: i32, %arg2: i32) -> (i32, i32) {
    %c0_i32 = arith.constant 0 : i32
    %c0_i32_0 = arith.constant 0 : i32
    %c0_i32_1 = arith.constant 0 : i32
    return %c0_i32, %c0_i32_0 : i32, i32
  }
  func.func @transform_4(%arg0: i32, %arg1: i32, %arg2: i32) -> (i32, i32, i32) {
    %0 = arith.muli %arg1, %arg0 : i32
    %1 = arith.muli %arg2, %arg0 : i32
    %c0_i32 = arith.constant 0 : i32
    %c0_i32_0 = arith.constant 0 : i32
    return %0, %c0_i32, %1 : i32, i32, i32
  }
  func.func @transform_5(%arg0: i32, %arg1: i32, %arg2: i32) -> (i32, i32, i32) {
    %0 = arith.muli %arg1, %arg0 : i32
    %1 = arith.muli %arg2, %arg0 : i32
    %c0_i32 = arith.constant 0 : i32
    %c0_i32_0 = arith.constant 0 : i32
    return %0, %c0_i32, %1 : i32, i32, i32
  }
}

module attributes {stable_mosaic.version = 11 : i64} {
  func.func @kernel(%arg0: i32, %arg1: memref<4x384xf32, #tpu.memory_space<vmem>>, %arg2: memref<4x4xf32, #tpu.memory_space<vmem>>, %arg3: memref<4x1xf32, #tpu.memory_space<vmem>>, %arg4: memref<4x1xf32, #tpu.memory_space<vmem>>, %arg5: memref<4x128xf32, #tpu.memory_space<vmem>>, %arg6: memref<4x4xf32, #tpu.memory_space<vmem>>, %arg7: memref<4x1xf32, #tpu.memory_space<vmem>>, %arg8: memref<4x1xf32, #tpu.memory_space<vmem>>, %arg9: memref<4x384xf32, #tpu.memory_space<vmem>>, %arg10: memref<4x128xf32, #tpu.memory_space<vmem>>) attributes {dimension_semantics = [#tpu.dimension_semantics<arbitrary>], iteration_bounds = array<i64: 1>, scalar_prefetch = 0 : i64, scratch_operands = 0 : i64, tpu.core_type = #tpu.core_type<tc>, window_params = [{pipeline_mode = #tpu.pipeline_mode<synchronous>, transform_indices = @transform_0, window_bounds = array<i64: 4, 384>}, {pipeline_mode = #tpu.pipeline_mode<synchronous>, transform_indices = @transform_1, window_bounds = array<i64: 4, 4>}, {pipeline_mode = #tpu.pipeline_mode<synchronous>, transform_indices = @transform_2, window_bounds = array<i64: 4, 1>}, {pipeline_mode = #tpu.pipeline_mode<synchronous>, transform_indices = @transform_3, window_bounds = array<i64: 4, 1>}, {pipeline_mode = #tpu.pipeline_mode<synchronous>, transform_indices = @transform_4, window_bounds = array<i64: 4, 128>}, {pipeline_mode = #tpu.pipeline_mode<synchronous>, transform_indices = @transform_5, window_bounds = array<i64: 4, 4>}, {pipeline_mode = #tpu.pipeline_mode<synchronous>, transform_indices = @transform_6, window_bounds = array<i64: 4, 1>}, {pipeline_mode = #tpu.pipeline_mode<synchronous>, transform_indices = @transform_7, window_bounds = array<i64: 4, 1>}, {pipeline_mode = #tpu.pipeline_mode<synchronous>, transform_indices = @transform_8, window_bounds = array<i64: 4, 384>}, {pipeline_mode = #tpu.pipeline_mode<synchronous>, transform_indices = @transform_9, window_bounds = array<i64: 4, 128>}]} {
    %c0 = arith.constant 0 : index
    %c0_0 = arith.constant 0 : index
    %0 = vector.load %arg2[%c0, %c0_0] : memref<4x4xf32, #tpu.memory_space<vmem>>, vector<4x4xf32>
    %c0_1 = arith.constant 0 : index
    %c0_2 = arith.constant 0 : index
    %1 = vector.load %arg1[%c0_1, %c0_2] : memref<4x384xf32, #tpu.memory_space<vmem>>, vector<4x384xf32>
    %cst = arith.constant dense<0.000000e+00> : vector<4x384xf32>
    %2 = tpu.matmul %0, %1, %cst {dimension_numbers = #tpu.dot_dimension_numbers<[1], [0], [0], [1], [0, 0, 1, 1], [], []>} : vector<4x4xf32>, vector<4x384xf32>, vector<4x384xf32> -> vector<4x384xf32>
    %cst_3 = arith.constant dense<0.000000e+00> : vector<4xf32>
    %3 = vector.multi_reduction <add>, %2, %cst_3 [1] : vector<4x384xf32> to vector<4xf32>
    %4 = vector.shape_cast %3 : vector<4xf32> to vector<4x1xf32>
    %cst_4 = arith.constant 0.00347222225 : f32
    %5 = vector.broadcast %cst_4 : f32 to vector<4x1xf32>
    %6 = arith.mulf %4, %5 : vector<4x1xf32>
    %7 = arith.mulf %2, %2 : vector<4x384xf32>
    %cst_5 = arith.constant dense<0.000000e+00> : vector<4xf32>
    %8 = vector.multi_reduction <add>, %7, %cst_5 [1] : vector<4x384xf32> to vector<4xf32>
    %9 = vector.shape_cast %8 : vector<4xf32> to vector<4x1xf32>
    %cst_6 = arith.constant 0.00347222225 : f32
    %10 = vector.broadcast %cst_6 : f32 to vector<4x1xf32>
    %11 = arith.mulf %9, %10 : vector<4x1xf32>
    %12 = arith.mulf %6, %6 : vector<4x1xf32>
    %13 = arith.subf %11, %12 : vector<4x1xf32>
    %c0_7 = arith.constant 0 : index
    %c0_8 = arith.constant 0 : index
    %14 = vector.load %arg3[%c0_7, %c0_8] : memref<4x1xf32, #tpu.memory_space<vmem>>, vector<4x1xf32>
    %cst_9 = arith.constant 9.99999974E-6 : f32
    %15 = vector.broadcast %cst_9 : f32 to vector<4x1xf32>
    %16 = arith.addf %13, %15 : vector<4x1xf32>
    %17 = math.rsqrt %16 : vector<4x1xf32>
    %18 = arith.mulf %14, %17 : vector<4x1xf32>
    %c0_10 = arith.constant 0 : index
    %c0_11 = arith.constant 0 : index
    %19 = vector.load %arg4[%c0_10, %c0_11] : memref<4x1xf32, #tpu.memory_space<vmem>>, vector<4x1xf32>
    %20 = arith.mulf %6, %18 : vector<4x1xf32>
    %21 = arith.subf %19, %20 : vector<4x1xf32>
    %22 = vector.broadcast %18 : vector<4x1xf32> to vector<4x384xf32>
    %23 = arith.mulf %2, %22 : vector<4x384xf32>
    %24 = vector.broadcast %21 : vector<4x1xf32> to vector<4x384xf32>
    %25 = arith.addf %23, %24 : vector<4x384xf32>
    %cst_12 = arith.constant 0.000000e+00 : f32
    %26 = vector.broadcast %cst_12 : f32 to vector<4x384xf32>
    %27 = arith.maximumf %25, %26 : vector<4x384xf32>
    %c0_13 = arith.constant 0 : index
    %c0_14 = arith.constant 0 : index
    %28 = vector.load %arg9[%c0_13, %c0_14] : memref<4x384xf32, #tpu.memory_space<vmem>>, vector<4x384xf32>
    tpu.vector_store %arg9[%c0_13, %c0_14], %27 {strides = array<i32>} : memref<4x384xf32, #tpu.memory_space<vmem>>, vector<4x384xf32>,
    %c0_15 = arith.constant 0 : index
    %c0_16 = arith.constant 0 : index
    %29 = vector.load %arg6[%c0_15, %c0_16] : memref<4x4xf32, #tpu.memory_space<vmem>>, vector<4x4xf32>
    %c0_17 = arith.constant 0 : index
    %c0_18 = arith.constant 0 : index
    %30 = vector.load %arg5[%c0_17, %c0_18] : memref<4x128xf32, #tpu.memory_space<vmem>>, vector<4x128xf32>
    %cst_19 = arith.constant dense<0.000000e+00> : vector<4x128xf32>
    %31 = tpu.matmul %29, %30, %cst_19 {dimension_numbers = #tpu.dot_dimension_numbers<[1], [0], [0], [1], [0, 0, 1, 1], [], []>} : vector<4x4xf32>, vector<4x128xf32>, vector<4x128xf32> -> vector<4x128xf32>
    %cst_20 = arith.constant dense<0.000000e+00> : vector<4xf32>
    %32 = vector.multi_reduction <add>, %31, %cst_20 [1] : vector<4x128xf32> to vector<4xf32>
    %33 = vector.shape_cast %32 : vector<4xf32> to vector<4x1xf32>
    %cst_21 = arith.constant 1.250000e-02 : f32
    %34 = vector.broadcast %cst_21 : f32 to vector<4x1xf32>
    %35 = arith.mulf %33, %34 : vector<4x1xf32>
    %36 = arith.mulf %31, %31 : vector<4x128xf32>
    %cst_22 = arith.constant dense<0.000000e+00> : vector<4xf32>
    %37 = vector.multi_reduction <add>, %36, %cst_22 [1] : vector<4x128xf32> to vector<4xf32>
    %38 = vector.shape_cast %37 : vector<4xf32> to vector<4x1xf32>
    %cst_23 = arith.constant 1.250000e-02 : f32
    %39 = vector.broadcast %cst_23 : f32 to vector<4x1xf32>
    %40 = arith.mulf %38, %39 : vector<4x1xf32>
    %41 = arith.mulf %35, %35 : vector<4x1xf32>
    %42 = arith.subf %40, %41 : vector<4x1xf32>
    %c0_24 = arith.constant 0 : index
    %c0_25 = arith.constant 0 : index
    %43 = vector.load %arg7[%c0_24, %c0_25] : memref<4x1xf32, #tpu.memory_space<vmem>>, vector<4x1xf32>
    %cst_26 = arith.constant 9.99999974E-6 : f32
    %44 = vector.broadcast %cst_26 : f32 to vector<4x1xf32>
    %45 = arith.addf %42, %44 : vector<4x1xf32>
    %46 = math.rsqrt %45 : vector<4x1xf32>
    %47 = arith.mulf %43, %46 : vector<4x1xf32>
    %c0_27 = arith.constant 0 : index
    %c0_28 = arith.constant 0 : index
    %48 = vector.load %arg8[%c0_27, %c0_28] : memref<4x1xf32, #tpu.memory_space<vmem>>, vector<4x1xf32>
    %49 = arith.mulf %35, %47 : vector<4x1xf32>
    %50 = arith.subf %48, %49 : vector<4x1xf32>
    %51 = vector.broadcast %47 : vector<4x1xf32> to vector<4x128xf32>
    %52 = arith.mulf %31, %51 : vector<4x128xf32>
    %53 = vector.broadcast %50 : vector<4x1xf32> to vector<4x128xf32>
    %54 = arith.addf %52, %53 : vector<4x128xf32>
    %cst_29 = arith.constant 0.000000e+00 : f32
    %55 = vector.broadcast %cst_29 : f32 to vector<4x128xf32>
    %56 = arith.maximumf %54, %55 : vector<4x128xf32>
    %c0_30 = arith.constant 0 : index
    %c0_31 = arith.constant 0 : index
    %57 = vector.load %arg10[%c0_30, %c0_31] : memref<4x128xf32, #tpu.memory_space<vmem>>, vector<4x128xf32>
    tpu.vector_store %arg10[%c0_30, %c0_31], %56 {strides = array<i32>} : memref<4x128xf32, #tpu.memory_space<vmem>>, vector<4x128xf32>,
    return
  }
  func.func @transform_0(%arg0: i32) -> (i32, i32) {
    %c0_i32 = arith.constant 0 : i32
    %c0_i32_0 = arith.constant 0 : i32
    %c0_i32_1 = arith.constant 0 : i32
    return %c0_i32, %c0_i32_0 : i32, i32
  }
  func.func @transform_1(%arg0: i32) -> (i32, i32) {
    %c0_i32 = arith.constant 0 : i32
    %c0_i32_0 = arith.constant 0 : i32
    %c0_i32_1 = arith.constant 0 : i32
    return %c0_i32, %c0_i32_0 : i32, i32
  }
  func.func @transform_2(%arg0: i32) -> (i32, i32) {
    %c0_i32 = arith.constant 0 : i32
    %c0_i32_0 = arith.constant 0 : i32
    %c0_i32_1 = arith.constant 0 : i32
    return %c0_i32, %c0_i32_0 : i32, i32
  }
  func.func @transform_3(%arg0: i32) -> (i32, i32) {
    %c0_i32 = arith.constant 0 : i32
    %c0_i32_0 = arith.constant 0 : i32
    %c0_i32_1 = arith.constant 0 : i32
    return %c0_i32, %c0_i32_0 : i32, i32
  }
  func.func @transform_4(%arg0: i32) -> (i32, i32) {
    %c0_i32 = arith.constant 0 : i32
    %c0_i32_0 = arith.constant 0 : i32
    %c0_i32_1 = arith.constant 0 : i32
    return %c0_i32, %c0_i32_0 : i32, i32
  }
  func.func @transform_5(%arg0: i32) -> (i32, i32) {
    %c0_i32 = arith.constant 0 : i32
    %c0_i32_0 = arith.constant 0 : i32
    %c0_i32_1 = arith.constant 0 : i32
    return %c0_i32, %c0_i32_0 : i32, i32
  }
  func.func @transform_6(%arg0: i32) -> (i32, i32) {
    %c0_i32 = arith.constant 0 : i32
    %c0_i32_0 = arith.constant 0 : i32
    %c0_i32_1 = arith.constant 0 : i32
    return %c0_i32, %c0_i32_0 : i32, i32
  }
  func.func @transform_7(%arg0: i32) -> (i32, i32) {
    %c0_i32 = arith.constant 0 : i32
    %c0_i32_0 = arith.constant 0 : i32
    %c0_i32_1 = arith.constant 0 : i32
    return %c0_i32, %c0_i32_0 : i32, i32
  }
  func.func @transform_8(%arg0: i32) -> (i32, i32) {
    %c0_i32 = arith.constant 0 : i32
    %c0_i32_0 = arith.constant 0 : i32
    %c0_i32_1 = arith.constant 0 : i32
    return %c0_i32, %c0_i32_0 : i32, i32
  }
  func.func @transform_9(%arg0: i32) -> (i32, i32) {
    %c0_i32 = arith.constant 0 : i32
    %c0_i32_0 = arith.constant 0 : i32
    %c0_i32_1 = arith.constant 0 : i32
    return %c0_i32, %c0_i32_0 : i32, i32
  }
}

module attributes {stable_mosaic.version = 11 : i64} {
  func.func @kernel(%arg0: i32, %arg1: i32, %arg2: i32, %arg3: memref<1x8x256xf32, #tpu.memory_space<vmem>>, %arg4: memref<1x2x256xf32, #tpu.memory_space<vmem>>, %arg5: memref<1x2x256xf32, #tpu.memory_space<vmem>>, %arg6: memref<1x2x256xf32, #tpu.memory_space<vmem>>, %arg7: memref<1x4x256xf32, #tpu.memory_space<vmem>>, %arg8: memref<4x8xf32, #tpu.memory_space<vmem>>, %arg9: memref<4x2xf32, #tpu.memory_space<vmem>>, %arg10: memref<4x1xf32, #tpu.memory_space<vmem>>, %arg11: memref<4x1xf32, #tpu.memory_space<vmem>>, %arg12: memref<1x8x256xf32, #tpu.memory_space<vmem>>, %arg13: memref<4x1xf32, #tpu.memory_space<vmem>>, %arg14: memref<4x1xf32, #tpu.memory_space<vmem>>, %arg15: memref<2x4x256xf32, #tpu.memory_space<vmem>>) attributes {dimension_semantics = [#tpu.dimension_semantics<arbitrary>, #tpu.dimension_semantics<arbitrary>, #tpu.dimension_semantics<arbitrary>], iteration_bounds = array<i64: 2, 2, 1>, scalar_prefetch = 0 : i64, scratch_operands = 3 : i64, tpu.core_type = #tpu.core_type<tc>, window_params = [{transform_indices = @transform_0, window_bounds = array<i64: 1, 8, 256>}, {transform_indices = @transform_1, window_bounds = array<i64: 1, 2, 256>}, {transform_indices = @transform_2, window_bounds = array<i64: 1, 2, 256>}, {transform_indices = @transform_3, window_bounds = array<i64: 1, 2, 256>}, {transform_indices = @transform_4, window_bounds = array<i64: 1, 4, 256>}, {pipeline_mode = #tpu.pipeline_mode<synchronous>, transform_indices = @transform_5, window_bounds = array<i64: 4, 8>}, {pipeline_mode = #tpu.pipeline_mode<synchronous>, transform_indices = @transform_6, window_bounds = array<i64: 4, 2>}, {pipeline_mode = #tpu.pipeline_mode<synchronous>, transform_indices = @transform_7, window_bounds = array<i64: 4, 1>}, {pipeline_mode = #tpu.pipeline_mode<synchronous>, transform_indices = @transform_8, window_bounds = array<i64: 4, 1>}, {transform_indices = @transform_9, window_bounds = array<i64: 1, 8, 256>}]} {
    %c1_i32 = arith.constant 1 : i32
    %0 = arith.muli %arg1, %c1_i32 : i32
    %1 = arith.addi %0, %arg2 : i32
    %c0_i32 = arith.constant 0 : i32
    %2 = arith.cmpi eq, %arg0, %c0_i32 : i32
    %c0_i32_0 = arith.constant 0 : i32
    %3 = arith.cmpi eq, %1, %c0_i32_0 : i32
    %4 = arith.andi %2, %3 : i1
    %5 = arith.extui %4 : i1 to i32
    %c0_i32_1 = arith.constant 0 : i32
    %6 = arith.cmpi ne, %5, %c0_i32_1 : i32
    scf.if %6 {
      %cst = arith.constant 0.000000e+00 : f32
      %13 = vector.broadcast %cst : f32 to vector<4x1xf32>
      %c0 = arith.constant 0 : index
      %c0_6 = arith.constant 0 : index
      %14 = vector.load %arg13[%c0, %c0_6] : memref<4x1xf32, #tpu.memory_space<vmem>>, vector<4x1xf32>
      tpu.vector_store %arg13[%c0, %c0_6], %13 {strides = array<i32>} : memref<4x1xf32, #tpu.memory_space<vmem>>, vector<4x1xf32>,
      %cst_7 = arith.constant 0.000000e+00 : f32
      %15 = vector.broadcast %cst_7 : f32 to vector<4x1xf32>
      %c0_8 = arith.constant 0 : index
      %c0_9 = arith.constant 0 : index
      %16 = vector.load %arg14[%c0_8, %c0_9] : memref<4x1xf32, #tpu.memory_space<vmem>>, vector<4x1xf32>
      tpu.vector_store %arg14[%c0_8, %c0_9], %15 {strides = array<i32>} : memref<4x1xf32, #tpu.memory_space<vmem>>, vector<4x1xf32>,
    } else {
    }
    %c0_i32_2 = arith.constant 0 : i32
    %7 = arith.cmpi eq, %arg0, %c0_i32_2 : i32
    %8 = arith.extui %7 : i1 to i32
    %c0_i32_3 = arith.constant 0 : i32
    %9 = arith.cmpi ne, %8, %c0_i32_3 : i32
    scf.if %9 {
      %c0 = arith.constant 0 : index
      %c0_6 = arith.constant 0 : index
      %c0_7 = arith.constant 0 : index
      %13 = vector.load %arg4[%c0, %c0_6, %c0_7] : memref<1x2x256xf32, #tpu.memory_space<vmem>>, vector<1x2x256xf32>
      %14 = vector.shape_cast %13 : vector<1x2x256xf32> to vector<2x256xf32>
      %c0_8 = arith.constant 0 : index
      %c0_9 = arith.constant 0 : index
      %c0_10 = arith.constant 0 : index
      %15 = vector.load %arg5[%c0_8, %c0_9, %c0_10] : memref<1x2x256xf32, #tpu.memory_space<vmem>>, vector<1x2x256xf32>
      %16 = vector.shape_cast %15 : vector<1x2x256xf32> to vector<2x256xf32>
      %17 = arith.addf %14, %16 : vector<2x256xf32>
      %c0_11 = arith.constant 0 : index
      %c0_12 = arith.constant 0 : index
      %c0_13 = arith.constant 0 : index
      %18 = vector.load %arg6[%c0_11, %c0_12, %c0_13] : memref<1x2x256xf32, #tpu.memory_space<vmem>>, vector<1x2x256xf32>
      %19 = vector.shape_cast %18 : vector<1x2x256xf32> to vector<2x256xf32>
      %20 = arith.addf %17, %19 : vector<2x256xf32>
      %c0_14 = arith.constant 0 : index
      %c0_15 = arith.constant 0 : index
      %21 = vector.load %arg8[%c0_14, %c0_15] : memref<4x8xf32, #tpu.memory_space<vmem>>, vector<4x8xf32>
      %c0_16 = arith.constant 0 : index
      %c0_17 = arith.constant 0 : index
      %c0_18 = arith.constant 0 : index
      %22 = vector.load %arg3[%c0_16, %c0_17, %c0_18] : memref<1x8x256xf32, #tpu.memory_space<vmem>>, vector<1x8x256xf32>
      %23 = vector.shape_cast %22 : vector<1x8x256xf32> to vector<8x256xf32>
      %cst = arith.constant dense<0.000000e+00> : vector<4x256xf32>
      %24 = tpu.matmul %21, %23, %cst {dimension_numbers = #tpu.dot_dimension_numbers<[1], [0], [0], [1], [0, 0, 1, 1], [], []>} : vector<4x8xf32>, vector<8x256xf32>, vector<4x256xf32> -> vector<4x256xf32>
      %c0_19 = arith.constant 0 : index
      %c0_20 = arith.constant 0 : index
      %25 = vector.load %arg9[%c0_19, %c0_20] : memref<4x2xf32, #tpu.memory_space<vmem>>, vector<4x2xf32>
      %cst_21 = arith.constant dense<0.000000e+00> : vector<4x256xf32>
      %26 = tpu.matmul %25, %20, %cst_21 {dimension_numbers = #tpu.dot_dimension_numbers<[1], [0], [0], [1], [0, 0, 1, 1], [], []>} : vector<4x2xf32>, vector<2x256xf32>, vector<4x256xf32> -> vector<4x256xf32>
      %27 = arith.addf %24, %26 : vector<4x256xf32>
      %c0_22 = arith.constant 0 : index
      %c0_23 = arith.constant 0 : index
      %28 = vector.load %arg13[%c0_22, %c0_23] : memref<4x1xf32, #tpu.memory_space<vmem>>, vector<4x1xf32>
      %cst_24 = arith.constant dense<0.000000e+00> : vector<4xf32>
      %29 = vector.multi_reduction <add>, %27, %cst_24 [1] : vector<4x256xf32> to vector<4xf32>
      %30 = vector.shape_cast %29 : vector<4xf32> to vector<4x1xf32>
      %31 = arith.addf %28, %30 : vector<4x1xf32>
      %c0_25 = arith.constant 0 : index
      %c0_26 = arith.constant 0 : index
      %32 = vector.load %arg13[%c0_25, %c0_26] : memref<4x1xf32, #tpu.memory_space<vmem>>, vector<4x1xf32>
      tpu.vector_store %arg13[%c0_25, %c0_26], %31 {strides = array<i32>} : memref<4x1xf32, #tpu.memory_space<vmem>>, vector<4x1xf32>,
      %c0_27 = arith.constant 0 : index
      %c0_28 = arith.constant 0 : index
      %33 = vector.load %arg14[%c0_27, %c0_28] : memref<4x1xf32, #tpu.memory_space<vmem>>, vector<4x1xf32>
      %34 = arith.mulf %27, %27 : vector<4x256xf32>
      %cst_29 = arith.constant dense<0.000000e+00> : vector<4xf32>
      %35 = vector.multi_reduction <add>, %34, %cst_29 [1] : vector<4x256xf32> to vector<4xf32>
      %36 = vector.shape_cast %35 : vector<4xf32> to vector<4x1xf32>
      %37 = arith.addf %33, %36 : vector<4x1xf32>
      %c0_30 = arith.constant 0 : index
      %c0_31 = arith.constant 0 : index
      %38 = vector.load %arg14[%c0_30, %c0_31] : memref<4x1xf32, #tpu.memory_space<vmem>>, vector<4x1xf32>
      tpu.vector_store %arg14[%c0_30, %c0_31], %37 {strides = array<i32>} : memref<4x1xf32, #tpu.memory_space<vmem>>, vector<4x1xf32>,
      %39 = arith.index_cast %1 : i32 to index
      %c0_32 = arith.constant 0 : index
      %c0_33 = arith.constant 0 : index
      %40 = vector.load %arg15[%39, %c0_32, %c0_33] : memref<2x4x256xf32, #tpu.memory_space<vmem>>, vector<1x4x256xf32>
      %41 = vector.shape_cast %40 : vector<1x4x256xf32> to vector<4x256xf32>
      %42 = vector.shape_cast %27 : vector<4x256xf32> to vector<1x4x256xf32>
      tpu.vector_store %arg15[%39, %c0_32, %c0_33], %42 {strides = array<i32>} : memref<2x4x256xf32, #tpu.memory_space<vmem>>, vector<1x4x256xf32>,
    } else {
    }
    %c1_i32_4 = arith.constant 1 : i32
    %10 = arith.cmpi eq, %arg0, %c1_i32_4 : i32
    %11 = arith.extui %10 : i1 to i32
    %c0_i32_5 = arith.constant 0 : i32
    %12 = arith.cmpi ne, %11, %c0_i32_5 : i32
    scf.if %12 {
      %13 = arith.index_cast %1 : i32 to index
      %c0 = arith.constant 0 : index
      %c0_6 = arith.constant 0 : index
      %14 = vector.load %arg15[%13, %c0, %c0_6] : memref<2x4x256xf32, #tpu.memory_space<vmem>>, vector<1x4x256xf32>
      %15 = vector.shape_cast %14 : vector<1x4x256xf32> to vector<4x256xf32>
      %c0_7 = arith.constant 0 : index
      %c0_8 = arith.constant 0 : index
      %16 = vector.load %arg13[%c0_7, %c0_8] : memref<4x1xf32, #tpu.memory_space<vmem>>, vector<4x1xf32>
      %cst = arith.constant 0.001953125 : f32
      %17 = vector.broadcast %cst : f32 to vector<4x1xf32>
      %18 = arith.mulf %16, %17 : vector<4x1xf32>
      %c0_9 = arith.constant 0 : index
      %c0_10 = arith.constant 0 : index
      %19 = vector.load %arg14[%c0_9, %c0_10] : memref<4x1xf32, #tpu.memory_space<vmem>>, vector<4x1xf32>
      %cst_11 = arith.constant 0.001953125 : f32
      %20 = vector.broadcast %cst_11 : f32 to vector<4x1xf32>
      %21 = arith.mulf %19, %20 : vector<4x1xf32>
      %22 = arith.mulf %18, %18 : vector<4x1xf32>
      %23 = arith.subf %21, %22 : vector<4x1xf32>
      %c0_12 = arith.constant 0 : index
      %c0_13 = arith.constant 0 : index
      %24 = vector.load %arg10[%c0_12, %c0_13] : memref<4x1xf32, #tpu.memory_space<vmem>>, vector<4x1xf32>
      %cst_14 = arith.constant 9.99999974E-6 : f32
      %25 = vector.broadcast %cst_14 : f32 to vector<4x1xf32>
      %26 = arith.addf %23, %25 : vector<4x1xf32>
      %27 = math.rsqrt %26 : vector<4x1xf32>
      %28 = arith.mulf %24, %27 : vector<4x1xf32>
      %c0_15 = arith.constant 0 : index
      %c0_16 = arith.constant 0 : index
      %29 = vector.load %arg11[%c0_15, %c0_16] : memref<4x1xf32, #tpu.memory_space<vmem>>, vector<4x1xf32>
      %30 = arith.mulf %18, %28 : vector<4x1xf32>
      %31 = arith.subf %29, %30 : vector<4x1xf32>
      %32 = vector.broadcast %28 : vector<4x1xf32> to vector<4x256xf32>
      %33 = arith.mulf %15, %32 : vector<4x256xf32>
      %34 = vector.broadcast %31 : vector<4x1xf32> to vector<4x256xf32>
      %35 = arith.addf %33, %34 : vector<4x256xf32>
      %c0_17 = arith.constant 0 : index
      %c0_18 = arith.constant 0 : index
      %c0_19 = arith.constant 0 : index
      %36 = vector.load %arg7[%c0_17, %c0_18, %c0_19] : memref<1x4x256xf32, #tpu.memory_space<vmem>>, vector<1x4x256xf32>
      %37 = vector.shape_cast %36 : vector<1x4x256xf32> to vector<4x256xf32>
      %38 = tpu.concatenate %37, %35 in 0 : vector<4x256xf32>, vector<4x256xf32> -> vector<8x256xf32>
      %c0_20 = arith.constant 0 : index
      %c0_21 = arith.constant 0 : index
      %c0_22 = arith.constant 0 : index
      %39 = vector.load %arg12[%c0_20, %c0_21, %c0_22] : memref<1x8x256xf32, #tpu.memory_space<vmem>>, vector<1x8x256xf32>
      %40 = vector.shape_cast %39 : vector<1x8x256xf32> to vector<8x256xf32>
      %41 = vector.shape_cast %38 : vector<8x256xf32> to vector<1x8x256xf32>
      tpu.vector_store %arg12[%c0_20, %c0_21, %c0_22], %41 {strides = array<i32>} : memref<1x8x256xf32, #tpu.memory_space<vmem>>, vector<1x8x256xf32>,
    } else {
    }
    return
  }
  func.func @transform_0(%arg0: i32, %arg1: i32, %arg2: i32) -> (i32, i32, i32) {
    %c1_i32 = arith.constant 1 : i32
    %0 = arith.subi %c1_i32, %arg0 : i32
    %1 = arith.muli %arg1, %0 : i32
    %c1_i32_0 = arith.constant 1 : i32
    %2 = arith.subi %c1_i32_0, %arg0 : i32
    %3 = arith.muli %arg2, %2 : i32
    %c0_i32 = arith.constant 0 : i32
    %c0_i32_1 = arith.constant 0 : i32
    return %1, %c0_i32, %3 : i32, i32, i32
  }
  func.func @transform_1(%arg0: i32, %arg1: i32, %arg2: i32) -> (i32, i32, i32) {
    %c1_i32 = arith.constant 1 : i32
    %0 = arith.subi %c1_i32, %arg0 : i32
    %1 = arith.muli %arg1, %0 : i32
    %c1_i32_0 = arith.constant 1 : i32
    %2 = arith.subi %c1_i32_0, %arg0 : i32
    %3 = arith.muli %arg2, %2 : i32
    %c0_i32 = arith.constant 0 : i32
    %c0_i32_1 = arith.constant 0 : i32
    return %1, %c0_i32, %3 : i32, i32, i32
  }
  func.func @transform_2(%arg0: i32, %arg1: i32, %arg2: i32) -> (i32, i32, i32) {
    %c1_i32 = arith.constant 1 : i32
    %0 = arith.subi %c1_i32, %arg0 : i32
    %1 = arith.muli %arg1, %0 : i32
    %c1_i32_0 = arith.constant 1 : i32
    %2 = arith.subi %c1_i32_0, %arg0 : i32
    %3 = arith.muli %arg2, %2 : i32
    %c0_i32 = arith.constant 0 : i32
    %c0_i32_1 = arith.constant 0 : i32
    return %1, %c0_i32, %3 : i32, i32, i32
  }
  func.func @transform_3(%arg0: i32, %arg1: i32, %arg2: i32) -> (i32, i32, i32) {
    %c1_i32 = arith.constant 1 : i32
    %0 = arith.subi %c1_i32, %arg0 : i32
    %1 = arith.muli %arg1, %0 : i32
    %c1_i32_0 = arith.constant 1 : i32
    %2 = arith.subi %c1_i32_0, %arg0 : i32
    %3 = arith.muli %arg2, %2 : i32
    %c0_i32 = arith.constant 0 : i32
    %c0_i32_1 = arith.constant 0 : i32
    return %1, %c0_i32, %3 : i32, i32, i32
  }
  func.func @transform_4(%arg0: i32, %arg1: i32, %arg2: i32) -> (i32, i32, i32) {
    %0 = arith.muli %arg1, %arg0 : i32
    %1 = arith.muli %arg2, %arg0 : i32
    %c0_i32 = arith.constant 0 : i32
    %c0_i32_0 = arith.constant 0 : i32
    return %0, %c0_i32, %1 : i32, i32, i32
  }
  func.func @transform_5(%arg0: i32, %arg1: i32, %arg2: i32) -> (i32, i32) {
    %c0_i32 = arith.constant 0 : i32
    %c0_i32_0 = arith.constant 0 : i32
    %c0_i32_1 = arith.constant 0 : i32
    return %c0_i32, %c0_i32_0 : i32, i32
  }
  func.func @transform_6(%arg0: i32, %arg1: i32, %arg2: i32) -> (i32, i32) {
    %c0_i32 = arith.constant 0 : i32
    %c0_i32_0 = arith.constant 0 : i32
    %c0_i32_1 = arith.constant 0 : i32
    return %c0_i32, %c0_i32_0 : i32, i32
  }
  func.func @transform_7(%arg0: i32, %arg1: i32, %arg2: i32) -> (i32, i32) {
    %c0_i32 = arith.constant 0 : i32
    %c0_i32_0 = arith.constant 0 : i32
    %c0_i32_1 = arith.constant 0 : i32
    return %c0_i32, %c0_i32_0 : i32, i32
  }
  func.func @transform_8(%arg0: i32, %arg1: i32, %arg2: i32) -> (i32, i32) {
    %c0_i32 = arith.constant 0 : i32
    %c0_i32_0 = arith.constant 0 : i32
    %c0_i32_1 = arith.constant 0 : i32
    return %c0_i32, %c0_i32_0 : i32, i32
  }
  func.func @transform_9(%arg0: i32, %arg1: i32, %arg2: i32) -> (i32, i32, i32) {
    %0 = arith.muli %arg1, %arg0 : i32
    %1 = arith.muli %arg2, %arg0 : i32
    %c0_i32 = arith.constant 0 : i32
    %c0_i32_0 = arith.constant 0 : i32
    return %0, %c0_i32, %1 : i32, i32, i32
  }
}

</mosaic_0001>

<llo_original>
// kernel: ffc_bn_act_forward.3
$region0: #{ffc_bn_act_forward.3}
  #allocation0 [shape = 'u32[]', space=smem, size = 0x4, offset = 0x4, fixed_abs, tag = 'smem constant byte address 0x4 - core index']
  #allocation1 [shape = 'u32[144,128]{1,0:T(1,128)}', space=vmem, size = 0x12000, scoped, tag = 'internal scratch']
  #allocation2 [shape = 'f32[6,1]{1,0:T(8,128)}', space=vmem, size = 0x1000, scoped, tag = 'scratch operand']
  #allocation3 [shape = 'f32[6,1]{1,0:T(8,128)}', space=vmem, size = 0x1000, scoped, tag = 'scratch operand']
  #allocation4 [shape = 'f32[2,6,256]{2,1,0:T(8,128)}', space=vmem, size = 0x4000, scoped, tag = 'scratch operand']
  %s0 = inlined_call_operand.vmem [shape: f32[2,8,256], index: 0, kind: input, shape index: {}]
  %s1 = inlined_call_operand.vmem [shape: f32[6,8], index: 1, kind: input, shape index: {}]
  %s2 = inlined_call_operand.vmem [shape: f32[6,1], index: 2, kind: input, shape index: {}]
  %s3 = inlined_call_operand.vmem [shape: f32[6,1], index: 3, kind: input, shape index: {}]
  %s4 = inlined_call_operand.vmem [shape: f32[2,4,256], index: 4, kind: output, shape index: {0}]
  %s5 = inlined_call_operand.vmem [shape: f32[2,2,256], index: 5, kind: output, shape index: {1}]
  %6 = xla_tuple %s4, %s5
  %s7 = sld [smem:[#allocation0]]
  $region69: #{ffc_bn_act_forward.3} parent=0
    _
  %s9 = ssub.s32 1, %s7
  %s10 = scalar_select 0, %s9, %s7
  loop: start=0, step=1, limit=6
  $region2: #{ffc_bn_act_forward.3} parent=0 // loop_pre_header
    _
  $region3: #{ffc_bn_act_forward.3} parent=0 // loop_header
    %s12 = sphi 0, %s16
    %p13 = scmp.ge.s32.totalorder %s12, 6
    %s19 = sphi 0, %s38
    %s20 = sphi 0, %s34
    %s21 = sphi 0, %s30
    %s22 = sphi 0, %s19
    %s23 = sphi 0, %s20
    %s24 = sphi 0, %s21
    %s25 = sphi 0, %s22
    %s26 = sphi 0, %s23
    %s27 = sphi 0, %s24
    %s49 = sphi 0, %s51
    %s52 = sphi 0, %s49
    %s53 = sphi 0, %s52
    %s69 = sphi 0, %s53
    %s73 = sphi 0, %s73
    %s75 = sphi 0, %s73
    %s76 = sphi 0, %s75
    %s90 = sphi 0, %s76
    %s94 = sphi 0, %s94
    %s96 = sphi 0, %s94
    %s97 = sphi 0, %s96
    %s111 = sphi 0, %s97
    %s115 = sphi 0, %s115
    %s117 = sphi 0, %s115
    %s118 = sphi 0, %s117
    %s132 = sphi 0, %s118
    %s144 = sphi 0, %s146
    %s147 = sphi 0, %s144
    %s148 = sphi 0, %s147
    %s164 = sphi 0, %s148
    %s176 = sphi 0, %s178
    %s179 = sphi 0, %s176
    %s180 = sphi 0, %s179
    %s196 = sphi 0, %s180
  $region4: #{ffc_bn_act_forward.3} parent=0 // loop_header_branch
    %15 = sbr.rel (%p13) target = $region8
  $region5: #{ffc_bn_act_forward.3} parent=0 // loop_body
    %s17 = ssub.s32 %s12, 1
    %s18 = ssub.s32 %s12, 2
    %s28 = sadd.s32 1, %s21
    %p29 = scmp.ge.s32.totalorder %s28, 1
    %s30 = scalar_select %p29, 0, %s28
    %s31 = sadd.s32 1, %s20
    %s32 = scalar_select %p29, %s31, %s20
    %p33 = scmp.ge.s32.totalorder %s32, 2
    %s34 = scalar_select %p33, 0, %s32
    %s35 = sadd.s32 1, %s19
    %s36 = scalar_select %p33, %s35, %s19
    %p37 = scmp.ge.s32.totalorder %s36, 2
    %s38 = scalar_select %p37, 0, %s36
    %s39 = ssub.s32 1, %s19
    %s40 = smul.u32 %s20, %s39
    %s41 = smul.u32 %s21, %s39
    %s42 = ssub.s32 1, %s38
    %s43 = smul.u32 %s34, %s42
    %s44 = smul.u32 %s30, %s42
    %s45 = ssub.s32 %s40, %s43
    %s46 = ssub.s32 %s41, %s44
    %s47 = sor.u32 %s45, %s46
    %p48 = scmp.eq.s32.totalorder %s47, 0
    %s50 = sadd.s32 %s49, 1
    %s51 = scalar_select %p48, %s49, %s50
    %p54 = pneg %p48
    %p55 = scmp.eq.s32.totalorder %s12, 3
    %p56 = por %p54, %p55
    %p57 = scmp.ne.s32.totalorder %s49, %s52
    %p58 = scmp.eq.s32.totalorder %s12, 0
    %p59 = por %p57, %p58
    %p60 = scmp.ne.s32.totalorder %s49, %s52
    %p61 = scmp.eq.s32.totalorder %s17, 3
    %p62 = por %p60, %p61
    %p63 = scmp.ne.s32.totalorder %s52, %s53
    %p64 = scmp.eq.s32.totalorder %s17, 0
    %p65 = por %p63, %p64
    %p66 = scmp.ne.s32.totalorder %s52, %s53
    %p67 = scmp.eq.s32.totalorder %s18, 3
    %p68 = por %p66, %p67
    %p70 = scmp.ne.s32.totalorder %s53, %s69
    %p71 = scmp.eq.s32.totalorder %s18, 0
    %p72 = por %p70, %p71
    %s74 = sadd.s32 %s73, 1
    %p77 = scmp.eq.s32.totalorder %s12, 3
    %p78 = scmp.ne.s32.totalorder %s73, %s75
    %p79 = scmp.eq.s32.totalorder %s12, 0
    %p80 = por %p78, %p79
    %p81 = scmp.ne.s32.totalorder %s73, %s75
    %p82 = scmp.eq.s32.totalorder %s17, 3
    %p83 = por %p81, %p82
    %p84 = scmp.ne.s32.totalorder %s75, %s76
    %p85 = scmp.eq.s32.totalorder %s17, 0
    %p86 = por %p84, %p85
    %p87 = scmp.ne.s32.totalorder %s75, %s76
    %p88 = scmp.eq.s32.totalorder %s18, 3
    %p89 = por %p87, %p88
    %p91 = scmp.ne.s32.totalorder %s76, %s90
    %p92 = scmp.eq.s32.totalorder %s18, 0
    %p93 = por %p91, %p92
    %s95 = sadd.s32 %s94, 1
    %p98 = scmp.eq.s32.totalorder %s12, 3
    %p99 = scmp.ne.s32.totalorder %s94, %s96
    %p100 = scmp.eq.s32.totalorder %s12, 0
    %p101 = por %p99, %p100
    %p102 = scmp.ne.s32.totalorder %s94, %s96
    %p103 = scmp.eq.s32.totalorder %s17, 3
    %p104 = por %p102, %p103
    %p105 = scmp.ne.s32.totalorder %s96, %s97
    %p106 = scmp.eq.s32.totalorder %s17, 0
    %p107 = por %p105, %p106
    %p108 = scmp.ne.s32.totalorder %s96, %s97
    %p109 = scmp.eq.s32.totalorder %s18, 3
    %p110 = por %p108, %p109
    %p112 = scmp.ne.s32.totalorder %s97, %s111
    %p113 = scmp.eq.s32.totalorder %s18, 0
    %p114 = por %p112, %p113
    %s116 = sadd.s32 %s115, 1
    %p119 = scmp.eq.s32.totalorder %s12, 3
    %p120 = scmp.ne.s32.totalorder %s115, %s117
    %p121 = scmp.eq.s32.totalorder %s12, 0
    %p122 = por %p120, %p121
    %p123 = scmp.ne.s32.totalorder %s115, %s117
    %p124 = scmp.eq.s32.totalorder %s17, 3
    %p125 = por %p123, %p124
    %p126 = scmp.ne.s32.totalorder %s117, %s118
    %p127 = scmp.eq.s32.totalorder %s17, 0
    %p128 = por %p126, %p127
    %p129 = scmp.ne.s32.totalorder %s117, %s118
    %p130 = scmp.eq.s32.totalorder %s18, 3
    %p131 = por %p129, %p130
    %p133 = scmp.ne.s32.totalorder %s118, %s132
    %p134 = scmp.eq.s32.totalorder %s18, 0
    %p135 = por %p133, %p134
    %s136 = smul.u32 %s20, %s19
    %s137 = smul.u32 %s21, %s19
    %s138 = smul.u32 %s34, %s38
    %s139 = smul.u32 %s30, %s38
    %s140 = ssub.s32 %s136, %s138
    %s141 = ssub.s32 %s137, %s139
    %s142 = sor.u32 %s140, %s141
    %p143 = scmp.eq.s32.totalorder %s142, 0
    %s145 = sadd.s32 %s144, 1
    %s146 = scalar_select %p143, %s144, %s145
    %p149 = pneg %p143
    %p150 = scmp.eq.s32.totalorder %s12, 3
    %p151 = por %p149, %p150
    %p152 = scmp.ne.s32.totalorder %s144, %s147
    %p153 = scmp.eq.s32.totalorder %s12, 0
    %p154 = por %p152, %p153
    %p155 = scmp.ne.s32.totalorder %s144, %s147
    %p156 = scmp.eq.s32.totalorder %s17, 3
    %p157 = por %p155, %p156
    %p158 = scmp.ne.s32.totalorder %s147, %s148
    %p159 = scmp.eq.s32.totalorder %s17, 0
    %p160 = por %p158, %p159
    %p161 = scmp.ne.s32.totalorder %s147, %s148
    %p162 = scmp.eq.s32.totalorder %s18, 3
    %p163 = por %p161, %p162
    %p165 = scmp.ne.s32.totalorder %s148, %s164
    %p166 = scmp.eq.s32.totalorder %s18, 0
    %p167 = por %p165, %p166
    %s168 = smul.u32 %s20, %s19
    %s169 = smul.u32 %s21, %s19
    %s170 = smul.u32 %s34, %s38
    %s171 = smul.u32 %s30, %s38
    %s172 = ssub.s32 %s168, %s170
    %s173 = ssub.s32 %s169, %s171
    %s174 = sor.u32 %s172, %s173
    %p175 = scmp.eq.s32.totalorder %s174, 0
    %s177 = sadd.s32 %s176, 1
    %s178 = scalar_select %p175, %s176, %s177
    %p181 = pneg %p175
    %p182 = scmp.eq.s32.totalorder %s12, 3
    %p183 = por %p181, %p182
    %p184 = scmp.ne.s32.totalorder %s176, %s179
    %p185 = scmp.eq.s32.totalorder %s12, 0
    %p186 = por %p184, %p185
    %p187 = scmp.ne.s32.totalorder %s176, %s179
    %p188 = scmp.eq.s32.totalorder %s17, 3
    %p189 = por %p187, %p188
    %p190 = scmp.ne.s32.totalorder %s179, %s180
    %p191 = scmp.eq.s32.totalorder %s17, 0
    %p192 = por %p190, %p191
    %p193 = scmp.ne.s32.totalorder %s179, %s180
    %p194 = scmp.eq.s32.totalorder %s18, 3
    %p195 = por %p193, %p194
    %p197 = scmp.ne.s32.totalorder %s180, %s196
    %p198 = scmp.eq.s32.totalorder %s18, 0
    %p199 = por %p197, %p198
    %p200 = scmp.le.s32.totalorder 1, %s12
    %p201 = scmp.lt.s32.totalorder %s12, 5
    %p202 = pnand %p200, %p201
    %p203 = pneg %p202
    // Predicated region
    $region9: #{ffc_bn_act_forward.3} parent=5 // pred_check
      _
    $region10: #{ffc_bn_act_forward.3} parent=5 // pred_check_branch
      %205 = sbr.rel (%p202) target = $region12
    $region11: #{ffc_bn_act_forward.3} parent=5 // pred_region
      %s206 = ssub.s32 %s12, 1
      // Predicated region
      $region13: #{ffc_bn_act_forward.3} parent=11 // pred_check
        %p207 = pneg %p86
      $region14: #{ffc_bn_act_forward.3} parent=11 // pred_check_branch
        %209 = sbr.rel (%p207) target = $region16
      $region15: #{ffc_bn_act_forward.3} parent=11 // pred_region
        _
      $region16: #{ffc_bn_act_forward.3} parent=11 // pred_fallthru
        _
      // Predicated region
      $region17: #{ffc_bn_act_forward.3} parent=11 // pred_check
        %p210 = pneg %p107
      $region18: #{ffc_bn_act_forward.3} parent=11 // pred_check_branch
        %212 = sbr.rel (%p210) target = $region20
      $region19: #{ffc_bn_act_forward.3} parent=11 // pred_region
        _
      $region20: #{ffc_bn_act_forward.3} parent=11 // pred_fallthru
        _
      // Predicated region
      $region21: #{ffc_bn_act_forward.3} parent=11 // pred_check
        %p213 = pneg %p128
      $region22: #{ffc_bn_act_forward.3} parent=11 // pred_check_branch
        %215 = sbr.rel (%p213) target = $region24
      $region23: #{ffc_bn_act_forward.3} parent=11 // pred_region
        _
      $region24: #{ffc_bn_act_forward.3} parent=11 // pred_fallthru
        _
    $region12: #{ffc_bn_act_forward.3} parent=5 // pred_fallthru
      _
    %p216 = scmp.lt.s32.totalorder %s12, 4
    // Predicated region
    $region25: #{ffc_bn_act_forward.3} parent=5 // pred_check
      %p217 = pneg %p216
    $region26: #{ffc_bn_act_forward.3} parent=5 // pred_check_branch
      %219 = sbr.rel (%p217) target = $region28
    $region27: #{ffc_bn_act_forward.3} parent=5 // pred_region
      // Predicated region
      $region29: #{ffc_bn_act_forward.3} parent=27 // pred_check
        %p220 = pneg %p59
      $region30: #{ffc_bn_act_forward.3} parent=27 // pred_check_branch
        %222 = sbr.rel (%p220) target = $region32
      $region31: #{ffc_bn_act_forward.3} parent=27 // pred_region
        %s223 = ssub.s32 1, %s19
        %s224 = smul.u32 %s20, %s223
        %s225 = smul.u32 %s21, %s223
        %s226 = smul.u32 2, %s225
        %p227 = scmp.lt.s32.totalorder %s224, 1
        %s228 = scalar_select %p227, %s224, 1
        %p229 = scmp.lt.s32.totalorder %s226, 1
        %s230 = scalar_select %p229, %s226, 1
        %s231 = smul.addr %s228, 2
        %s232 = sadd.s32 %s230, %s231
        %s233 = smul.addr %s232, 8
        %s234 = scalar_lea.vmem %s0, %s233
        %s235 = ssub.s32 1, %s19
        %s236 = smul.u32 %s20, %s235
        %s237 = smul.u32 %s21, %s235
        %s238 = smul.u32 2, %s237
      $region32: #{ffc_bn_act_forward.3} parent=27 // pred_fallthru
        _
    $region28: #{ffc_bn_act_forward.3} parent=5 // pred_fallthru
      _
    %p239 = scmp.le.s32.totalorder 1, %s12
    %p240 = scmp.lt.s32.totalorder %s12, 5
    %p241 = pnand %p239, %p240
    %p242 = pneg %p241
    // Predicated region
    $region33: #{ffc_bn_act_forward.3} parent=5 // pred_check
      _
    $region34: #{ffc_bn_act_forward.3} parent=5 // pred_check_branch
      %244 = sbr.rel (%p241) target = $region36
    $region35: #{ffc_bn_act_forward.3} parent=5 // pred_region
      %s245 = ssub.s32 %s12, 1
      %s246 = ssub.s32 1, %s22
      %s247 = smul.u32 %s23, %s246
      %s248 = smul.u32 %s24, %s246
      %s249 = smul.u32 2, %s248
      %p250 = scmp.lt.s32.totalorder %s247, 1
      %s251 = scalar_select %p250, %s247, 1
      %p252 = scmp.lt.s32.totalorder %s249, 1
      %s253 = scalar_select %p252, %s249, 1
      %s254 = smul.addr %s251, 2
      %s255 = sadd.s32 %s253, %s254
      %s256 = smul.addr %s255, 8
      %s257 = scalar_lea.vmem %s0, %s256
      %p258 = pneg %p65
      %p259 = pneg %p62
      %p260 = pneg %p86
      %p261 = pneg %p83
      %p262 = pneg %p107
      %p263 = pneg %p104
      %p264 = pneg %p128
      %p265 = pneg %p125
      %p266 = pneg %p160
      %p267 = pneg %p157
      %s268 = smul.u32 %s23, %s22
      %s269 = smul.u32 %s24, %s22
      %s270 = smul.u32 2, %s269
      %p271 = scmp.lt.s32.totalorder %s268, 1
      %s272 = scalar_select %p271, %s268, 1
      %p273 = scmp.lt.s32.totalorder %s270, 1
      %s274 = scalar_select %p273, %s270, 1
      %s275 = smul.addr %s272, 2
      %s276 = sadd.s32 %s274, %s275
      %s277 = smul.addr %s276, 4
      %s278 = scalar_lea.vmem %s4, %s277
      %p279 = pneg %p192
      %p280 = pneg %p189
      %s281 = smul.u32 %s23, %s22
      %s282 = smul.u32 %s24, %s22
      %s283 = smul.u32 2, %s282
      %p284 = scmp.lt.s32.totalorder %s281, 1
      %s285 = scalar_select %p284, %s281, 1
      %p286 = scmp.lt.s32.totalorder %s283, 1
      %s287 = scalar_select %p286, %s283, 1
      %s288 = smul.addr %s285, 2
      %s289 = sadd.s32 %s287, %s288
      %s290 = smul.addr %s289, 2
      %s291 = scalar_lea.vmem %s5, %s290
      %s292 = ssub.s32 1, %s22
      %s293 = smul.u32 %s23, %s292
      %s294 = smul.u32 %s24, %s292
      %s295 = smul.u32 2, %s294
      %p296 = scmp.lt.s32.totalorder %s293, 1
      %s297 = scalar_select %p296, %s293, 1
      %p298 = scmp.lt.s32.totalorder %s295, 1
      %s299 = scalar_select %p298, %s295, 1
      %s300 = smul.addr %s297, 2
      %s301 = sadd.s32 %s299, %s300
      %s302 = smul.addr %s301, 8
      %s303 = scalar_lea.vmem %s0, %s302
      %s304 = ssub.s32 1, %s22
      %s305 = smul.u32 %s23, %s304
      %s306 = smul.u32 %s24, %s304
      %s307 = smul.u32 2, %s306
      %s308 = smul.u32 %s23, %s22
      %s309 = smul.u32 %s24, %s22
      %s310 = smul.u32 2, %s309
      %p311 = scmp.lt.s32.totalorder %s308, 1
      %s312 = scalar_select %p311, %s308, 1
      %p313 = scmp.lt.s32.totalorder %s310, 1
      %s314 = scalar_select %p313, %s310, 1
      %s315 = smul.addr %s312, 2
      %s316 = sadd.s32 %s314, %s315
      %s317 = smul.addr %s316, 4
      %s318 = scalar_lea.vmem %s4, %s317
      %s319 = smul.u32 %s23, %s22
      %s320 = smul.u32 %s24, %s22
      %s321 = smul.u32 2, %s320
      %s322 = smul.u32 %s23, %s22
      %s323 = smul.u32 %s24, %s22
      %s324 = smul.u32 2, %s323
      %p325 = scmp.lt.s32.totalorder %s322, 1
      %s326 = scalar_select %p325, %s322, 1
      %p327 = scmp.lt.s32.totalorder %s324, 1
      %s328 = scalar_select %p327, %s324, 1
      %s329 = smul.addr %s326, 2
      %s330 = sadd.s32 %s328, %s329
      %s331 = smul.addr %s330, 2
      %s332 = scalar_lea.vmem %s5, %s331
      %s333 = smul.u32 %s23, %s22
      %s334 = smul.u32 %s24, %s22
      %s335 = smul.u32 2, %s334
      %s336 = sadd.s32 %s23, %s24
      %p337 = scmp.eq.s32.totalorder %s22, 0
      %p338 = scmp.eq.s32.totalorder %s336, 0
      %p339 = pnand %p337, %p338
      %p340 = pneg %p339
      // Predicated region
      $region37: #{ffc_bn_act_forward.3} parent=35 // pred_check
        _
      $region38: #{ffc_bn_act_forward.3} parent=35 // pred_check_branch
        %342 = sbr.rel (%p339) target = $region40
      $region39: #{ffc_bn_act_forward.3} parent=35 // pred_region
        %vm343 = vcmask 5120
        %344 = vst.msk [vmem:[#allocation2] sm:$0x3f] %vm343, 0.0
        %345 = vst.msk [vmem:[#allocation3] sm:$0x3f] %vm343, 0.0
      $region40: #{ffc_bn_act_forward.3} parent=35 // pred_fallthru
        _
      // Predicated region
      $region41: #{ffc_bn_act_forward.3} parent=35 // pred_check
        %p346 = pneg %p337
      $region42: #{ffc_bn_act_forward.3} parent=35 // pred_check_branch
        %348 = sbr.rel (%p346) target = $region44
      $region43: #{ffc_bn_act_forward.3} parent=35 // pred_region
        %v349 = vld [vmem:[%s1] sm:$0x3f]
        %v350 = vld [vmem:[%s303] sm:$0xff]
        %v351 = vld [vmem:[%s303 + $0x8] sm:$0xff]
        %vm352 = vcmask 64512
        %v354 = vsel %vm352, %v349, 0
        %356 = vmatprep.subr.mxu0 0.0
        %357 = vmatpush1.msra.mxu0 0.0
        %358 = vmatprep.subr.mxu0 0.0
        %359 = vmatpush1.msra.mxu0 0.0
        %360 = vmatprep.subr.mxu0 0.0
        %361 = vmatpush1.msra.mxu0 0.0
        %362 = vmatprep.subr.mxu0 0.0
        %363 = vmatpush1.msra.mxu0 0.0
        %364 = vmatprep.subr.mxu0 0.0
        %365 = vmatpush1.msra.mxu0 0.0
        %366 = vmatprep.subr.mxu0 0.0
        %367 = vmatpush1.msra.mxu0 0.0
        %368 = vmatprep.subr.mxu0 0.0
        %369 = vmatpush1.msra.mxu0 0.0
        %370 = vmatprep.subr.mxu0 0.0
        %371 = vmatpush1.msra.mxu0 0.0
        %372 = vmatprep.subr.mxu0 0.0
        %373 = vmatpush1.msra.mxu0 0.0
        %374 = vmatprep.subr.mxu0 0.0
        %375 = vmatpush1.msra.mxu0 0.0
        %376 = vmatprep.subr.mxu0 0.0
        %377 = vmatpush1.msra.mxu0 0.0
        %378 = vmatprep.subr.mxu0 0.0
        %379 = vmatpush1.msra.mxu0 0.0
        %380 = vmatprep.subr.mxu0 0.0
        %381 = vmatpush1.msra.mxu0 0.0
        %382 = vmatprep.subr.mxu0 0.0
        %383 = vmatpush1.msra.mxu0 0.0
        %384 = vmatprep.subr.mxu0 0.0
        %385 = vmatpush1.msra.mxu0 0.0
        %386 = vmatprep.subr.mxu0 %v351
        %387 = vmatpush1.msra.mxu0 %v350
        %388 = vmatprep.subr.mxu0 0.0
        %389 = vmatpush2.msra.mxu0 0.0
        %390 = vmatprep.subr.mxu0 0.0
        %391 = vmatpush2.msra.mxu0 0.0
        %392 = vmatprep.subr.mxu0 0.0
        %393 = vmatpush2.msra.mxu0 0.0
        %394 = vmatprep.subr.mxu0 0.0
        %395 = vmatpush2.msra.mxu0 0.0
        %396 = vmatprep.subr.mxu0 0.0
        %397 = vmatpush2.msra.mxu0 0.0
        %398 = vmatprep.subr.mxu0 0.0
        %399 = vmatpush2.msra.mxu0 0.0
        %400 = vmatprep.subr.mxu0 0.0
        %401 = vmatpush2.msra.mxu0 0.0
        %402 = vmatprep.subr.mxu0 0.0
        %403 = vmatpush2.msra.mxu0 0.0
        %404 = vmatprep.subr.mxu0 0.0
        %405 = vmatpush2.msra.mxu0 0.0
        %406 = vmatprep.subr.mxu0 0.0
        %407 = vmatpush2.msra.mxu0 0.0
        %408 = vmatprep.subr.mxu0 0.0
        %409 = vmatpush2.msra.mxu0 0.0
        %410 = vmatprep.subr.mxu0 0.0
        %411 = vmatpush2.msra.mxu0 0.0
        %412 = vmatprep.subr.mxu0 0.0
        %413 = vmatpush2.msra.mxu0 0.0
        %414 = vmatprep.subr.mxu0 0.0
        %415 = vmatpush2.msra.mxu0 0.0
        %416 = vmatprep.subr.mxu0 0.0
        %417 = vmatpush2.msra.mxu0 0.0
        %418 = vmatprep.subr.mxu0 0.0
        %419 = vmatpush2.msra.mxu0 0.0
        %420 = vmatprep.mubr.f32.mxu0 0.0
        %421 = vmatmul.mubr.f32.gmra.mxu0 %v354
        %v422 = vpop.f32.mrf.mxu0
        %v423 = vadd.f32 0.0, %v422
        %v424 = vpop.f32.mrf.mxu0
        %v425 = vadd.f32 0.0, %v424
        %426 = vdwg.mxu0
        %v427 = vld [vmem:[#allocation2] sm:$0x3f]
        %vm428 = vcmask 1045504
        %v429 = vsel %vm428, %v423, 0.0
        %v430 = vsel %vm428, %v425, 0.0
        %v431 = vadd.f32 %v429, %v430
        %432 = vadd.xlane.f32.xlu0 %v431
        %v433 = vpop.xlane.xlu0 %432
        %v434 = vadd.f32 %v427, %v433
        %vm435 = vcmask 5120
        %436 = vst.msk [vmem:[#allocation2] sm:$0x3f] %vm435, %v434
        %v437 = vld [vmem:[#allocation3] sm:$0x3f]
        %v438 = vmul.f32 %v423, %v423
        %v439 = vmul.f32 %v425, %v425
        %v440 = vsel %vm428, %v438, 0.0
        %v441 = vsel %vm428, %v439, 0.0
        %v442 = vadd.f32 %v440, %v441
        %443 = vadd.xlane.f32.xlu0 %v442
        %v444 = vpop.xlane.xlu0 %443
        %v445 = vadd.f32 %v437, %v444
        %446 = vst.msk [vmem:[#allocation3] sm:$0x3f] %vm435, %v445
        %s447 = smul.u32 %s336, 2
        %s448 = smul.addr %s447, 8
        %s449 = scalar_lea.vmem [#allocation4], %s448
        %450 = vst [vmem:[%s449] sm:$0x3f] %v423
        %451 = vst [vmem:[%s449 + $0x8] sm:$0x3f] %v425
      $region44: #{ffc_bn_act_forward.3} parent=35 // pred_fallthru
        _
      %p452 = scmp.eq.s32.totalorder %s22, 1
      // Predicated region
      $region45: #{ffc_bn_act_forward.3} parent=35 // pred_check
        %p453 = pneg %p452
      $region46: #{ffc_bn_act_forward.3} parent=35 // pred_check_branch
        %455 = sbr.rel (%p453) target = $region48
      $region47: #{ffc_bn_act_forward.3} parent=35 // pred_region
        %s456 = smul.u32 %s336, 2
        %s457 = smul.addr %s456, 8
        %s458 = scalar_lea.vmem [#allocation4], %s457
        %v459 = vld [vmem:[%s458] sm:$0x3f]
        %v460 = vld [vmem:[%s458 + $0x8] sm:$0x3f]
        %v461 = vld [vmem:[#allocation2] sm:$0x3f]
        %v462 = vmul.f32 %v461, 0.001953125
        %v463 = vld [vmem:[#allocation3] sm:$0x3f]
        %v464 = vmul.f32 %v463, 0.001953125
        %v465 = vmul.f32 %v462, %v462
        %v466 = vsub.f32 %v464, %v465
        %v467 = vld [vmem:[%s2] sm:$0x3f]
        %v468 = vadd.f32 %v466, 1e-05
        %v469 = vrsqrt.pop %v468
        %v470 = vmul.f32 %v467, %v469
        %v471 = vld [vmem:[%s3] sm:$0x3f]
        %v472 = vmul.f32 %v462, %v470
        %v473 = vsub.f32 %v471, %v472
        %475 = vset.pattern.permute.xlu0 0
        %476 = vperm.xlu0 %475, %v470
        %v477 = vpop.permute.xlu0 %476
        %v479 = vmul.f32 %v459, %v477
        %v480 = vmul.f32 %v460, %v477
        %482 = vset.pattern.permute.xlu0 0
        %483 = vperm.xlu0 %482, %v473
        %v484 = vpop.permute.xlu0 %483
        %v486 = vadd.f32 %v479, %v484
        %v487 = vadd.f32 %v480, %v484
        %v488 = vlaneseq
        %v489 = vshrl.u32 %v488, 7
        %vm490 = vcmp.ge.s32.totalorder %v489, 4
        %v491 = vmax.f32 %v486, 0.0
        %v492 = vmax.f32 %v487, 0.0
        %v493 = vsel %vm490, 1, 0
        %vm494 = vcmp.eq.s32.totalorder %v493, 1
        %v495 = vsel %vm494, %v491, %v486
        %v496 = vsel %vm494, %v492, %v487
        %v499 = vcombine.low %v495, %v496
        %501 = vst [vmem:[%s318] sm:$0xff] %v499
        %v502 = vcombine.high %v495, %v496
        %v504 = vunpack.c.l.s4 1983009808
        %v505 = vunpack.c.0.s8 %v504
        %v506 = vlaneseq
        %v507 = vshrl.u32 %v506, 7
        %v508 = vsub.s32 %v505, %v507
        %v509 = vrot.slane %v502, %v508
        %511 = vst [vmem:[%s332] sm:$0xf] %v509
      $region48: #{ffc_bn_act_forward.3} parent=35 // pred_fallthru
        _
      %s512 = smul.u32 %s23, %s22
      %s513 = smul.u32 %s24, %s22
      %s514 = smul.u32 2, %s513
      %p515 = scmp.lt.s32.totalorder %s512, 1
      %s516 = scalar_select %p515, %s512, 1
      %p517 = scmp.lt.s32.totalorder %s514, 1
      %s518 = scalar_select %p517, %s514, 1
      %s519 = smul.addr %s516, 2
      %s520 = sadd.s32 %s518, %s519
      %s521 = smul.addr %s520, 4
      %s522 = scalar_lea.vmem %s4, %s521
      %s523 = smul.u32 %s23, %s22
      %s524 = smul.u32 %s24, %s22
      %s525 = smul.u32 2, %s524
      %p526 = scmp.lt.s32.totalorder %s523, 1
      %s527 = scalar_select %p526, %s523, 1
      %p528 = scmp.lt.s32.totalorder %s525, 1
      %s529 = scalar_select %p528, %s525, 1
      %s530 = smul.addr %s527, 2
      %s531 = sadd.s32 %s529, %s530
      %s532 = smul.addr %s531, 2
      %s533 = scalar_lea.vmem %s5, %s532
      // Predicated region
      $region49: #{ffc_bn_act_forward.3} parent=35 // pred_check
        %p534 = pneg %p157
      $region50: #{ffc_bn_act_forward.3} parent=35 // pred_check_branch
        %536 = sbr.rel (%p534) target = $region52
      $region51: #{ffc_bn_act_forward.3} parent=35 // pred_region
        %s537 = smul.u32 %s23, %s22
        %s538 = smul.u32 %s24, %s22
        %s539 = smul.u32 2, %s538
      $region52: #{ffc_bn_act_forward.3} parent=35 // pred_fallthru
        _
      // Predicated region
      $region53: #{ffc_bn_act_forward.3} parent=35 // pred_check
        %p540 = pneg %p189
      $region54: #{ffc_bn_act_forward.3} parent=35 // pred_check_branch
        %542 = sbr.rel (%p540) target = $region56
      $region55: #{ffc_bn_act_forward.3} parent=35 // pred_region
        %s543 = smul.u32 %s23, %s22
        %s544 = smul.u32 %s24, %s22
        %s545 = smul.u32 2, %s544
      $region56: #{ffc_bn_act_forward.3} parent=35 // pred_fallthru
        _
    $region36: #{ffc_bn_act_forward.3} parent=5 // pred_fallthru
      _
    %p546 = scmp.le.s32.totalorder 2, %s12
    // Predicated region
    $region57: #{ffc_bn_act_forward.3} parent=5 // pred_check
      %p547 = pneg %p546
    $region58: #{ffc_bn_act_forward.3} parent=5 // pred_check_branch
      %549 = sbr.rel (%p547) target = $region60
    $region59: #{ffc_bn_act_forward.3} parent=5 // pred_region
      %s550 = ssub.s32 %s12, 2
      // Predicated region
      $region61: #{ffc_bn_act_forward.3} parent=59 // pred_check
        %p551 = pneg %p163
      $region62: #{ffc_bn_act_forward.3} parent=59 // pred_check_branch
        %553 = sbr.rel (%p551) target = $region64
      $region63: #{ffc_bn_act_forward.3} parent=59 // pred_region
        %s554 = smul.u32 %s26, %s25
        %s555 = smul.u32 %s27, %s25
        %s556 = smul.u32 2, %s555
        %p557 = scmp.lt.s32.totalorder %s554, 1
        %s558 = scalar_select %p557, %s554, 1
        %p559 = scmp.lt.s32.totalorder %s556, 1
        %s560 = scalar_select %p559, %s556, 1
        %s561 = smul.addr %s558, 2
        %s562 = sadd.s32 %s560, %s561
        %s563 = smul.addr %s562, 4
        %s564 = scalar_lea.vmem %s4, %s563
      $region64: #{ffc_bn_act_forward.3} parent=59 // pred_fallthru
        _
      // Predicated region
      $region65: #{ffc_bn_act_forward.3} parent=59 // pred_check
        %p565 = pneg %p195
      $region66: #{ffc_bn_act_forward.3} parent=59 // pred_check_branch
        %567 = sbr.rel (%p565) target = $region68
      $region67: #{ffc_bn_act_forward.3} parent=59 // pred_region
        %s568 = smul.u32 %s26, %s25
        %s569 = smul.u32 %s27, %s25
        %s570 = smul.u32 2, %s569
        %p571 = scmp.lt.s32.totalorder %s568, 1
        %s572 = scalar_select %p571, %s568, 1
        %p573 = scmp.lt.s32.totalorder %s570, 1
        %s574 = scalar_select %p573, %s570, 1
        %s575 = smul.addr %s572, 2
        %s576 = sadd.s32 %s574, %s575
        %s577 = smul.addr %s576, 2
        %s578 = scalar_lea.vmem %s5, %s577
      $region68: #{ffc_bn_act_forward.3} parent=59 // pred_fallthru
        _
    $region60: #{ffc_bn_act_forward.3} parent=5 // pred_fallthru
      _
  $region6: #{ffc_bn_act_forward.3} parent=0 // loop_footer
    %s16 = sadd.s32 1, %s12
  $region7: #{ffc_bn_act_forward.3} parent=0 // loop_footer_branch
    %11 = sbr.rel target = $region3
  $region8: #{ffc_bn_act_forward.3} parent=0 // loop_exit
    _

// kernel: reverse.1
$region0: #{reverse.1}
  %s0 = inlined_call_operand.vmem [shape: f32[2,2,8,3], index: 0, kind: input, shape index: {}]
  %s1 = inlined_call_operand.vmem [shape: f32[2,2,8,3], index: 1, kind: output, shape index: {}]
  $region1: #{reverse.1} parent=0
    #allocation0 [shape = 'u8[32768]{0}', space=vmem, size = 0x8000, scoped, tag = 'operand span for operand 0']
    #allocation1 [shape = 'u8[16384]{0}', space=vmem, size = 0x4000, scoped, tag = 'packed  for operand 0']
    #allocation2 [shape = 'u8[16384]{0}', space=vmem, size = 0x4000, scoped, tag = 'operand span for operand 1']
    #allocation3 [shape = 'u8[8192]{0}', space=vmem, size = 0x2000, scoped, tag = 'packed  for operand 1']
    %s2 = scalar_lea.vmem [#allocation1], 4
    // Predicated region
    $region2: #{reverse.1} parent=1 // pred_check
      _
    $region3: #{reverse.1} parent=1 // pred_check_branch
      %4 = sbr.rel (0) target = $region5
    $region4: #{reverse.1} parent=1 // pred_region
      // Predicated region
      $region6: #{reverse.1} parent=4 // pred_check
        _
      $region7: #{reverse.1} parent=4 // pred_check_branch
        %6 = sbr.rel target = $region9
      $region8: #{reverse.1} parent=4 // pred_region
        // Predicated region
        $region21: #{reverse.1} parent=8 // pred_check
          _
        $region22: #{reverse.1} parent=8 // pred_check_branch
          %28 = sbr.rel (0) target = $region24
        $region23: #{reverse.1} parent=8 // pred_region
          loop: start=0, step=1, limit=1
          $region25: #{reverse.1} parent=23 // loop_pre_header
            _
          $region26: #{reverse.1} parent=23 // loop_header
            %s30 = sphi 0, %s34
            %p31 = scmp.ge.s32.totalorder %s30, 1
            %s35 = sphi %s0, %s0
            %s36 = sphi %s2, %s2
          $region27: #{reverse.1} parent=23 // loop_header_branch
            %33 = sbr.rel (%p31) target = $region31
          $region28: #{reverse.1} parent=23 // loop_body
            _
          $region29: #{reverse.1} parent=23 // loop_footer
            %s34 = sadd.s32 1, %s30
          $region30: #{reverse.1} parent=23 // loop_footer_branch
            %29 = sbr.rel target = $region26
          $region31: #{reverse.1} parent=23 // loop_exit
            _
          %s38 = ssub.s32 16, 1
          loop: start=0, step=1, limit=1
          $region32: #{reverse.1} parent=23 // loop_pre_header
            _
          $region33: #{reverse.1} parent=23 // loop_header
            %s40 = sphi 0, %s44
            %p41 = scmp.ge.s32.totalorder %s40, 1
            %s45 = sphi %s0, %s0
            %s46 = sphi %s2, %s2
          $region34: #{reverse.1} parent=23 // loop_header_branch
            %43 = sbr.rel (%p41) target = $region38
          $region35: #{reverse.1} parent=23 // loop_body
            %v47 = vld [vmem:[%s45] sm:%s38]
            %48 = vst [vmem:[%s46] sm:%s38] %v47
            %v49 = vld [vmem:[%s45 + $0x4] sm:%s38]
            %50 = vst [vmem:[%s46 + $0x8] sm:%s38] %v49
            %v51 = vld [vmem:[%s45 + $0x8] sm:%s38]
            %52 = vst [vmem:[%s46 + $0x10] sm:%s38] %v51
            %v53 = vld [vmem:[%s45 + $0xc] sm:%s38]
            %54 = vst [vmem:[%s46 + $0x18] sm:%s38] %v53
          $region36: #{reverse.1} parent=23 // loop_footer
            %s44 = sadd.s32 1, %s40
          $region37: #{reverse.1} parent=23 // loop_footer_branch
            %39 = sbr.rel target = $region33
          $region38: #{reverse.1} parent=23 // loop_exit
            _
        $region24: #{reverse.1} parent=8 // pred_fallthru
          _
      $region9: #{reverse.1} parent=4 // pred_fallthru
        _
      // Predicated region
      $region10: #{reverse.1} parent=4 // pred_check
        _
      $region11: #{reverse.1} parent=4 // pred_check_branch
        %8 = sbr.rel (0) target = $region13
      $region12: #{reverse.1} parent=4 // pred_region
        %s10 = ssub.s32 16, 1
        loop: start=0, step=1, limit=1
        $region14: #{reverse.1} parent=12 // loop_pre_header
          _
        $region15: #{reverse.1} parent=12 // loop_header
          %s12 = sphi 0, %s16
          %p13 = scmp.ge.s32.totalorder %s12, 1
          %s17 = sphi %s0, %s0
          %s18 = sphi %s2, %s2
        $region16: #{reverse.1} parent=12 // loop_header_branch
          %15 = sbr.rel (%p13) target = $region20
        $region17: #{reverse.1} parent=12 // loop_body
          %v19 = vld [vmem:[%s17] sm:%s10]
          %20 = vst [vmem:[%s18] sm:%s10] %v19
          %v21 = vld [vmem:[%s17 + $0x4] sm:%s10]
          %22 = vst [vmem:[%s18 + $0x8] sm:%s10] %v21
          %v23 = vld [vmem:[%s17 + $0x8] sm:%s10]
          %24 = vst [vmem:[%s18 + $0x10] sm:%s10] %v23
          %v25 = vld [vmem:[%s17 + $0xc] sm:%s10]
          %26 = vst [vmem:[%s18 + $0x18] sm:%s10] %v25
        $region18: #{reverse.1} parent=12 // loop_footer
          %s16 = sadd.s32 1, %s12
        $region19: #{reverse.1} parent=12 // loop_footer_branch
          %11 = sbr.rel target = $region15
        $region20: #{reverse.1} parent=12 // loop_exit
          _
      $region13: #{reverse.1} parent=4 // pred_fallthru
        _
    $region5: #{reverse.1} parent=1 // pred_fallthru
      _
    %55 = vnop
    %s57 = sshll.u32 1, 4
    %s58 = ssub.s32 %s57, 1
    %s59 = smul.addr 4, 7
    %s60 = scalar_lea.vmem [#allocation1], %s59
    %v61 = vld [vmem:[%s60] sm:%s58]
    %s62 = scalar_lea.vmem [#allocation0], 56
    %63 = vst [vmem:[%s62] sm:%s58] %v61
    %s64 = smul.addr 4, 6
    %s65 = scalar_lea.vmem [#allocation1], %s64
    %v66 = vld [vmem:[%s65] sm:%s58]
    %s67 = scalar_lea.vmem [#allocation0], 48
    %68 = vst [vmem:[%s67] sm:%s58] %v66
    %s69 = smul.addr 4, 5
    %s70 = scalar_lea.vmem [#allocation1], %s69
    %v71 = vld [vmem:[%s70] sm:%s58]
    %s72 = scalar_lea.vmem [#allocation0], 40
    %73 = vst [vmem:[%s72] sm:%s58] %v71
    %s74 = smul.addr 4, 4
    %s75 = scalar_lea.vmem [#allocation1], %s74
    %v76 = vld [vmem:[%s75] sm:%s58]
    %s77 = scalar_lea.vmem [#allocation0], 32
    %78 = vst [vmem:[%s77] sm:%s58] %v76
    %s79 = smul.addr 4, 3
    %s80 = scalar_lea.vmem [#allocation1], %s79
    %v81 = vld [vmem:[%s80] sm:%s58]
    %s82 = scalar_lea.vmem [#allocation0], 24
    %83 = vst [vmem:[%s82] sm:%s58] %v81
    %s84 = smul.addr 4, 2
    %s85 = scalar_lea.vmem [#allocation1], %s84
    %v86 = vld [vmem:[%s85] sm:%s58]
    %s87 = scalar_lea.vmem [#allocation0], 16
    %88 = vst [vmem:[%s87] sm:%s58] %v86
    %s89 = scalar_lea.vmem [#allocation1], 4
    %v90 = vld [vmem:[%s89] sm:%s58]
    %s91 = scalar_lea.vmem [#allocation0], 8
    %92 = vst [vmem:[%s91] sm:%s58] %v90
    %v93 = vld [vmem:[#allocation1] sm:%s58]
    %94 = vst [vmem:[#allocation0] sm:%s58] %v93
    %s95 = scalar_lea.vmem [#allocation0], 7
    %v96 = vld [vmem:[%s95] ss:$-1 sm:$0xff]
    %v97 = vrot.slane %v96, 5
    %98 = vst [vmem:[#allocation2] sm:$0xff] %v97
    %s99 = scalar_lea.vmem [#allocation0], 8
    %s100 = scalar_lea.vmem %s99, 7 [#allocation0]
    %v101 = vld [vmem:[%s100] ss:$-1 sm:$0xff]
    %v102 = vrot.slane %v101, 5
    %v103 = vlaneseq
    %v104 = vshrl.u32 %v103, 7
    %vm105 = vcmp.lt.s32.totalorder %v104, 3
    %106 = vst.msk [vmem:[#allocation2] sm:$0xff] %vm105, %v102
    %s107 = scalar_lea.vmem [#allocation2], 8
    %s108 = scalar_lea.vmem [#allocation0], 16
    %s109 = scalar_lea.vmem %s108, 7 [#allocation0]
    %v110 = vld [vmem:[%s109] ss:$-1 sm:$0xff]
    %v111 = vrot.slane %v110, 5
    %112 = vst [vmem:[%s107] sm:$0xff] %v111
    %s113 = scalar_lea.vmem %s108, 8 [#allocation0]
    %s114 = scalar_lea.vmem %s113, 7 [#allocation0]
    %v115 = vld [vmem:[%s114] ss:$-1 sm:$0xff]
    %v116 = vrot.slane %v115, 5
    %v117 = vlaneseq
    %v118 = vshrl.u32 %v117, 7
    %vm119 = vcmp.lt.s32.totalorder %v118, 3
    %120 = vst.msk [vmem:[%s107] sm:$0xff] %vm119, %v116
    %s121 = scalar_lea.vmem [#allocation2], 16
    %s122 = scalar_lea.vmem [#allocation0], 32
    %s123 = scalar_lea.vmem %s122, 7 [#allocation0]
    %v124 = vld [vmem:[%s123] ss:$-1 sm:$0xff]
    %v125 = vrot.slane %v124, 5
    %126 = vst [vmem:[%s121] sm:$0xff] %v125
    %s127 = scalar_lea.vmem %s122, 8 [#allocation0]
    %s128 = scalar_lea.vmem %s127, 7 [#allocation0]
    %v129 = vld [vmem:[%s128] ss:$-1 sm:$0xff]
    %v130 = vrot.slane %v129, 5
    %v131 = vlaneseq
    %v132 = vshrl.u32 %v131, 7
    %vm133 = vcmp.lt.s32.totalorder %v132, 3
    %134 = vst.msk [vmem:[%s121] sm:$0xff] %vm133, %v130
    %s135 = scalar_lea.vmem [#allocation2], 24
    %s136 = scalar_lea.vmem [#allocation0], 48
    %s137 = scalar_lea.vmem %s136, 7 [#allocation0]
    %v138 = vld [vmem:[%s137] ss:$-1 sm:$0xff]
    %v139 = vrot.slane %v138, 5
    %140 = vst [vmem:[%s135] sm:$0xff] %v139
    %s141 = scalar_lea.vmem %s136, 8 [#allocation0]
    %s142 = scalar_lea.vmem %s141, 7 [#allocation0]
    %v143 = vld [vmem:[%s142] ss:$-1 sm:$0xff]
    %v144 = vrot.slane %v143, 5
    %v145 = vlaneseq
    %v146 = vshrl.u32 %v145, 7
    %vm147 = vcmp.lt.s32.totalorder %v146, 3
    %148 = vst.msk [vmem:[%s135] sm:$0xff] %vm147, %v144
    %s150 = sshll.u32 1, 4
    %s151 = ssub.s32 %s150, 1
    %v153 = vld [vmem:[#allocation2] sm:%s151]
    %s154 = sshll.u32 1, 4
    %s155 = ssub.s32 %s154, 1
    %156 = vst [vmem:[#allocation3] sm:%s155] %v153
    %s157 = scalar_lea.vmem [#allocation2], 8
    %v158 = vld [vmem:[%s157] sm:%s151]
    %s159 = sshll.u32 1, 4
    %s160 = ssub.s32 %s159, 1
    %s161 = scalar_lea.vmem [#allocation3], 4
    %162 = vst [vmem:[%s161] sm:%s160] %v158
    %s163 = scalar_lea.vmem [#allocation2], 16
    %v164 = vld [vmem:[%s163] sm:%s151]
    %s165 = sshll.u32 1, 4
    %s166 = ssub.s32 %s165, 1
    %s167 = smul.addr 4, 2
    %s168 = scalar_lea.vmem [#allocation3], %s167
    %169 = vst [vmem:[%s168] sm:%s166] %v164
    %s170 = scalar_lea.vmem [#allocation2], 24
    %v171 = vld [vmem:[%s170] sm:%s151]
    %s172 = sshll.u32 1, 4
    %s173 = ssub.s32 %s172, 1
    %s174 = smul.addr 4, 3
    %s175 = scalar_lea.vmem [#allocation3], %s174
    %176 = vst [vmem:[%s175] sm:%s173] %v171
    // Predicated region
    $region39: #{reverse.1} parent=1 // pred_check
      _
    $region40: #{reverse.1} parent=1 // pred_check_branch
      %178 = sbr.rel (0) target = $region42
    $region41: #{reverse.1} parent=1 // pred_region
      // Predicated region
      $region43: #{reverse.1} parent=41 // pred_check
        _
      $region44: #{reverse.1} parent=41 // pred_check_branch
        %180 = sbr.rel target = $region46
      $region45: #{reverse.1} parent=41 // pred_region
        // Predicated region
        $region58: #{reverse.1} parent=45 // pred_check
          _
        $region59: #{reverse.1} parent=45 // pred_check_branch
          %202 = sbr.rel (0) target = $region61
        $region60: #{reverse.1} parent=45 // pred_region
          loop: start=0, step=1, limit=1
          $region62: #{reverse.1} parent=60 // loop_pre_header
            _
          $region63: #{reverse.1} parent=60 // loop_header
            %s204 = sphi 0, %s208
            %p205 = scmp.ge.s32.totalorder %s204, 1
            %s209 = sphi [#allocation3], [#allocation3]
            %s210 = sphi %s1, %s1
          $region64: #{reverse.1} parent=60 // loop_header_branch
            %207 = sbr.rel (%p205) target = $region68
          $region65: #{reverse.1} parent=60 // loop_body
            _
          $region66: #{reverse.1} parent=60 // loop_footer
            %s208 = sadd.s32 1, %s204
          $region67: #{reverse.1} parent=60 // loop_footer_branch
            %203 = sbr.rel target = $region63
          $region68: #{reverse.1} parent=60 // loop_exit
            _
          %s212 = ssub.s32 16, 1
          loop: start=0, step=1, limit=1
          $region69: #{reverse.1} parent=60 // loop_pre_header
            _
          $region70: #{reverse.1} parent=60 // loop_header
            %s214 = sphi 0, %s218
            %p215 = scmp.ge.s32.totalorder %s214, 1
            %s219 = sphi [#allocation3], [#allocation3]
            %s220 = sphi %s1, %s1
          $region71: #{reverse.1} parent=60 // loop_header_branch
            %217 = sbr.rel (%p215) target = $region75
          $region72: #{reverse.1} parent=60 // loop_body
            %v221 = vld [vmem:[%s219] sm:%s212]
            %222 = vst [vmem:[%s220] sm:%s212] %v221
            %v223 = vld [vmem:[%s219 + $0x4] sm:%s212]
            %224 = vst [vmem:[%s220 + $0x4] sm:%s212] %v223
            %v225 = vld [vmem:[%s219 + $0x8] sm:%s212]
            %226 = vst [vmem:[%s220 + $0x8] sm:%s212] %v225
            %v227 = vld [vmem:[%s219 + $0xc] sm:%s212]
            %228 = vst [vmem:[%s220 + $0xc] sm:%s212] %v227
          $region73: #{reverse.1} parent=60 // loop_footer
            %s218 = sadd.s32 1, %s214
          $region74: #{reverse.1} parent=60 // loop_footer_branch
            %213 = sbr.rel target = $region70
          $region75: #{reverse.1} parent=60 // loop_exit
            _
        $region61: #{reverse.1} parent=45 // pred_fallthru
          _
      $region46: #{reverse.1} parent=41 // pred_fallthru
        _
      // Predicated region
      $region47: #{reverse.1} parent=41 // pred_check
        _
      $region48: #{reverse.1} parent=41 // pred_check_branch
        %182 = sbr.rel (0) target = $region50
      $region49: #{reverse.1} parent=41 // pred_region
        %s184 = ssub.s32 16, 1
        loop: start=0, step=1, limit=1
        $region51: #{reverse.1} parent=49 // loop_pre_header
          _
        $region52: #{reverse.1} parent=49 // loop_header
          %s186 = sphi 0, %s190
          %p187 = scmp.ge.s32.totalorder %s186, 1
          %s191 = sphi [#allocation3], [#allocation3]
          %s192 = sphi %s1, %s1
        $region53: #{reverse.1} parent=49 // loop_header_branch
          %189 = sbr.rel (%p187) target = $region57
        $region54: #{reverse.1} parent=49 // loop_body
          %v193 = vld [vmem:[%s191] sm:%s184]
          %194 = vst [vmem:[%s192] sm:%s184] %v193
          %v195 = vld [vmem:[%s191 + $0x4] sm:%s184]
          %196 = vst [vmem:[%s192 + $0x4] sm:%s184] %v195
          %v197 = vld [vmem:[%s191 + $0x8] sm:%s184]
          %198 = vst [vmem:[%s192 + $0x8] sm:%s184] %v197
          %v199 = vld [vmem:[%s191 + $0xc] sm:%s184]
          %200 = vst [vmem:[%s192 + $0xc] sm:%s184] %v199
        $region55: #{reverse.1} parent=49 // loop_footer
          %s190 = sadd.s32 1, %s186
        $region56: #{reverse.1} parent=49 // loop_footer_branch
          %185 = sbr.rel target = $region52
        $region57: #{reverse.1} parent=49 // loop_exit
          _
      $region50: #{reverse.1} parent=41 // pred_fallthru
        _
    $region42: #{reverse.1} parent=1 // pred_fallthru
      _
    %229 = vnop

// kernel: ffc_bn_act_forward.4
$region0: #{ffc_bn_act_forward.4}
  #allocation0 [shape = 'u32[]', space=smem, size = 0x4, offset = 0x4, fixed_abs, tag = 'smem constant byte address 0x4 - core index']
  #allocation1 [shape = 'u32[144,128]{1,0:T(1,128)}', space=vmem, size = 0x12000, scoped, tag = 'internal scratch']
  %s0 = inlined_call_operand.vmem [shape: f32[4,384], index: 0, kind: input, shape index: {}]
  %s1 = inlined_call_operand.vmem [shape: f32[4,4], index: 1, kind: input, shape index: {}]
  %s2 = inlined_call_operand.vmem [shape: f32[4,1], index: 2, kind: input, shape index: {}]
  %s3 = inlined_call_operand.vmem [shape: f32[4,1], index: 3, kind: input, shape index: {}]
  %s4 = inlined_call_operand.vmem [shape: f32[4,128], index: 4, kind: input, shape index: {}]
  %s5 = inlined_call_operand.vmem [shape: f32[4,4], index: 5, kind: input, shape index: {}]
  %s6 = inlined_call_operand.vmem [shape: f32[4,1], index: 6, kind: input, shape index: {}]
  %s7 = inlined_call_operand.vmem [shape: f32[4,1], index: 7, kind: input, shape index: {}]
  %s8 = inlined_call_operand.vmem [shape: f32[4,384], index: 8, kind: output, shape index: {0}]
  %s9 = inlined_call_operand.vmem [shape: f32[4,128], index: 9, kind: output, shape index: {1}]
  %10 = xla_tuple %s8, %s9
  %s11 = sld [smem:[#allocation0]]
  $region50: #{ffc_bn_act_forward.4} parent=0
    _
  %s13 = ssub.s32 1, %s11
  %s14 = scalar_select 0, %s13, %s11
  // Predicated region
  $region2: #{ffc_bn_act_forward.4} parent=0 // pred_check
    _
  $region3: #{ffc_bn_act_forward.4} parent=0 // pred_check_branch
    %16 = sbr.rel (0) target = $region5
  $region4: #{ffc_bn_act_forward.4} parent=0 // pred_region
    _
  $region5: #{ffc_bn_act_forward.4} parent=0 // pred_fallthru
    _
  // Predicated region
  $region6: #{ffc_bn_act_forward.4} parent=0 // pred_check
    _
  $region7: #{ffc_bn_act_forward.4} parent=0 // pred_check_branch
    %18 = sbr.rel (0) target = $region9
  $region8: #{ffc_bn_act_forward.4} parent=0 // pred_region
    _
  $region9: #{ffc_bn_act_forward.4} parent=0 // pred_fallthru
    _
  // Predicated region
  $region10: #{ffc_bn_act_forward.4} parent=0 // pred_check
    _
  $region11: #{ffc_bn_act_forward.4} parent=0 // pred_check_branch
    %20 = sbr.rel (0) target = $region13
  $region12: #{ffc_bn_act_forward.4} parent=0 // pred_region
    _
  $region13: #{ffc_bn_act_forward.4} parent=0 // pred_fallthru
    _
  // Predicated region
  $region14: #{ffc_bn_act_forward.4} parent=0 // pred_check
    _
  $region15: #{ffc_bn_act_forward.4} parent=0 // pred_check_branch
    %22 = sbr.rel (0) target = $region17
  $region16: #{ffc_bn_act_forward.4} parent=0 // pred_region
    _
  $region17: #{ffc_bn_act_forward.4} parent=0 // pred_fallthru
    _
  // Predicated region
  $region18: #{ffc_bn_act_forward.4} parent=0 // pred_check
    _
  $region19: #{ffc_bn_act_forward.4} parent=0 // pred_check_branch
    %24 = sbr.rel (0) target = $region21
  $region20: #{ffc_bn_act_forward.4} parent=0 // pred_region
    _
  $region21: #{ffc_bn_act_forward.4} parent=0 // pred_fallthru
    _
  // Predicated region
  $region22: #{ffc_bn_act_forward.4} parent=0 // pred_check
    _
  $region23: #{ffc_bn_act_forward.4} parent=0 // pred_check_branch
    %26 = sbr.rel (0) target = $region25
  $region24: #{ffc_bn_act_forward.4} parent=0 // pred_region
    _
  $region25: #{ffc_bn_act_forward.4} parent=0 // pred_fallthru
    _
  // Predicated region
  $region26: #{ffc_bn_act_forward.4} parent=0 // pred_check
    _
  $region27: #{ffc_bn_act_forward.4} parent=0 // pred_check_branch
    %28 = sbr.rel (0) target = $region29
  $region28: #{ffc_bn_act_forward.4} parent=0 // pred_region
    _
  $region29: #{ffc_bn_act_forward.4} parent=0 // pred_fallthru
    _
  // Predicated region
  $region30: #{ffc_bn_act_forward.4} parent=0 // pred_check
    _
  $region31: #{ffc_bn_act_forward.4} parent=0 // pred_check_branch
    %30 = sbr.rel (0) target = $region33
  $region32: #{ffc_bn_act_forward.4} parent=0 // pred_region
    _
  $region33: #{ffc_bn_act_forward.4} parent=0 // pred_fallthru
    _
  %v31 = vld [vmem:[%s1] sm:$0xf]
  %v32 = vld [vmem:[%s0] sm:$0xff]
  %v33 = vld [vmem:[%s0 + $0x8] sm:$0xf]
  %v36 = vcombine.high %v32, %v32
  %vm37 = vcmask 31744
  %v39 = vsel %vm37, %v31, 0
  %vm41 = vcmask 1043456
  %v42 = vsel %vm41, %v32, 0
  %v44 = vsel %vm41, %v36, 0
  %v46 = vsel %vm41, %v33, 0
  %48 = vmatprep.subr.mxu0 0.0
  %49 = vmatpush1.msra.mxu0 0.0
  %50 = vmatprep.subr.mxu0 0.0
  %51 = vmatpush1.msra.mxu0 0.0
  %52 = vmatprep.subr.mxu0 0.0
  %53 = vmatpush1.msra.mxu0 0.0
  %54 = vmatprep.subr.mxu0 0.0
  %55 = vmatpush1.msra.mxu0 0.0
  %56 = vmatprep.subr.mxu0 0.0
  %57 = vmatpush1.msra.mxu0 0.0
  %58 = vmatprep.subr.mxu0 0.0
  %59 = vmatpush1.msra.mxu0 0.0
  %60 = vmatprep.subr.mxu0 0.0
  %61 = vmatpush1.msra.mxu0 0.0
  %62 = vmatprep.subr.mxu0 0.0
  %63 = vmatpush1.msra.mxu0 0.0
  %64 = vmatprep.subr.mxu0 0.0
  %65 = vmatpush1.msra.mxu0 0.0
  %66 = vmatprep.subr.mxu0 0.0
  %67 = vmatpush1.msra.mxu0 0.0
  %68 = vmatprep.subr.mxu0 0.0
  %69 = vmatpush1.msra.mxu0 0.0
  %70 = vmatprep.subr.mxu0 0.0
  %71 = vmatpush1.msra.mxu0 0.0
  %72 = vmatprep.subr.mxu0 0.0
  %73 = vmatpush1.msra.mxu0 0.0
  %74 = vmatprep.subr.mxu0 0.0
  %75 = vmatpush1.msra.mxu0 0.0
  %76 = vmatprep.subr.mxu0 0.0
  %77 = vmatpush1.msra.mxu0 0.0
  %78 = vmatprep.subr.mxu0 %v44
  %79 = vmatpush1.msra.mxu0 %v42
  %80 = vmatprep.subr.mxu0 0.0
  %81 = vmatpush2.msra.mxu0 0.0
  %82 = vmatprep.subr.mxu0 0.0
  %83 = vmatpush2.msra.mxu0 0.0
  %84 = vmatprep.subr.mxu0 0.0
  %85 = vmatpush2.msra.mxu0 0.0
  %86 = vmatprep.subr.mxu0 0.0
  %87 = vmatpush2.msra.mxu0 0.0
  %88 = vmatprep.subr.mxu0 0.0
  %89 = vmatpush2.msra.mxu0 0.0
  %90 = vmatprep.subr.mxu0 0.0
  %91 = vmatpush2.msra.mxu0 0.0
  %92 = vmatprep.subr.mxu0 0.0
  %93 = vmatpush2.msra.mxu0 0.0
  %94 = vmatprep.subr.mxu0 0.0
  %95 = vmatpush2.msra.mxu0 0.0
  %96 = vmatprep.subr.mxu0 0.0
  %97 = vmatpush2.msra.mxu0 0.0
  %98 = vmatprep.subr.mxu0 0.0
  %99 = vmatpush2.msra.mxu0 0.0
  %100 = vmatprep.subr.mxu0 0.0
  %101 = vmatpush2.msra.mxu0 0.0
  %102 = vmatprep.subr.mxu0 0.0
  %103 = vmatpush2.msra.mxu0 0.0
  %104 = vmatprep.subr.mxu0 0.0
  %105 = vmatpush2.msra.mxu0 0.0
  %106 = vmatprep.subr.mxu0 0.0
  %107 = vmatpush2.msra.mxu0 0.0
  %108 = vmatprep.subr.mxu0 0.0
  %109 = vmatpush2.msra.mxu0 0.0
  %110 = vmatprep.subr.mxu0 0.0
  %111 = vmatpush2.msra.mxu0 0.0
  %112 = vmatprep.mubr.f32.mxu0 0.0
  %113 = vmatmul.mubr.f32.gmra.mxu0 %v39
  %v114 = vpop.f32.mrf.mxu0
  %v115 = vadd.f32 0.0, %v114
  %v116 = vpop.f32.mrf.mxu0
  %v117 = vadd.f32 0.0, %v116
  %118 = vdwg.mxu0
  %119 = vmatprep.subr.mxu0 0.0
  %120 = vmatpush1.msra.mxu0 0.0
  %121 = vmatprep.subr.mxu0 0.0
  %122 = vmatpush1.msra.mxu0 0.0
  %123 = vmatprep.subr.mxu0 0.0
  %124 = vmatpush1.msra.mxu0 0.0
  %125 = vmatprep.subr.mxu0 0.0
  %126 = vmatpush1.msra.mxu0 0.0
  %127 = vmatprep.subr.mxu0 0.0
  %128 = vmatpush1.msra.mxu0 0.0
  %129 = vmatprep.subr.mxu0 0.0
  %130 = vmatpush1.msra.mxu0 0.0
  %131 = vmatprep.subr.mxu0 0.0
  %132 = vmatpush1.msra.mxu0 0.0
  %133 = vmatprep.subr.mxu0 0.0
  %134 = vmatpush1.msra.mxu0 0.0
  %135 = vmatprep.subr.mxu0 0.0
  %136 = vmatpush1.msra.mxu0 0.0
  %137 = vmatprep.subr.mxu0 0.0
  %138 = vmatpush1.msra.mxu0 0.0
  %139 = vmatprep.subr.mxu0 0.0
  %140 = vmatpush1.msra.mxu0 0.0
  %141 = vmatprep.subr.mxu0 0.0
  %142 = vmatpush1.msra.mxu0 0.0
  %143 = vmatprep.subr.mxu0 0.0
  %144 = vmatpush1.msra.mxu0 0.0
  %145 = vmatprep.subr.mxu0 0.0
  %146 = vmatpush1.msra.mxu0 0.0
  %147 = vmatprep.subr.mxu0 0.0
  %148 = vmatpush1.msra.mxu0 0.0
  %149 = vmatprep.subr.mxu0 0.0
  %150 = vmatpush1.msra.mxu0 %v46
  %151 = vmatprep.subr.mxu0 0.0
  %152 = vmatpush2.msra.mxu0 0.0
  %153 = vmatprep.subr.mxu0 0.0
  %154 = vmatpush2.msra.mxu0 0.0
  %155 = vmatprep.subr.mxu0 0.0
  %156 = vmatpush2.msra.mxu0 0.0
  %157 = vmatprep.subr.mxu0 0.0
  %158 = vmatpush2.msra.mxu0 0.0
  %159 = vmatprep.subr.mxu0 0.0
  %160 = vmatpush2.msra.mxu0 0.0
  %161 = vmatprep.subr.mxu0 0.0
  %162 = vmatpush2.msra.mxu0 0.0
  %163 = vmatprep.subr.mxu0 0.0
  %164 = vmatpush2.msra.mxu0 0.0
  %165 = vmatprep.subr.mxu0 0.0
  %166 = vmatpush2.msra.mxu0 0.0
  %167 = vmatprep.subr.mxu0 0.0
  %168 = vmatpush2.msra.mxu0 0.0
  %169 = vmatprep.subr.mxu0 0.0
  %170 = vmatpush2.msra.mxu0 0.0
  %171 = vmatprep.subr.mxu0 0.0
  %172 = vmatpush2.msra.mxu0 0.0
  %173 = vmatprep.subr.mxu0 0.0
  %174 = vmatpush2.msra.mxu0 0.0
  %175 = vmatprep.subr.mxu0 0.0
  %176 = vmatpush2.msra.mxu0 0.0
  %177 = vmatprep.subr.mxu0 0.0
  %178 = vmatpush2.msra.mxu0 0.0
  %179 = vmatprep.subr.mxu0 0.0
  %180 = vmatpush2.msra.mxu0 0.0
  %181 = vmatprep.subr.mxu0 0.0
  %182 = vmatpush2.msra.mxu0 0.0
  %183 = vmatprep.mubr.f32.mxu0 0.0
  %184 = vmatmul.mubr.f32.gmra.mxu0 %v39
  %v185 = vpop.f32.mrf.mxu0
  %v186 = vadd.f32 0.0, %v185
  %v187 = vpop.f32.mrf.mxu0
  %188 = vdwg.mxu0
  %v189 = vsel %vm41, %v115, 0.0
  %v190 = vsel %vm41, %v117, 0.0
  %v191 = vadd.f32 %v189, %v190
  %v192 = vsel %vm41, %v186, 0.0
  %v193 = vadd.f32 %v191, %v192
  %194 = vadd.xlane.f32.xlu0 %v193
  %v195 = vpop.xlane.xlu0 %194
  %v196 = vmul.f32 %v195, 0.0034722222
  %v197 = vmul.f32 %v115, %v115
  %v198 = vmul.f32 %v117, %v117
  %v199 = vmul.f32 %v186, %v186
  %v200 = vsel %vm41, %v197, 0.0
  %v201 = vsel %vm41, %v198, 0.0
  %v202 = vadd.f32 %v200, %v201
  %v203 = vsel %vm41, %v199, 0.0
  %v204 = vadd.f32 %v202, %v203
  %205 = vadd.xlane.f32.xlu0 %v204
  %v206 = vpop.xlane.xlu0 %205
  %v207 = vmul.f32 %v206, 0.0034722222
  %v208 = vmul.f32 %v196, %v196
  %v209 = vsub.f32 %v207, %v208
  %v210 = vld [vmem:[%s2] sm:$0xf]
  %v211 = vadd.f32 %v209, 1e-05
  %v212 = vrsqrt.pop %v211
  %v213 = vmul.f32 %v210, %v212
  %v214 = vld [vmem:[%s3] sm:$0xf]
  %v215 = vmul.f32 %v196, %v213
  %v216 = vsub.f32 %v214, %v215
  %218 = vset.pattern.permute.xlu0 0
  %219 = vperm.xlu0 %218, %v213
  %v220 = vpop.permute.xlu0 %219
  %v222 = vmul.f32 %v115, %v220
  %v223 = vmul.f32 %v117, %v220
  %v224 = vmul.f32 %v186, %v220
  %226 = vset.pattern.permute.xlu0 0
  %227 = vperm.xlu0 %226, %v216
  %v228 = vpop.permute.xlu0 %227
  %v230 = vadd.f32 %v222, %v228
  %v231 = vadd.f32 %v223, %v228
  %v232 = vadd.f32 %v224, %v228
  %v233 = vmax.f32 %v230, 0.0
  %v234 = vmax.f32 %v231, 0.0
  %v235 = vmax.f32 %v232, 0.0
  %v238 = vcombine.low %v233, %v234
  %240 = vst [vmem:[%s8] sm:$0xff] %v238
  %241 = vst [vmem:[%s8 + $0x8] sm:$0xf] %v235
  %v242 = vld [vmem:[%s5] sm:$0xf]
  %v243 = vld [vmem:[%s4] sm:$0xf]
  %v245 = vsel %vm37, %v242, 0
  %v248 = vsel %vm41, %v243, 0
  %250 = vmatprep.subr.mxu0 0.0
  %251 = vmatpush1.msra.mxu0 0.0
  %252 = vmatprep.subr.mxu0 0.0
  %253 = vmatpush1.msra.mxu0 0.0
  %254 = vmatprep.subr.mxu0 0.0
  %255 = vmatpush1.msra.mxu0 0.0
  %256 = vmatprep.subr.mxu0 0.0
  %257 = vmatpush1.msra.mxu0 0.0
  %258 = vmatprep.subr.mxu0 0.0
  %259 = vmatpush1.msra.mxu0 0.0
  %260 = vmatprep.subr.mxu0 0.0
  %261 = vmatpush1.msra.mxu0 0.0
  %262 = vmatprep.subr.mxu0 0.0
  %263 = vmatpush1.msra.mxu0 0.0
  %264 = vmatprep.subr.mxu0 0.0
  %265 = vmatpush1.msra.mxu0 0.0
  %266 = vmatprep.subr.mxu0 0.0
  %267 = vmatpush1.msra.mxu0 0.0
  %268 = vmatprep.subr.mxu0 0.0
  %269 = vmatpush1.msra.mxu0 0.0
  %270 = vmatprep.subr.mxu0 0.0
  %271 = vmatpush1.msra.mxu0 0.0
  %272 = vmatprep.subr.mxu0 0.0
  %273 = vmatpush1.msra.mxu0 0.0
  %274 = vmatprep.subr.mxu0 0.0
  %275 = vmatpush1.msra.mxu0 0.0
  %276 = vmatprep.subr.mxu0 0.0
  %277 = vmatpush1.msra.mxu0 0.0
  %278 = vmatprep.subr.mxu0 0.0
  %279 = vmatpush1.msra.mxu0 0.0
  %280 = vmatprep.subr.mxu0 0.0
  %281 = vmatpush1.msra.mxu0 %v248
  %282 = vmatprep.subr.mxu0 0.0
  %283 = vmatpush2.msra.mxu0 0.0
  %284 = vmatprep.subr.mxu0 0.0
  %285 = vmatpush2.msra.mxu0 0.0
  %286 = vmatprep.subr.mxu0 0.0
  %287 = vmatpush2.msra.mxu0 0.0
  %288 = vmatprep.subr.mxu0 0.0
  %289 = vmatpush2.msra.mxu0 0.0
  %290 = vmatprep.subr.mxu0 0.0
  %291 = vmatpush2.msra.mxu0 0.0
  %292 = vmatprep.subr.mxu0 0.0
  %293 = vmatpush2.msra.mxu0 0.0
  %294 = vmatprep.subr.mxu0 0.0
  %295 = vmatpush2.msra.mxu0 0.0
  %296 = vmatprep.subr.mxu0 0.0
  %297 = vmatpush2.msra.mxu0 0.0
  %298 = vmatprep.subr.mxu0 0.0
  %299 = vmatpush2.msra.mxu0 0.0
  %300 = vmatprep.subr.mxu0 0.0
  %301 = vmatpush2.msra.mxu0 0.0
  %302 = vmatprep.subr.mxu0 0.0
  %303 = vmatpush2.msra.mxu0 0.0
  %304 = vmatprep.subr.mxu0 0.0
  %305 = vmatpush2.msra.mxu0 0.0
  %306 = vmatprep.subr.mxu0 0.0
  %307 = vmatpush2.msra.mxu0 0.0
  %308 = vmatprep.subr.mxu0 0.0
  %309 = vmatpush2.msra.mxu0 0.0
  %310 = vmatprep.subr.mxu0 0.0
  %311 = vmatpush2.msra.mxu0 0.0
  %312 = vmatprep.subr.mxu0 0.0
  %313 = vmatpush2.msra.mxu0 0.0
  %314 = vmatprep.mubr.f32.mxu0 0.0
  %315 = vmatmul.mubr.f32.gmra.mxu0 %v245
  %v316 = vpop.f32.mrf.mxu0
  %v317 = vadd.f32 0.0, %v316
  %v318 = vpop.f32.mrf.mxu0
  %319 = vdwg.mxu0
  %v320 = vsel %vm41, %v317, 0.0
  %321 = vadd.xlane.f32.xlu0 %v320
  %v322 = vpop.xlane.xlu0 %321
  %v323 = vmul.f32 %v322, 0.0125
  %v324 = vmul.f32 %v317, %v317
  %v325 = vsel %vm41, %v324, 0.0
  %326 = vadd.xlane.f32.xlu0 %v325
  %v327 = vpop.xlane.xlu0 %326
  %v328 = vmul.f32 %v327, 0.0125
  %v329 = vmul.f32 %v323, %v323
  %v330 = vsub.f32 %v328, %v329
  %v331 = vld [vmem:[%s6] sm:$0xf]
  %v332 = vadd.f32 %v330, 1e-05
  %v333 = vrsqrt.pop %v332
  %v334 = vmul.f32 %v331, %v333
  %v335 = vld [vmem:[%s7] sm:$0xf]
  %v336 = vmul.f32 %v323, %v334
  %v337 = vsub.f32 %v335, %v336
  %339 = vset.pattern.permute.xlu0 0
  %340 = vperm.xlu0 %339, %v334
  %v341 = vpop.permute.xlu0 %340
  %v343 = vmul.f32 %v317, %v341
  %345 = vset.pattern.permute.xlu0 0
  %346 = vperm.xlu0 %345, %v337
  %v347 = vpop.permute.xlu0 %346
  %v349 = vadd.f32 %v343, %v347
  %v350 = vmax.f32 %v349, 0.0
  %351 = vst [vmem:[%s9] sm:$0xf] %v350
  // Predicated region
  $region34: #{ffc_bn_act_forward.4} parent=0 // pred_check
    _
  $region35: #{ffc_bn_act_forward.4} parent=0 // pred_check_branch
    %353 = sbr.rel (0) target = $region37
  $region36: #{ffc_bn_act_forward.4} parent=0 // pred_region
    _
  $region37: #{ffc_bn_act_forward.4} parent=0 // pred_fallthru
    _
  // Predicated region
  $region38: #{ffc_bn_act_forward.4} parent=0 // pred_check
    _
  $region39: #{ffc_bn_act_forward.4} parent=0 // pred_check_branch
    %355 = sbr.rel (0) target = $region41
  $region40: #{ffc_bn_act_forward.4} parent=0 // pred_region
    _
  $region41: #{ffc_bn_act_forward.4} parent=0 // pred_fallthru
    _
  // Predicated region
  $region42: #{ffc_bn_act_forward.4} parent=0 // pred_check
    _
  $region43: #{ffc_bn_act_forward.4} parent=0 // pred_check_branch
    %357 = sbr.rel (0) target = $region45
  $region44: #{ffc_bn_act_forward.4} parent=0 // pred_region
    _
  $region45: #{ffc_bn_act_forward.4} parent=0 // pred_fallthru
    _
  // Predicated region
  $region46: #{ffc_bn_act_forward.4} parent=0 // pred_check
    _
  $region47: #{ffc_bn_act_forward.4} parent=0 // pred_check_branch
    %359 = sbr.rel (0) target = $region49
  $region48: #{ffc_bn_act_forward.4} parent=0 // pred_region
    _
  $region49: #{ffc_bn_act_forward.4} parent=0 // pred_fallthru
    _

// kernel: tile.9
$region0: #{tile.9}
  %s0 = inlined_call_operand.vmem [shape: f32[2,2,2,8,2,8], index: 0, kind: input, shape index: {}]
  %s1 = inlined_call_operand.vmem [shape: f32[2,2,256], index: 1, kind: output, shape index: {}]
  $region1: #{tile.9} parent=0
    #allocation0 [shape = 'u8[16384]{0}', space=vmem, size = 0x4000, scoped, tag = 'scoped mem for output reshape']
    #allocation1 [shape = 'u8[262144]{0}', space=vmem, size = 0x40000, scoped, tag = 'scoped mem for input reshape']
    %s3 = sshll.u32 1, 2
    %s4 = ssub.s32 %s3, 1
    %s5 = smul.addr 2, 63
    %s6 = scalar_lea.vmem %s0, %s5
    %v7 = vld [vmem:[%s6] sm:%s4]
    %s8 = scalar_lea.vmem [#allocation1], 504
    %9 = vst [vmem:[%s8] sm:%s4] %v7
    %s10 = smul.addr 2, 62
    %s11 = scalar_lea.vmem %s0, %s10
    %v12 = vld [vmem:[%s11] sm:%s4]
    %s13 = scalar_lea.vmem [#allocation1], 496
    %14 = vst [vmem:[%s13] sm:%s4] %v12
    %s15 = smul.addr 2, 61
    %s16 = scalar_lea.vmem %s0, %s15
    %v17 = vld [vmem:[%s16] sm:%s4]
    %s18 = scalar_lea.vmem [#allocation1], 488
    %19 = vst [vmem:[%s18] sm:%s4] %v17
    %s20 = smul.addr 2, 60
    %s21 = scalar_lea.vmem %s0, %s20
    %v22 = vld [vmem:[%s21] sm:%s4]
    %s23 = scalar_lea.vmem [#allocation1], 480
    %24 = vst [vmem:[%s23] sm:%s4] %v22
    %s25 = smul.addr 2, 59
    %s26 = scalar_lea.vmem %s0, %s25
    %v27 = vld [vmem:[%s26] sm:%s4]
    %s28 = scalar_lea.vmem [#allocation1], 472
    %29 = vst [vmem:[%s28] sm:%s4] %v27
    %s30 = smul.addr 2, 58
    %s31 = scalar_lea.vmem %s0, %s30
    %v32 = vld [vmem:[%s31] sm:%s4]
    %s33 = scalar_lea.vmem [#allocation1], 464
    %34 = vst [vmem:[%s33] sm:%s4] %v32
    %s35 = smul.addr 2, 57
    %s36 = scalar_lea.vmem %s0, %s35
    %v37 = vld [vmem:[%s36] sm:%s4]
    %s38 = scalar_lea.vmem [#allocation1], 456
    %39 = vst [vmem:[%s38] sm:%s4] %v37
    %s40 = smul.addr 2, 56
    %s41 = scalar_lea.vmem %s0, %s40
    %v42 = vld [vmem:[%s41] sm:%s4]
    %s43 = scalar_lea.vmem [#allocation1], 448
    %44 = vst [vmem:[%s43] sm:%s4] %v42
    %s45 = smul.addr 2, 55
    %s46 = scalar_lea.vmem %s0, %s45
    %v47 = vld [vmem:[%s46] sm:%s4]
    %s48 = scalar_lea.vmem [#allocation1], 440
    %49 = vst [vmem:[%s48] sm:%s4] %v47
    %s50 = smul.addr 2, 54
    %s51 = scalar_lea.vmem %s0, %s50
    %v52 = vld [vmem:[%s51] sm:%s4]
    %s53 = scalar_lea.vmem [#allocation1], 432
    %54 = vst [vmem:[%s53] sm:%s4] %v52
    %s55 = smul.addr 2, 53
    %s56 = scalar_lea.vmem %s0, %s55
    %v57 = vld [vmem:[%s56] sm:%s4]
    %s58 = scalar_lea.vmem [#allocation1], 424
    %59 = vst [vmem:[%s58] sm:%s4] %v57
    %s60 = smul.addr 2, 52
    %s61 = scalar_lea.vmem %s0, %s60
    %v62 = vld [vmem:[%s61] sm:%s4]
    %s63 = scalar_lea.vmem [#allocation1], 416
    %64 = vst [vmem:[%s63] sm:%s4] %v62
    %s65 = smul.addr 2, 51
    %s66 = scalar_lea.vmem %s0, %s65
    %v67 = vld [vmem:[%s66] sm:%s4]
    %s68 = scalar_lea.vmem [#allocation1], 408
    %69 = vst [vmem:[%s68] sm:%s4] %v67
    %s70 = smul.addr 2, 50
    %s71 = scalar_lea.vmem %s0, %s70
    %v72 = vld [vmem:[%s71] sm:%s4]
    %s73 = scalar_lea.vmem [#allocation1], 400
    %74 = vst [vmem:[%s73] sm:%s4] %v72
    %s75 = smul.addr 2, 49
    %s76 = scalar_lea.vmem %s0, %s75
    %v77 = vld [vmem:[%s76] sm:%s4]
    %s78 = scalar_lea.vmem [#allocation1], 392
    %79 = vst [vmem:[%s78] sm:%s4] %v77
    %s80 = smul.addr 2, 48
    %s81 = scalar_lea.vmem %s0, %s80
    %v82 = vld [vmem:[%s81] sm:%s4]
    %s83 = scalar_lea.vmem [#allocation1], 384
    %84 = vst [vmem:[%s83] sm:%s4] %v82
    %s85 = smul.addr 2, 47
    %s86 = scalar_lea.vmem %s0, %s85
    %v87 = vld [vmem:[%s86] sm:%s4]
    %s88 = scalar_lea.vmem [#allocation1], 376
    %89 = vst [vmem:[%s88] sm:%s4] %v87
    %s90 = smul.addr 2, 46
    %s91 = scalar_lea.vmem %s0, %s90
    %v92 = vld [vmem:[%s91] sm:%s4]
    %s93 = scalar_lea.vmem [#allocation1], 368
    %94 = vst [vmem:[%s93] sm:%s4] %v92
    %s95 = smul.addr 2, 45
    %s96 = scalar_lea.vmem %s0, %s95
    %v97 = vld [vmem:[%s96] sm:%s4]
    %s98 = scalar_lea.vmem [#allocation1], 360
    %99 = vst [vmem:[%s98] sm:%s4] %v97
    %s100 = smul.addr 2, 44
    %s101 = scalar_lea.vmem %s0, %s100
    %v102 = vld [vmem:[%s101] sm:%s4]
    %s103 = scalar_lea.vmem [#allocation1], 352
    %104 = vst [vmem:[%s103] sm:%s4] %v102
    %s105 = smul.addr 2, 43
    %s106 = scalar_lea.vmem %s0, %s105
    %v107 = vld [vmem:[%s106] sm:%s4]
    %s108 = scalar_lea.vmem [#allocation1], 344
    %109 = vst [vmem:[%s108] sm:%s4] %v107
    %s110 = smul.addr 2, 42
    %s111 = scalar_lea.vmem %s0, %s110
    %v112 = vld [vmem:[%s111] sm:%s4]
    %s113 = scalar_lea.vmem [#allocation1], 336
    %114 = vst [vmem:[%s113] sm:%s4] %v112
    %s115 = smul.addr 2, 41
    %s116 = scalar_lea.vmem %s0, %s115
    %v117 = vld [vmem:[%s116] sm:%s4]
    %s118 = scalar_lea.vmem [#allocation1], 328
    %119 = vst [vmem:[%s118] sm:%s4] %v117
    %s120 = smul.addr 2, 40
    %s121 = scalar_lea.vmem %s0, %s120
    %v122 = vld [vmem:[%s121] sm:%s4]
    %s123 = scalar_lea.vmem [#allocation1], 320
    %124 = vst [vmem:[%s123] sm:%s4] %v122
    %s125 = smul.addr 2, 39
    %s126 = scalar_lea.vmem %s0, %s125
    %v127 = vld [vmem:[%s126] sm:%s4]
    %s128 = scalar_lea.vmem [#allocation1], 312
    %129 = vst [vmem:[%s128] sm:%s4] %v127
    %s130 = smul.addr 2, 38
    %s131 = scalar_lea.vmem %s0, %s130
    %v132 = vld [vmem:[%s131] sm:%s4]
    %s133 = scalar_lea.vmem [#allocation1], 304
    %134 = vst [vmem:[%s133] sm:%s4] %v132
    %s135 = smul.addr 2, 37
    %s136 = scalar_lea.vmem %s0, %s135
    %v137 = vld [vmem:[%s136] sm:%s4]
    %s138 = scalar_lea.vmem [#allocation1], 296
    %139 = vst [vmem:[%s138] sm:%s4] %v137
    %s140 = smul.addr 2, 36
    %s141 = scalar_lea.vmem %s0, %s140
    %v142 = vld [vmem:[%s141] sm:%s4]
    %s143 = scalar_lea.vmem [#allocation1], 288
    %144 = vst [vmem:[%s143] sm:%s4] %v142
    %s145 = smul.addr 2, 35
    %s146 = scalar_lea.vmem %s0, %s145
    %v147 = vld [vmem:[%s146] sm:%s4]
    %s148 = scalar_lea.vmem [#allocation1], 280
    %149 = vst [vmem:[%s148] sm:%s4] %v147
    %s150 = smul.addr 2, 34
    %s151 = scalar_lea.vmem %s0, %s150
    %v152 = vld [vmem:[%s151] sm:%s4]
    %s153 = scalar_lea.vmem [#allocation1], 272
    %154 = vst [vmem:[%s153] sm:%s4] %v152
    %s155 = smul.addr 2, 33
    %s156 = scalar_lea.vmem %s0, %s155
    %v157 = vld [vmem:[%s156] sm:%s4]
    %s158 = scalar_lea.vmem [#allocation1], 264
    %159 = vst [vmem:[%s158] sm:%s4] %v157
    %s160 = smul.addr 2, 32
    %s161 = scalar_lea.vmem %s0, %s160
    %v162 = vld [vmem:[%s161] sm:%s4]
    %s163 = scalar_lea.vmem [#allocation1], 256
    %164 = vst [vmem:[%s163] sm:%s4] %v162
    %s165 = smul.addr 2, 31
    %s166 = scalar_lea.vmem %s0, %s165
    %v167 = vld [vmem:[%s166] sm:%s4]
    %s168 = scalar_lea.vmem [#allocation1], 248
    %169 = vst [vmem:[%s168] sm:%s4] %v167
    %s170 = smul.addr 2, 30
    %s171 = scalar_lea.vmem %s0, %s170
    %v172 = vld [vmem:[%s171] sm:%s4]
    %s173 = scalar_lea.vmem [#allocation1], 240
    %174 = vst [vmem:[%s173] sm:%s4] %v172
    %s175 = smul.addr 2, 29
    %s176 = scalar_lea.vmem %s0, %s175
    %v177 = vld [vmem:[%s176] sm:%s4]
    %s178 = scalar_lea.vmem [#allocation1], 232
    %179 = vst [vmem:[%s178] sm:%s4] %v177
    %s180 = smul.addr 2, 28
    %s181 = scalar_lea.vmem %s0, %s180
    %v182 = vld [vmem:[%s181] sm:%s4]
    %s183 = scalar_lea.vmem [#allocation1], 224
    %184 = vst [vmem:[%s183] sm:%s4] %v182
    %s185 = smul.addr 2, 27
    %s186 = scalar_lea.vmem %s0, %s185
    %v187 = vld [vmem:[%s186] sm:%s4]
    %s188 = scalar_lea.vmem [#allocation1], 216
    %189 = vst [vmem:[%s188] sm:%s4] %v187
    %s190 = smul.addr 2, 26
    %s191 = scalar_lea.vmem %s0, %s190
    %v192 = vld [vmem:[%s191] sm:%s4]
    %s193 = scalar_lea.vmem [#allocation1], 208
    %194 = vst [vmem:[%s193] sm:%s4] %v192
    %s195 = smul.addr 2, 25
    %s196 = scalar_lea.vmem %s0, %s195
    %v197 = vld [vmem:[%s196] sm:%s4]
    %s198 = scalar_lea.vmem [#allocation1], 200
    %199 = vst [vmem:[%s198] sm:%s4] %v197
    %s200 = smul.addr 2, 24
    %s201 = scalar_lea.vmem %s0, %s200
    %v202 = vld [vmem:[%s201] sm:%s4]
    %s203 = scalar_lea.vmem [#allocation1], 192
    %204 = vst [vmem:[%s203] sm:%s4] %v202
    %s205 = smul.addr 2, 23
    %s206 = scalar_lea.vmem %s0, %s205
    %v207 = vld [vmem:[%s206] sm:%s4]
    %s208 = scalar_lea.vmem [#allocation1], 184
    %209 = vst [vmem:[%s208] sm:%s4] %v207
    %s210 = smul.addr 2, 22
    %s211 = scalar_lea.vmem %s0, %s210
    %v212 = vld [vmem:[%s211] sm:%s4]
    %s213 = scalar_lea.vmem [#allocation1], 176
    %214 = vst [vmem:[%s213] sm:%s4] %v212
    %s215 = smul.addr 2, 21
    %s216 = scalar_lea.vmem %s0, %s215
    %v217 = vld [vmem:[%s216] sm:%s4]
    %s218 = scalar_lea.vmem [#allocation1], 168
    %219 = vst [vmem:[%s218] sm:%s4] %v217
    %s220 = smul.addr 2, 20
    %s221 = scalar_lea.vmem %s0, %s220
    %v222 = vld [vmem:[%s221] sm:%s4]
    %s223 = scalar_lea.vmem [#allocation1], 160
    %224 = vst [vmem:[%s223] sm:%s4] %v222
    %s225 = smul.addr 2, 19
    %s226 = scalar_lea.vmem %s0, %s225
    %v227 = vld [vmem:[%s226] sm:%s4]
    %s228 = scalar_lea.vmem [#allocation1], 152
    %229 = vst [vmem:[%s228] sm:%s4] %v227
    %s230 = smul.addr 2, 18
    %s231 = scalar_lea.vmem %s0, %s230
    %v232 = vld [vmem:[%s231] sm:%s4]
    %s233 = scalar_lea.vmem [#allocation1], 144
    %234 = vst [vmem:[%s233] sm:%s4] %v232
    %s235 = smul.addr 2, 17
    %s236 = scalar_lea.vmem %s0, %s235
    %v237 = vld [vmem:[%s236] sm:%s4]
    %s238 = scalar_lea.vmem [#allocation1], 136
    %239 = vst [vmem:[%s238] sm:%s4] %v237
    %s240 = smul.addr 2, 16
    %s241 = scalar_lea.vmem %s0, %s240
    %v242 = vld [vmem:[%s241] sm:%s4]
    %s243 = scalar_lea.vmem [#allocation1], 128
    %244 = vst [vmem:[%s243] sm:%s4] %v242
    %s245 = smul.addr 2, 15
    %s246 = scalar_lea.vmem %s0, %s245
    %v247 = vld [vmem:[%s246] sm:%s4]
    %s248 = scalar_lea.vmem [#allocation1], 120
    %249 = vst [vmem:[%s248] sm:%s4] %v247
    %s250 = smul.addr 2, 14
    %s251 = scalar_lea.vmem %s0, %s250
    %v252 = vld [vmem:[%s251] sm:%s4]
    %s253 = scalar_lea.vmem [#allocation1], 112
    %254 = vst [vmem:[%s253] sm:%s4] %v252
    %s255 = smul.addr 2, 13
    %s256 = scalar_lea.vmem %s0, %s255
    %v257 = vld [vmem:[%s256] sm:%s4]
    %s258 = scalar_lea.vmem [#allocation1], 104
    %259 = vst [vmem:[%s258] sm:%s4] %v257
    %s260 = smul.addr 2, 12
    %s261 = scalar_lea.vmem %s0, %s260
    %v262 = vld [vmem:[%s261] sm:%s4]
    %s263 = scalar_lea.vmem [#allocation1], 96
    %264 = vst [vmem:[%s263] sm:%s4] %v262
    %s265 = smul.addr 2, 11
    %s266 = scalar_lea.vmem %s0, %s265
    %v267 = vld [vmem:[%s266] sm:%s4]
    %s268 = scalar_lea.vmem [#allocation1], 88
    %269 = vst [vmem:[%s268] sm:%s4] %v267
    %s270 = smul.addr 2, 10
    %s271 = scalar_lea.vmem %s0, %s270
    %v272 = vld [vmem:[%s271] sm:%s4]
    %s273 = scalar_lea.vmem [#allocation1], 80
    %274 = vst [vmem:[%s273] sm:%s4] %v272
    %s275 = smul.addr 2, 9
    %s276 = scalar_lea.vmem %s0, %s275
    %v277 = vld [vmem:[%s276] sm:%s4]
    %s278 = scalar_lea.vmem [#allocation1], 72
    %279 = vst [vmem:[%s278] sm:%s4] %v277
    %s280 = smul.addr 2, 8
    %s281 = scalar_lea.vmem %s0, %s280
    %v282 = vld [vmem:[%s281] sm:%s4]
    %s283 = scalar_lea.vmem [#allocation1], 64
    %284 = vst [vmem:[%s283] sm:%s4] %v282
    %s285 = smul.addr 2, 7
    %s286 = scalar_lea.vmem %s0, %s285
    %v287 = vld [vmem:[%s286] sm:%s4]
    %s288 = scalar_lea.vmem [#allocation1], 56
    %289 = vst [vmem:[%s288] sm:%s4] %v287
    %s290 = smul.addr 2, 6
    %s291 = scalar_lea.vmem %s0, %s290
    %v292 = vld [vmem:[%s291] sm:%s4]
    %s293 = scalar_lea.vmem [#allocation1], 48
    %294 = vst [vmem:[%s293] sm:%s4] %v292
    %s295 = smul.addr 2, 5
    %s296 = scalar_lea.vmem %s0, %s295
    %v297 = vld [vmem:[%s296] sm:%s4]
    %s298 = scalar_lea.vmem [#allocation1], 40
    %299 = vst [vmem:[%s298] sm:%s4] %v297
    %s300 = smul.addr 2, 4
    %s301 = scalar_lea.vmem %s0, %s300
    %v302 = vld [vmem:[%s301] sm:%s4]
    %s303 = scalar_lea.vmem [#allocation1], 32
    %304 = vst [vmem:[%s303] sm:%s4] %v302
    %s305 = smul.addr 2, 3
    %s306 = scalar_lea.vmem %s0, %s305
    %v307 = vld [vmem:[%s306] sm:%s4]
    %s308 = scalar_lea.vmem [#allocation1], 24
    %309 = vst [vmem:[%s308] sm:%s4] %v307
    %s310 = smul.addr 2, 2
    %s311 = scalar_lea.vmem %s0, %s310
    %v312 = vld [vmem:[%s311] sm:%s4]
    %s313 = scalar_lea.vmem [#allocation1], 16
    %314 = vst [vmem:[%s313] sm:%s4] %v312
    %s315 = scalar_lea.vmem %s0, 2
    %v316 = vld [vmem:[%s315] sm:%s4]
    %s317 = scalar_lea.vmem [#allocation1], 8
    %318 = vst [vmem:[%s317] sm:%s4] %v316
    %v319 = vld [vmem:[%s0] sm:%s4]
    %320 = vst [vmem:[#allocation1] sm:%s4] %v319
    %v321 = vld [vmem:[#allocation1] sm:$0x1]
    %s322 = scalar_lea.vmem [#allocation1], 63
    %v323 = vld [vmem:[%s322] sm:$0x2]
    %vm324 = vcmask 1041409
    %v325 = vsel %vm324, %v323, %v321
    %s326 = scalar_lea.vmem [#allocation1], 126
    %v327 = vld [vmem:[%s326] sm:$0x4]
    %vm328 = vcmask 1042434
    %v329 = vsel %vm328, %v327, %v325
    %s330 = scalar_lea.vmem [#allocation1], 189
    %v331 = vld [vmem:[%s330] sm:$0x8]
    %vm332 = vcmask 1043459
    %v333 = vsel %vm332, %v331, %v329
    %s334 = scalar_lea.vmem [#allocation1], 252
    %v335 = vld [vmem:[%s334] sm:$0x10]
    %vm336 = vcmask 1044484
    %v337 = vsel %vm336, %v335, %v333
    %s338 = scalar_lea.vmem [#allocation1], 315
    %v339 = vld [vmem:[%s338] sm:$0x20]
    %vm340 = vcmask 1045509
    %v341 = vsel %vm340, %v339, %v337
    %s342 = scalar_lea.vmem [#allocation1], 378
    %v343 = vld [vmem:[%s342] sm:$0x40]
    %vm344 = vcmask 1046534
    %v345 = vsel %vm344, %v343, %v341
    %s346 = scalar_lea.vmem [#allocation1], 441
    %v347 = vld [vmem:[%s346] sm:$0x80]
    %vm348 = vcmask 1047559
    %v349 = vsel %vm348, %v347, %v345
    %vm350 = vcmask 64512
    %351 = vst.msk [vmem:[#allocation0] ss:$8 sm:$0x3] %vm350, %v349
    %s352 = scalar_lea.vmem [#allocation0], 4294967281
    %353 = vst.msk [vmem:[%s352] ss:$8 sm:$0xc] %vm350, %v349
    %s354 = scalar_lea.vmem [#allocation0], 4294967280
    %355 = vst.msk [vmem:[%s354] ss:$8 sm:$0x30] %vm350, %v349
    %s356 = scalar_lea.vmem [#allocation0], 4294967265
    %357 = vst.msk [vmem:[%s356] ss:$8 sm:$0xc0] %vm350, %v349
    %s358 = scalar_lea.vmem [#allocation1], 57
    %v359 = vld [vmem:[%s358] sm:$0x1]
    %s360 = scalar_lea.vmem [#allocation1], 184
    %v361 = vld [vmem:[%s360] sm:$0x2]
    %vm362 = vcmask 1041409
    %v363 = vsel %vm362, %v361, %v359
    %s364 = scalar_lea.vmem [#allocation1], 119
    %v365 = vld [vmem:[%s364] sm:$0x4]
    %vm366 = vcmask 1042434
    %v367 = vsel %vm366, %v365, %v363
    %s368 = scalar_lea.vmem [#allocation1], 246
    %v369 = vld [vmem:[%s368] sm:$0x8]
    %vm370 = vcmask 1043459
    %v371 = vsel %vm370, %v369, %v367
    %s372 = scalar_lea.vmem [#allocation1], 309
    %v373 = vld [vmem:[%s372] sm:$0x10]
    %vm374 = vcmask 1044484
    %v375 = vsel %vm374, %v373, %v371
    %s376 = scalar_lea.vmem [#allocation1], 436
    %v377 = vld [vmem:[%s376] sm:$0x20]
    %vm378 = vcmask 1045509
    %v379 = vsel %vm378, %v377, %v375
    %s380 = scalar_lea.vmem [#allocation1], 371
    %v381 = vld [vmem:[%s380] sm:$0x40]
    %vm382 = vcmask 1046534
    %v383 = vsel %vm382, %v381, %v379
    %s384 = scalar_lea.vmem [#allocation1], 498
    %v385 = vld [vmem:[%s384] sm:$0x80]
    %vm386 = vcmask 1047559
    %v387 = vsel %vm386, %v385, %v383
    %388 = vrot.lane.b32.xlu0 %v387, 120
    %v389 = vpop.permute.xlu0 %388
    %vm390 = vcmask 1048512
    %391 = vst.msk [vmem:[#allocation0] sm:$0x3] %vm390, %v389
    %s392 = scalar_lea.vmem [#allocation0], 6
    %393 = vst.msk [vmem:[%s392] sm:$0xc] %vm390, %v389
    %s394 = scalar_lea.vmem [#allocation0], 12
    %395 = vst.msk [vmem:[%s394] sm:$0x30] %vm390, %v389
    %s396 = scalar_lea.vmem [#allocation0], 18
    %397 = vst.msk [vmem:[%s396] sm:$0xc0] %vm390, %v389
    %s398 = scalar_lea.vmem [#allocation1], 56
    %v399 = vld [vmem:[%s398] sm:$0x1]
    %s400 = scalar_lea.vmem [#allocation1], 183
    %v401 = vld [vmem:[%s400] sm:$0x2]
    %vm402 = vcmask 1041409
    %v403 = vsel %vm402, %v401, %v399
    %s404 = scalar_lea.vmem [#allocation1], 118
    %v405 = vld [vmem:[%s404] sm:$0x4]
    %vm406 = vcmask 1042434
    %v407 = vsel %vm406, %v405, %v403
    %s408 = scalar_lea.vmem [#allocation1], 245
    %v409 = vld [vmem:[%s408] sm:$0x8]
    %vm410 = vcmask 1043459
    %v411 = vsel %vm410, %v409, %v407
    %s412 = scalar_lea.vmem [#allocation1], 308
    %v413 = vld [vmem:[%s412] sm:$0x10]
    %vm414 = vcmask 1044484
    %v415 = vsel %vm414, %v413, %v411
    %s416 = scalar_lea.vmem [#allocation1], 435
    %v417 = vld [vmem:[%s416] sm:$0x20]
    %vm418 = vcmask 1045509
    %v419 = vsel %vm418, %v417, %v415
    %s420 = scalar_lea.vmem [#allocation1], 370
    %v421 = vld [vmem:[%s420] sm:$0x40]
    %vm422 = vcmask 1046534
    %v423 = vsel %vm422, %v421, %v419
    %s424 = scalar_lea.vmem [#allocation1], 497
    %v425 = vld [vmem:[%s424] sm:$0x80]
    %vm426 = vcmask 1047559
    %v427 = vsel %vm426, %v425, %v423
    %428 = vrot.lane.b32.xlu0 %v427, 112
    %v429 = vpop.permute.xlu0 %428
    %vm430 = vcmask 982912
    %431 = vst.msk [vmem:[#allocation0] sm:$0x3] %vm430, %v429
    %s432 = scalar_lea.vmem [#allocation0], 6
    %433 = vst.msk [vmem:[%s432] sm:$0xc] %vm430, %v429
    %s434 = scalar_lea.vmem [#allocation0], 12
    %435 = vst.msk [vmem:[%s434] sm:$0x30] %vm430, %v429
    %s436 = scalar_lea.vmem [#allocation0], 18
    %437 = vst.msk [vmem:[%s436] sm:$0xc0] %vm430, %v429
    %s438 = scalar_lea.vmem [#allocation1], 49
    %v439 = vld [vmem:[%s438] sm:$0x1]
    %s440 = scalar_lea.vmem [#allocation1], 176
    %v441 = vld [vmem:[%s440] sm:$0x2]
    %vm442 = vcmask 1041409
    %v443 = vsel %vm442, %v441, %v439
    %s444 = scalar_lea.vmem [#allocation1], 111
    %v445 = vld [vmem:[%s444] sm:$0x4]
    %vm446 = vcmask 1042434
    %v447 = vsel %vm446, %v445, %v443
    %s448 = scalar_lea.vmem [#allocation1], 238
    %v449 = vld [vmem:[%s448] sm:$0x8]
    %vm450 = vcmask 1043459
    %v451 = vsel %vm450, %v449, %v447
    %s452 = scalar_lea.vmem [#allocation1], 301
    %v453 = vld [vmem:[%s452] sm:$0x10]
    %vm454 = vcmask 1044484
    %v455 = vsel %vm454, %v453, %v451
    %s456 = scalar_lea.vmem [#allocation1], 428
    %v457 = vld [vmem:[%s456] sm:$0x20]
    %vm458 = vcmask 1045509
    %v459 = vsel %vm458, %v457, %v455
    %s460 = scalar_lea.vmem [#allocation1], 363
    %v461 = vld [vmem:[%s460] sm:$0x40]
    %vm462 = vcmask 1046534
    %v463 = vsel %vm462, %v461, %v459
    %s464 = scalar_lea.vmem [#allocation1], 490
    %v465 = vld [vmem:[%s464] sm:$0x80]
    %vm466 = vcmask 1047559
    %v467 = vsel %vm466, %v465, %v463
    %468 = vrot.lane.b32.xlu0 %v467, 104
    %v469 = vpop.permute.xlu0 %468
    %vm470 = vcmask 917312
    %471 = vst.msk [vmem:[#allocation0] sm:$0x3] %vm470, %v469
    %s472 = scalar_lea.vmem [#allocation0], 6
    %473 = vst.msk [vmem:[%s472] sm:$0xc] %vm470, %v469
    %s474 = scalar_lea.vmem [#allocation0], 12
    %475 = vst.msk [vmem:[%s474] sm:$0x30] %vm470, %v469
    %s476 = scalar_lea.vmem [#allocation0], 18
    %477 = vst.msk [vmem:[%s476] sm:$0xc0] %vm470, %v469
    %s478 = scalar_lea.vmem [#allocation1], 48
    %v479 = vld [vmem:[%s478] sm:$0x1]
    %s480 = scalar_lea.vmem [#allocation1], 175
    %v481 = vld [vmem:[%s480] sm:$0x2]
    %vm482 = vcmask 1041409
    %v483 = vsel %vm482, %v481, %v479
    %s484 = scalar_lea.vmem [#allocation1], 110
    %v485 = vld [vmem:[%s484] sm:$0x4]
    %vm486 = vcmask 1042434
    %v487 = vsel %vm486, %v485, %v483
    %s488 = scalar_lea.vmem [#allocation1], 237
    %v489 = vld [vmem:[%s488] sm:$0x8]
    %vm490 = vcmask 1043459
    %v491 = vsel %vm490, %v489, %v487
    %s492 = scalar_lea.vmem [#allocation1], 300
    %v493 = vld [vmem:[%s492] sm:$0x10]
    %vm494 = vcmask 1044484
    %v495 = vsel %vm494, %v493, %v491
    %s496 = scalar_lea.vmem [#allocation1], 427
    %v497 = vld [vmem:[%s496] sm:$0x20]
    %vm498 = vcmask 1045509
    %v499 = vsel %vm498, %v497, %v495
    %s500 = scalar_lea.vmem [#allocation1], 362
    %v501 = vld [vmem:[%s500] sm:$0x40]
    %vm502 = vcmask 1046534
    %v503 = vsel %vm502, %v501, %v499
    %s504 = scalar_lea.vmem [#allocation1], 489
    %v505 = vld [vmem:[%s504] sm:$0x80]
    %vm506 = vcmask 1047559
    %v507 = vsel %vm506, %v505, %v503
    %508 = vrot.lane.b32.xlu0 %v507, 96
    %v509 = vpop.permute.xlu0 %508
    %vm510 = vcmask 851712
    %511 = vst.msk [vmem:[#allocation0] sm:$0x3] %vm510, %v509
    %s512 = scalar_lea.vmem [#allocation0], 6
    %513 = vst.msk [vmem:[%s512] sm:$0xc] %vm510, %v509
    %s514 = scalar_lea.vmem [#allocation0], 12
    %515 = vst.msk [vmem:[%s514] sm:$0x30] %vm510, %v509
    %s516 = scalar_lea.vmem [#allocation0], 18
    %517 = vst.msk [vmem:[%s516] sm:$0xc0] %vm510, %v509
    %s518 = scalar_lea.vmem [#allocation1], 41
    %v519 = vld [vmem:[%s518] sm:$0x1]
    %s520 = scalar_lea.vmem [#allocation1], 168
    %v521 = vld [vmem:[%s520] sm:$0x2]
    %vm522 = vcmask 1041409
    %v523 = vsel %vm522, %v521, %v519
    %s524 = scalar_lea.vmem [#allocation1], 103
    %v525 = vld [vmem:[%s524] sm:$0x4]
    %vm526 = vcmask 1042434
    %v527 = vsel %vm526, %v525, %v523
    %s528 = scalar_lea.vmem [#allocation1], 230
    %v529 = vld [vmem:[%s528] sm:$0x8]
    %vm530 = vcmask 1043459
    %v531 = vsel %vm530, %v529, %v527
    %s532 = scalar_lea.vmem [#allocation1], 293
    %v533 = vld [vmem:[%s532] sm:$0x10]
    %vm534 = vcmask 1044484
    %v535 = vsel %vm534, %v533, %v531
    %s536 = scalar_lea.vmem [#allocation1], 420
    %v537 = vld [vmem:[%s536] sm:$0x20]
    %vm538 = vcmask 1045509
    %v539 = vsel %vm538, %v537, %v535
    %s540 = scalar_lea.vmem [#allocation1], 355
    %v541 = vld [vmem:[%s540] sm:$0x40]
    %vm542 = vcmask 1046534
    %v543 = vsel %vm542, %v541, %v539
    %s544 = scalar_lea.vmem [#allocation1], 482
    %v545 = vld [vmem:[%s544] sm:$0x80]
    %vm546 = vcmask 1047559
    %v547 = vsel %vm546, %v545, %v543
    %548 = vrot.lane.b32.xlu0 %v547, 88
    %v549 = vpop.permute.xlu0 %548
    %vm550 = vcmask 786112
    %551 = vst.msk [vmem:[#allocation0] sm:$0x3] %vm550, %v549
    %s552 = scalar_lea.vmem [#allocation0], 6
    %553 = vst.msk [vmem:[%s552] sm:$0xc] %vm550, %v549
    %s554 = scalar_lea.vmem [#allocation0], 12
    %555 = vst.msk [vmem:[%s554] sm:$0x30] %vm550, %v549
    %s556 = scalar_lea.vmem [#allocation0], 18
    %557 = vst.msk [vmem:[%s556] sm:$0xc0] %vm550, %v549
    %s558 = scalar_lea.vmem [#allocation1], 40
    %v559 = vld [vmem:[%s558] sm:$0x1]
    %s560 = scalar_lea.vmem [#allocation1], 167
    %v561 = vld [vmem:[%s560] sm:$0x2]
    %vm562 = vcmask 1041409
    %v563 = vsel %vm562, %v561, %v559
    %s564 = scalar_lea.vmem [#allocation1], 102
    %v565 = vld [vmem:[%s564] sm:$0x4]
    %vm566 = vcmask 1042434
    %v567 = vsel %vm566, %v565, %v563
    %s568 = scalar_lea.vmem [#allocation1], 229
    %v569 = vld [vmem:[%s568] sm:$0x8]
    %vm570 = vcmask 1043459
    %v571 = vsel %vm570, %v569, %v567
    %s572 = scalar_lea.vmem [#allocation1], 292
    %v573 = vld [vmem:[%s572] sm:$0x10]
    %vm574 = vcmask 1044484
    %v575 = vsel %vm574, %v573, %v571
    %s576 = scalar_lea.vmem [#allocation1], 419
    %v577 = vld [vmem:[%s576] sm:$0x20]
    %vm578 = vcmask 1045509
    %v579 = vsel %vm578, %v577, %v575
    %s580 = scalar_lea.vmem [#allocation1], 354
    %v581 = vld [vmem:[%s580] sm:$0x40]
    %vm582 = vcmask 1046534
    %v583 = vsel %vm582, %v581, %v579
    %s584 = scalar_lea.vmem [#allocation1], 481
    %v585 = vld [vmem:[%s584] sm:$0x80]
    %vm586 = vcmask 1047559
    %v587 = vsel %vm586, %v585, %v583
    %588 = vrot.lane.b32.xlu0 %v587, 80
    %v589 = vpop.permute.xlu0 %588
    %vm590 = vcmask 720512
    %591 = vst.msk [vmem:[#allocation0] sm:$0x3] %vm590, %v589
    %s592 = scalar_lea.vmem [#allocation0], 6
    %593 = vst.msk [vmem:[%s592] sm:$0xc] %vm590, %v589
    %s594 = scalar_lea.vmem [#allocation0], 12
    %595 = vst.msk [vmem:[%s594] sm:$0x30] %vm590, %v589
    %s596 = scalar_lea.vmem [#allocation0], 18
    %597 = vst.msk [vmem:[%s596] sm:$0xc0] %vm590, %v589
    %s598 = scalar_lea.vmem [#allocation1], 33
    %v599 = vld [vmem:[%s598] sm:$0x1]
    %s600 = scalar_lea.vmem [#allocation1], 160
    %v601 = vld [vmem:[%s600] sm:$0x2]
    %vm602 = vcmask 1041409
    %v603 = vsel %vm602, %v601, %v599
    %s604 = scalar_lea.vmem [#allocation1], 95
    %v605 = vld [vmem:[%s604] sm:$0x4]
    %vm606 = vcmask 1042434
    %v607 = vsel %vm606, %v605, %v603
    %s608 = scalar_lea.vmem [#allocation1], 222
    %v609 = vld [vmem:[%s608] sm:$0x8]
    %vm610 = vcmask 1043459
    %v611 = vsel %vm610, %v609, %v607
    %s612 = scalar_lea.vmem [#allocation1], 285
    %v613 = vld [vmem:[%s612] sm:$0x10]
    %vm614 = vcmask 1044484
    %v615 = vsel %vm614, %v613, %v611
    %s616 = scalar_lea.vmem [#allocation1], 412
    %v617 = vld [vmem:[%s616] sm:$0x20]
    %vm618 = vcmask 1045509
    %v619 = vsel %vm618, %v617, %v615
    %s620 = scalar_lea.vmem [#allocation1], 347
    %v621 = vld [vmem:[%s620] sm:$0x40]
    %vm622 = vcmask 1046534
    %v623 = vsel %vm622, %v621, %v619
    %s624 = scalar_lea.vmem [#allocation1], 474
    %v625 = vld [vmem:[%s624] sm:$0x80]
    %vm626 = vcmask 1047559
    %v627 = vsel %vm626, %v625, %v623
    %628 = vrot.lane.b32.xlu0 %v627, 72
    %v629 = vpop.permute.xlu0 %628
    %vm630 = vcmask 654912
    %631 = vst.msk [vmem:[#allocation0] sm:$0x3] %vm630, %v629
    %s632 = scalar_lea.vmem [#allocation0], 6
    %633 = vst.msk [vmem:[%s632] sm:$0xc] %vm630, %v629
    %s634 = scalar_lea.vmem [#allocation0], 12
    %635 = vst.msk [vmem:[%s634] sm:$0x30] %vm630, %v629
    %s636 = scalar_lea.vmem [#allocation0], 18
    %637 = vst.msk [vmem:[%s636] sm:$0xc0] %vm630, %v629
    %s638 = scalar_lea.vmem [#allocation1], 32
    %v639 = vld [vmem:[%s638] sm:$0x1]
    %s640 = scalar_lea.vmem [#allocation1], 159
    %v641 = vld [vmem:[%s640] sm:$0x2]
    %vm642 = vcmask 1041409
    %v643 = vsel %vm642, %v641, %v639
    %s644 = scalar_lea.vmem [#allocation1], 94
    %v645 = vld [vmem:[%s644] sm:$0x4]
    %vm646 = vcmask 1042434
    %v647 = vsel %vm646, %v645, %v643
    %s648 = scalar_lea.vmem [#allocation1], 221
    %v649 = vld [vmem:[%s648] sm:$0x8]
    %vm650 = vcmask 1043459
    %v651 = vsel %vm650, %v649, %v647
    %s652 = scalar_lea.vmem [#allocation1], 284
    %v653 = vld [vmem:[%s652] sm:$0x10]
    %vm654 = vcmask 1044484
    %v655 = vsel %vm654, %v653, %v651
    %s656 = scalar_lea.vmem [#allocation1], 411
    %v657 = vld [vmem:[%s656] sm:$0x20]
    %vm658 = vcmask 1045509
    %v659 = vsel %vm658, %v657, %v655
    %s660 = scalar_lea.vmem [#allocation1], 346
    %v661 = vld [vmem:[%s660] sm:$0x40]
    %vm662 = vcmask 1046534
    %v663 = vsel %vm662, %v661, %v659
    %s664 = scalar_lea.vmem [#allocation1], 473
    %v665 = vld [vmem:[%s664] sm:$0x80]
    %vm666 = vcmask 1047559
    %v667 = vsel %vm666, %v665, %v663
    %668 = vrot.lane.b32.xlu0 %v667, 64
    %v669 = vpop.permute.xlu0 %668
    %vm670 = vcmask 589312
    %671 = vst.msk [vmem:[#allocation0] sm:$0x3] %vm670, %v669
    %s672 = scalar_lea.vmem [#allocation0], 6
    %673 = vst.msk [vmem:[%s672] sm:$0xc] %vm670, %v669
    %s674 = scalar_lea.vmem [#allocation0], 12
    %675 = vst.msk [vmem:[%s674] sm:$0x30] %vm670, %v669
    %s676 = scalar_lea.vmem [#allocation0], 18
    %677 = vst.msk [vmem:[%s676] sm:$0xc0] %vm670, %v669
    %s678 = scalar_lea.vmem [#allocation1], 25
    %v679 = vld [vmem:[%s678] sm:$0x1]
    %s680 = scalar_lea.vmem [#allocation1], 152
    %v681 = vld [vmem:[%s680] sm:$0x2]
    %vm682 = vcmask 1041409
    %v683 = vsel %vm682, %v681, %v679
    %s684 = scalar_lea.vmem [#allocation1], 87
    %v685 = vld [vmem:[%s684] sm:$0x4]
    %vm686 = vcmask 1042434
    %v687 = vsel %vm686, %v685, %v683
    %s688 = scalar_lea.vmem [#allocation1], 214
    %v689 = vld [vmem:[%s688] sm:$0x8]
    %vm690 = vcmask 1043459
    %v691 = vsel %vm690, %v689, %v687
    %s692 = scalar_lea.vmem [#allocation1], 277
    %v693 = vld [vmem:[%s692] sm:$0x10]
    %vm694 = vcmask 1044484
    %v695 = vsel %vm694, %v693, %v691
    %s696 = scalar_lea.vmem [#allocation1], 404
    %v697 = vld [vmem:[%s696] sm:$0x20]
    %vm698 = vcmask 1045509
    %v699 = vsel %vm698, %v697, %v695
    %s700 = scalar_lea.vmem [#allocation1], 339
    %v701 = vld [vmem:[%s700] sm:$0x40]
    %vm702 = vcmask 1046534
    %v703 = vsel %vm702, %v701, %v699
    %s704 = scalar_lea.vmem [#allocation1], 466
    %v705 = vld [vmem:[%s704] sm:$0x80]
    %vm706 = vcmask 1047559
    %v707 = vsel %vm706, %v705, %v703
    %708 = vrot.lane.b32.xlu0 %v707, 56
    %v709 = vpop.permute.xlu0 %708
    %vm710 = vcmask 523712
    %711 = vst.msk [vmem:[#allocation0] sm:$0x3] %vm710, %v709
    %s712 = scalar_lea.vmem [#allocation0], 6
    %713 = vst.msk [vmem:[%s712] sm:$0xc] %vm710, %v709
    %s714 = scalar_lea.vmem [#allocation0], 12
    %715 = vst.msk [vmem:[%s714] sm:$0x30] %vm710, %v709
    %s716 = scalar_lea.vmem [#allocation0], 18
    %717 = vst.msk [vmem:[%s716] sm:$0xc0] %vm710, %v709
    %s718 = scalar_lea.vmem [#allocation1], 24
    %v719 = vld [vmem:[%s718] sm:$0x1]
    %s720 = scalar_lea.vmem [#allocation1], 151
    %v721 = vld [vmem:[%s720] sm:$0x2]
    %vm722 = vcmask 1041409
    %v723 = vsel %vm722, %v721, %v719
    %s724 = scalar_lea.vmem [#allocation1], 86
    %v725 = vld [vmem:[%s724] sm:$0x4]
    %vm726 = vcmask 1042434
    %v727 = vsel %vm726, %v725, %v723
    %s728 = scalar_lea.vmem [#allocation1], 213
    %v729 = vld [vmem:[%s728] sm:$0x8]
    %vm730 = vcmask 1043459
    %v731 = vsel %vm730, %v729, %v727
    %s732 = scalar_lea.vmem [#allocation1], 276
    %v733 = vld [vmem:[%s732] sm:$0x10]
    %vm734 = vcmask 1044484
    %v735 = vsel %vm734, %v733, %v731
    %s736 = scalar_lea.vmem [#allocation1], 403
    %v737 = vld [vmem:[%s736] sm:$0x20]
    %vm738 = vcmask 1045509
    %v739 = vsel %vm738, %v737, %v735
    %s740 = scalar_lea.vmem [#allocation1], 338
    %v741 = vld [vmem:[%s740] sm:$0x40]
    %vm742 = vcmask 1046534
    %v743 = vsel %vm742, %v741, %v739
    %s744 = scalar_lea.vmem [#allocation1], 465
    %v745 = vld [vmem:[%s744] sm:$0x80]
    %vm746 = vcmask 1047559
    %v747 = vsel %vm746, %v745, %v743
    %748 = vrot.lane.b32.xlu0 %v747, 48
    %v749 = vpop.permute.xlu0 %748
    %vm750 = vcmask 458112
    %751 = vst.msk [vmem:[#allocation0] sm:$0x3] %vm750, %v749
    %s752 = scalar_lea.vmem [#allocation0], 6
    %753 = vst.msk [vmem:[%s752] sm:$0xc] %vm750, %v749
    %s754 = scalar_lea.vmem [#allocation0], 12
    %755 = vst.msk [vmem:[%s754] sm:$0x30] %vm750, %v749
    %s756 = scalar_lea.vmem [#allocation0], 18
    %757 = vst.msk [vmem:[%s756] sm:$0xc0] %vm750, %v749
    %s758 = scalar_lea.vmem [#allocation1], 17
    %v759 = vld [vmem:[%s758] sm:$0x1]
    %s760 = scalar_lea.vmem [#allocation1], 144
    %v761 = vld [vmem:[%s760] sm:$0x2]
    %vm762 = vcmask 1041409
    %v763 = vsel %vm762, %v761, %v759
    %s764 = scalar_lea.vmem [#allocation1], 79
    %v765 = vld [vmem:[%s764] sm:$0x4]
    %vm766 = vcmask 1042434
    %v767 = vsel %vm766, %v765, %v763
    %s768 = scalar_lea.vmem [#allocation1], 206
    %v769 = vld [vmem:[%s768] sm:$0x8]
    %vm770 = vcmask 1043459
    %v771 = vsel %vm770, %v769, %v767
    %s772 = scalar_lea.vmem [#allocation1], 269
    %v773 = vld [vmem:[%s772] sm:$0x10]
    %vm774 = vcmask 1044484
    %v775 = vsel %vm774, %v773, %v771
    %s776 = scalar_lea.vmem [#allocation1], 396
    %v777 = vld [vmem:[%s776] sm:$0x20]
    %vm778 = vcmask 1045509
    %v779 = vsel %vm778, %v777, %v775
    %s780 = scalar_lea.vmem [#allocation1], 331
    %v781 = vld [vmem:[%s780] sm:$0x40]
    %vm782 = vcmask 1046534
    %v783 = vsel %vm782, %v781, %v779
    %s784 = scalar_lea.vmem [#allocation1], 458
    %v785 = vld [vmem:[%s784] sm:$0x80]
    %vm786 = vcmask 1047559
    %v787 = vsel %vm786, %v785, %v783
    %788 = vrot.lane.b32.xlu0 %v787, 40
    %v789 = vpop.permute.xlu0 %788
    %vm790 = vcmask 392512
    %791 = vst.msk [vmem:[#allocation0] sm:$0x3] %vm790, %v789
    %s792 = scalar_lea.vmem [#allocation0], 6
    %793 = vst.msk [vmem:[%s792] sm:$0xc] %vm790, %v789
    %s794 = scalar_lea.vmem [#allocation0], 12
    %795 = vst.msk [vmem:[%s794] sm:$0x30] %vm790, %v789
    %s796 = scalar_lea.vmem [#allocation0], 18
    %797 = vst.msk [vmem:[%s796] sm:$0xc0] %vm790, %v789
    %s798 = scalar_lea.vmem [#allocation1], 16
    %v799 = vld [vmem:[%s798] sm:$0x1]
    %s800 = scalar_lea.vmem [#allocation1], 143
    %v801 = vld [vmem:[%s800] sm:$0x2]
    %vm802 = vcmask 1041409
    %v803 = vsel %vm802, %v801, %v799
    %s804 = scalar_lea.vmem [#allocation1], 78
    %v805 = vld [vmem:[%s804] sm:$0x4]
    %vm806 = vcmask 1042434
    %v807 = vsel %vm806, %v805, %v803
    %s808 = scalar_lea.vmem [#allocation1], 205
    %v809 = vld [vmem:[%s808] sm:$0x8]
    %vm810 = vcmask 1043459
    %v811 = vsel %vm810, %v809, %v807
    %s812 = scalar_lea.vmem [#allocation1], 268
    %v813 = vld [vmem:[%s812] sm:$0x10]
    %vm814 = vcmask 1044484
    %v815 = vsel %vm814, %v813, %v811
    %s816 = scalar_lea.vmem [#allocation1], 395
    %v817 = vld [vmem:[%s816] sm:$0x20]
    %vm818 = vcmask 1045509
    %v819 = vsel %vm818, %v817, %v815
    %s820 = scalar_lea.vmem [#allocation1], 330
    %v821 = vld [vmem:[%s820] sm:$0x40]
    %vm822 = vcmask 1046534
    %v823 = vsel %vm822, %v821, %v819
    %s824 = scalar_lea.vmem [#allocation1], 457
    %v825 = vld [vmem:[%s824] sm:$0x80]
    %vm826 = vcmask 1047559
    %v827 = vsel %vm826, %v825, %v823
    %828 = vrot.lane.b32.xlu0 %v827, 32
    %v829 = vpop.permute.xlu0 %828
    %vm830 = vcmask 326912
    %831 = vst.msk [vmem:[#allocation0] sm:$0x3] %vm830, %v829
    %s832 = scalar_lea.vmem [#allocation0], 6
    %833 = vst.msk [vmem:[%s832] sm:$0xc] %vm830, %v829
    %s834 = scalar_lea.vmem [#allocation0], 12
    %835 = vst.msk [vmem:[%s834] sm:$0x30] %vm830, %v829
    %s836 = scalar_lea.vmem [#allocation0], 18
    %837 = vst.msk [vmem:[%s836] sm:$0xc0] %vm830, %v829
    %s838 = scalar_lea.vmem [#allocation1], 9
    %v839 = vld [vmem:[%s838] sm:$0x1]
    %s840 = scalar_lea.vmem [#allocation1], 136
    %v841 = vld [vmem:[%s840] sm:$0x2]
    %vm842 = vcmask 1041409
    %v843 = vsel %vm842, %v841, %v839
    %s844 = scalar_lea.vmem [#allocation1], 71
    %v845 = vld [vmem:[%s844] sm:$0x4]
    %vm846 = vcmask 1042434
    %v847 = vsel %vm846, %v845, %v843
    %s848 = scalar_lea.vmem [#allocation1], 198
    %v849 = vld [vmem:[%s848] sm:$0x8]
    %vm850 = vcmask 1043459
    %v851 = vsel %vm850, %v849, %v847
    %s852 = scalar_lea.vmem [#allocation1], 261
    %v853 = vld [vmem:[%s852] sm:$0x10]
    %vm854 = vcmask 1044484
    %v855 = vsel %vm854, %v853, %v851
    %s856 = scalar_lea.vmem [#allocation1], 388
    %v857 = vld [vmem:[%s856] sm:$0x20]
    %vm858 = vcmask 1045509
    %v859 = vsel %vm858, %v857, %v855
    %s860 = scalar_lea.vmem [#allocation1], 323
    %v861 = vld [vmem:[%s860] sm:$0x40]
    %vm862 = vcmask 1046534
    %v863 = vsel %vm862, %v861, %v859
    %s864 = scalar_lea.vmem [#allocation1], 450
    %v865 = vld [vmem:[%s864] sm:$0x80]
    %vm866 = vcmask 1047559
    %v867 = vsel %vm866, %v865, %v863
    %868 = vrot.lane.b32.xlu0 %v867, 24
    %v869 = vpop.permute.xlu0 %868
    %vm870 = vcmask 261312
    %871 = vst.msk [vmem:[#allocation0] sm:$0x3] %vm870, %v869
    %s872 = scalar_lea.vmem [#allocation0], 6
    %873 = vst.msk [vmem:[%s872] sm:$0xc] %vm870, %v869
    %s874 = scalar_lea.vmem [#allocation0], 12
    %875 = vst.msk [vmem:[%s874] sm:$0x30] %vm870, %v869
    %s876 = scalar_lea.vmem [#allocation0], 18
    %877 = vst.msk [vmem:[%s876] sm:$0xc0] %vm870, %v869
    %s878 = scalar_lea.vmem [#allocation1], 8
    %v879 = vld [vmem:[%s878] sm:$0x1]
    %s880 = scalar_lea.vmem [#allocation1], 135
    %v881 = vld [vmem:[%s880] sm:$0x2]
    %vm882 = vcmask 1041409
    %v883 = vsel %vm882, %v881, %v879
    %s884 = scalar_lea.vmem [#allocation1], 70
    %v885 = vld [vmem:[%s884] sm:$0x4]
    %vm886 = vcmask 1042434
    %v887 = vsel %vm886, %v885, %v883
    %s888 = scalar_lea.vmem [#allocation1], 197
    %v889 = vld [vmem:[%s888] sm:$0x8]
    %vm890 = vcmask 1043459
    %v891 = vsel %vm890, %v889, %v887
    %s892 = scalar_lea.vmem [#allocation1], 260
    %v893 = vld [vmem:[%s892] sm:$0x10]
    %vm894 = vcmask 1044484
    %v895 = vsel %vm894, %v893, %v891
    %s896 = scalar_lea.vmem [#allocation1], 387
    %v897 = vld [vmem:[%s896] sm:$0x20]
    %vm898 = vcmask 1045509
    %v899 = vsel %vm898, %v897, %v895
    %s900 = scalar_lea.vmem [#allocation1], 322
    %v901 = vld [vmem:[%s900] sm:$0x40]
    %vm902 = vcmask 1046534
    %v903 = vsel %vm902, %v901, %v899
    %s904 = scalar_lea.vmem [#allocation1], 449
    %v905 = vld [vmem:[%s904] sm:$0x80]
    %vm906 = vcmask 1047559
    %v907 = vsel %vm906, %v905, %v903
    %908 = vrot.lane.b32.xlu0 %v907, 16
    %v909 = vpop.permute.xlu0 %908
    %vm910 = vcmask 195712
    %911 = vst.msk [vmem:[#allocation0] sm:$0x3] %vm910, %v909
    %s912 = scalar_lea.vmem [#allocation0], 6
    %913 = vst.msk [vmem:[%s912] sm:$0xc] %vm910, %v909
    %s914 = scalar_lea.vmem [#allocation0], 12
    %915 = vst.msk [vmem:[%s914] sm:$0x30] %vm910, %v909
    %s916 = scalar_lea.vmem [#allocation0], 18
    %917 = vst.msk [vmem:[%s916] sm:$0xc0] %vm910, %v909
    %s918 = scalar_lea.vmem [#allocation1], 1
    %v919 = vld [vmem:[%s918] sm:$0x1]
    %s920 = scalar_lea.vmem [#allocation1], 128
    %v921 = vld [vmem:[%s920] sm:$0x2]
    %vm922 = vcmask 1041409
    %v923 = vsel %vm922, %v921, %v919
    %s924 = scalar_lea.vmem [#allocation1], 63
    %v925 = vld [vmem:[%s924] sm:$0x4]
    %vm926 = vcmask 1042434
    %v927 = vsel %vm926, %v925, %v923
    %s928 = scalar_lea.vmem [#allocation1], 190
    %v929 = vld [vmem:[%s928] sm:$0x8]
    %vm930 = vcmask 1043459
    %v931 = vsel %vm930, %v929, %v927
    %s932 = scalar_lea.vmem [#allocation1], 253
    %v933 = vld [vmem:[%s932] sm:$0x10]
    %vm934 = vcmask 1044484
    %v935 = vsel %vm934, %v933, %v931
    %s936 = scalar_lea.vmem [#allocation1], 380
    %v937 = vld [vmem:[%s936] sm:$0x20]
    %vm938 = vcmask 1045509
    %v939 = vsel %vm938, %v937, %v935
    %s940 = scalar_lea.vmem [#allocation1], 315
    %v941 = vld [vmem:[%s940] sm:$0x40]
    %vm942 = vcmask 1046534
    %v943 = vsel %vm942, %v941, %v939
    %s944 = scalar_lea.vmem [#allocation1], 442
    %v945 = vld [vmem:[%s944] sm:$0x80]
    %vm946 = vcmask 1047559
    %v947 = vsel %vm946, %v945, %v943
    %948 = vrot.lane.b32.xlu0 %v947, 8
    %v949 = vpop.permute.xlu0 %948
    %vm950 = vcmask 130112
    %951 = vst.msk [vmem:[#allocation0] sm:$0x3] %vm950, %v949
    %s952 = scalar_lea.vmem [#allocation0], 6
    %953 = vst.msk [vmem:[%s952] sm:$0xc] %vm950, %v949
    %s954 = scalar_lea.vmem [#allocation0], 12
    %955 = vst.msk [vmem:[%s954] sm:$0x30] %vm950, %v949
    %s956 = scalar_lea.vmem [#allocation0], 18
    %957 = vst.msk [vmem:[%s956] sm:$0xc0] %vm950, %v949
    %s959 = sshll.u32 1, 2
    %s960 = ssub.s32 %s959, 1
    %v962 = vld [vmem:[#allocation0] sm:%s960]
    %s963 = sshll.u32 1, 2
    %s964 = ssub.s32 %s963, 1
    %965 = vst [vmem:[%s1] sm:%s964] %v962
    %s966 = scalar_lea.vmem [#allocation0], 8
    %v967 = vld [vmem:[%s966] sm:%s960]
    %s968 = sshll.u32 1, 2
    %s969 = ssub.s32 %s968, 1
    %s970 = scalar_lea.vmem %s1, 2
    %971 = vst [vmem:[%s970] sm:%s969] %v967
    %s972 = scalar_lea.vmem [#allocation0], 16
    %v973 = vld [vmem:[%s972] sm:%s960]
    %s974 = sshll.u32 1, 2
    %s975 = ssub.s32 %s974, 1
    %s976 = smul.addr 2, 2
    %s977 = scalar_lea.vmem %s1, %s976
    %978 = vst [vmem:[%s977] sm:%s975] %v973
    %s979 = scalar_lea.vmem [#allocation0], 24
    %v980 = vld [vmem:[%s979] sm:%s960]
    %s981 = sshll.u32 1, 2
    %s982 = ssub.s32 %s981, 1
    %s983 = smul.addr 2, 3
    %s984 = scalar_lea.vmem %s1, %s983
    %985 = vst [vmem:[%s984] sm:%s982] %v980

// kernel: reverse.0
$region0: #{reverse.0}
  %s0 = inlined_call_operand.vmem [shape: f32[2,2,16,7], index: 0, kind: input, shape index: {}]
  %s1 = inlined_call_operand.vmem [shape: f32[2,2,16,7], index: 1, kind: output, shape index: {}]
  $region1: #{reverse.0} parent=0
    #allocation0 [shape = 'u8[32768]{0}', space=vmem, size = 0x8000, scoped, tag = 'operand span for operand 0']
    #allocation1 [shape = 'u8[16384]{0}', space=vmem, size = 0x4000, scoped, tag = 'operand span for operand 1']
    %s2 = scalar_lea.vmem [#allocation0], 8
    // Predicated region
    $region2: #{reverse.0} parent=1 // pred_check
      _
    $region3: #{reverse.0} parent=1 // pred_check_branch
      %4 = sbr.rel (0) target = $region5
    $region4: #{reverse.0} parent=1 // pred_region
      // Predicated region
      $region6: #{reverse.0} parent=4 // pred_check
        _
      $region7: #{reverse.0} parent=4 // pred_check_branch
        %6 = sbr.rel (0) target = $region9
      $region8: #{reverse.0} parent=4 // pred_region
        // Predicated region
        $region21: #{reverse.0} parent=8 // pred_check
          _
        $region22: #{reverse.0} parent=8 // pred_check_branch
          %28 = sbr.rel (0) target = $region24
        $region23: #{reverse.0} parent=8 // pred_region
          loop: start=0, step=1, limit=1
          $region25: #{reverse.0} parent=23 // loop_pre_header
            _
          $region26: #{reverse.0} parent=23 // loop_header
            %s30 = sphi 0, %s34
            %p31 = scmp.ge.s32.totalorder %s30, 1
            %s35 = sphi %s0, %s0
            %s36 = sphi %s2, %s2
          $region27: #{reverse.0} parent=23 // loop_header_branch
            %33 = sbr.rel (%p31) target = $region31
          $region28: #{reverse.0} parent=23 // loop_body
            %v37 = vld [vmem:[%s35] sm:$0xff]
            %38 = vst [vmem:[%s36] sm:$0xff] %v37
            %v39 = vld [vmem:[%s35 + $0x8] sm:$0xff]
            %40 = vst [vmem:[%s36 + $0x10] sm:$0xff] %v39
            %v41 = vld [vmem:[%s35 + $0x10] sm:$0xff]
            %42 = vst [vmem:[%s36 + $0x20] sm:$0xff] %v41
            %v43 = vld [vmem:[%s35 + $0x18] sm:$0xff]
            %44 = vst [vmem:[%s36 + $0x30] sm:$0xff] %v43
          $region29: #{reverse.0} parent=23 // loop_footer
            %s34 = sadd.s32 1, %s30
          $region30: #{reverse.0} parent=23 // loop_footer_branch
            %29 = sbr.rel target = $region26
          $region31: #{reverse.0} parent=23 // loop_exit
            _
        $region24: #{reverse.0} parent=8 // pred_fallthru
          _
        // Predicated region
        $region32: #{reverse.0} parent=8 // pred_check
          _
        $region33: #{reverse.0} parent=8 // pred_check_branch
          %46 = sbr.rel target = $region35
        $region34: #{reverse.0} parent=8 // pred_region
          _
        $region35: #{reverse.0} parent=8 // pred_fallthru
          _
      $region9: #{reverse.0} parent=4 // pred_fallthru
        _
      // Predicated region
      $region10: #{reverse.0} parent=4 // pred_check
        _
      $region11: #{reverse.0} parent=4 // pred_check_branch
        %8 = sbr.rel target = $region13
      $region12: #{reverse.0} parent=4 // pred_region
        %s10 = ssub.s32 256, 1
        loop: start=0, step=1, limit=1
        $region14: #{reverse.0} parent=12 // loop_pre_header
          _
        $region15: #{reverse.0} parent=12 // loop_header
          %s12 = sphi 0, %s16
          %p13 = scmp.ge.s32.totalorder %s12, 1
          %s17 = sphi %s0, %s0
          %s18 = sphi %s2, %s2
        $region16: #{reverse.0} parent=12 // loop_header_branch
          %15 = sbr.rel (%p13) target = $region20
        $region17: #{reverse.0} parent=12 // loop_body
          %v19 = vld [vmem:[%s17] sm:%s10]
          %20 = vst [vmem:[%s18] sm:%s10] %v19
          %v21 = vld [vmem:[%s17 + $0x8] sm:%s10]
          %22 = vst [vmem:[%s18 + $0x10] sm:%s10] %v21
          %v23 = vld [vmem:[%s17 + $0x10] sm:%s10]
          %24 = vst [vmem:[%s18 + $0x20] sm:%s10] %v23
          %v25 = vld [vmem:[%s17 + $0x18] sm:%s10]
          %26 = vst [vmem:[%s18 + $0x30] sm:%s10] %v25
        $region18: #{reverse.0} parent=12 // loop_footer
          %s16 = sadd.s32 1, %s12
        $region19: #{reverse.0} parent=12 // loop_footer_branch
          %11 = sbr.rel target = $region15
        $region20: #{reverse.0} parent=12 // loop_exit
          _
      $region13: #{reverse.0} parent=4 // pred_fallthru
        _
    $region5: #{reverse.0} parent=1 // pred_fallthru
      _
    %47 = vnop
    %s48 = scalar_lea.vmem [#allocation0], 7
    %v49 = vld [vmem:[%s48] ss:$-1 sm:$0xff]
    %v50 = vrot.slane %v49, 1
    %51 = vst [vmem:[#allocation1] sm:$0xff] %v50
    %s52 = scalar_lea.vmem [#allocation0], 8
    %s53 = scalar_lea.vmem %s52, 7 [#allocation0]
    %v54 = vld [vmem:[%s53] ss:$-1 sm:$0xff]
    %v55 = vrot.slane %v54, 1
    %v56 = vlaneseq
    %v57 = vshrl.u32 %v56, 7
    %vm58 = vcmp.lt.s32.totalorder %v57, 7
    %59 = vst.msk [vmem:[#allocation1] sm:$0xff] %vm58, %v55
    %s60 = scalar_lea.vmem [#allocation1], 8
    %s61 = scalar_lea.vmem [#allocation0], 16
    %s62 = scalar_lea.vmem %s61, 7 [#allocation0]
    %v63 = vld [vmem:[%s62] ss:$-1 sm:$0xff]
    %v64 = vrot.slane %v63, 1
    %65 = vst [vmem:[%s60] sm:$0xff] %v64
    %s66 = scalar_lea.vmem %s61, 8 [#allocation0]
    %s67 = scalar_lea.vmem %s66, 7 [#allocation0]
    %v68 = vld [vmem:[%s67] ss:$-1 sm:$0xff]
    %v69 = vrot.slane %v68, 1
    %v70 = vlaneseq
    %v71 = vshrl.u32 %v70, 7
    %vm72 = vcmp.lt.s32.totalorder %v71, 7
    %73 = vst.msk [vmem:[%s60] sm:$0xff] %vm72, %v69
    %s74 = scalar_lea.vmem [#allocation1], 16
    %s75 = scalar_lea.vmem [#allocation0], 32
    %s76 = scalar_lea.vmem %s75, 7 [#allocation0]
    %v77 = vld [vmem:[%s76] ss:$-1 sm:$0xff]
    %v78 = vrot.slane %v77, 1
    %79 = vst [vmem:[%s74] sm:$0xff] %v78
    %s80 = scalar_lea.vmem %s75, 8 [#allocation0]
    %s81 = scalar_lea.vmem %s80, 7 [#allocation0]
    %v82 = vld [vmem:[%s81] ss:$-1 sm:$0xff]
    %v83 = vrot.slane %v82, 1
    %v84 = vlaneseq
    %v85 = vshrl.u32 %v84, 7
    %vm86 = vcmp.lt.s32.totalorder %v85, 7
    %87 = vst.msk [vmem:[%s74] sm:$0xff] %vm86, %v83
    %s88 = scalar_lea.vmem [#allocation1], 24
    %s89 = scalar_lea.vmem [#allocation0], 48
    %s90 = scalar_lea.vmem %s89, 7 [#allocation0]
    %v91 = vld [vmem:[%s90] ss:$-1 sm:$0xff]
    %v92 = vrot.slane %v91, 1
    %93 = vst [vmem:[%s88] sm:$0xff] %v92
    %s94 = scalar_lea.vmem %s89, 8 [#allocation0]
    %s95 = scalar_lea.vmem %s94, 7 [#allocation0]
    %v96 = vld [vmem:[%s95] ss:$-1 sm:$0xff]
    %v97 = vrot.slane %v96, 1
    %v98 = vlaneseq
    %v99 = vshrl.u32 %v98, 7
    %vm100 = vcmp.lt.s32.totalorder %v99, 7
    %101 = vst.msk [vmem:[%s88] sm:$0xff] %vm100, %v97
    // Predicated region
    $region36: #{reverse.0} parent=1 // pred_check
      _
    $region37: #{reverse.0} parent=1 // pred_check_branch
      %103 = sbr.rel (0) target = $region39
    $region38: #{reverse.0} parent=1 // pred_region
      // Predicated region
      $region40: #{reverse.0} parent=38 // pred_check
        _
      $region41: #{reverse.0} parent=38 // pred_check_branch
        %105 = sbr.rel (0) target = $region43
      $region42: #{reverse.0} parent=38 // pred_region
        // Predicated region
        $region55: #{reverse.0} parent=42 // pred_check
          _
        $region56: #{reverse.0} parent=42 // pred_check_branch
          %127 = sbr.rel (0) target = $region58
        $region57: #{reverse.0} parent=42 // pred_region
          loop: start=0, step=1, limit=1
          $region59: #{reverse.0} parent=57 // loop_pre_header
            _
          $region60: #{reverse.0} parent=57 // loop_header
            %s129 = sphi 0, %s133
            %p130 = scmp.ge.s32.totalorder %s129, 1
            %s134 = sphi [#allocation1], [#allocation1]
            %s135 = sphi %s1, %s1
          $region61: #{reverse.0} parent=57 // loop_header_branch
            %132 = sbr.rel (%p130) target = $region65
          $region62: #{reverse.0} parent=57 // loop_body
            %v136 = vld [vmem:[%s134] sm:$0xff]
            %137 = vst [vmem:[%s135] sm:$0xff] %v136
            %v138 = vld [vmem:[%s134 + $0x8] sm:$0xff]
            %139 = vst [vmem:[%s135 + $0x8] sm:$0xff] %v138
            %v140 = vld [vmem:[%s134 + $0x10] sm:$0xff]
            %141 = vst [vmem:[%s135 + $0x10] sm:$0xff] %v140
            %v142 = vld [vmem:[%s134 + $0x18] sm:$0xff]
            %143 = vst [vmem:[%s135 + $0x18] sm:$0xff] %v142
          $region63: #{reverse.0} parent=57 // loop_footer
            %s133 = sadd.s32 1, %s129
          $region64: #{reverse.0} parent=57 // loop_footer_branch
            %128 = sbr.rel target = $region60
          $region65: #{reverse.0} parent=57 // loop_exit
            _
        $region58: #{reverse.0} parent=42 // pred_fallthru
          _
        // Predicated region
        $region66: #{reverse.0} parent=42 // pred_check
          _
        $region67: #{reverse.0} parent=42 // pred_check_branch
          %145 = sbr.rel target = $region69
        $region68: #{reverse.0} parent=42 // pred_region
          _
        $region69: #{reverse.0} parent=42 // pred_fallthru
          _
      $region43: #{reverse.0} parent=38 // pred_fallthru
        _
      // Predicated region
      $region44: #{reverse.0} parent=38 // pred_check
        _
      $region45: #{reverse.0} parent=38 // pred_check_branch
        %107 = sbr.rel target = $region47
      $region46: #{reverse.0} parent=38 // pred_region
        %s109 = ssub.s32 256, 1
        loop: start=0, step=1, limit=1
        $region48: #{reverse.0} parent=46 // loop_pre_header
          _
        $region49: #{reverse.0} parent=46 // loop_header
          %s111 = sphi 0, %s115
          %p112 = scmp.ge.s32.totalorder %s111, 1
          %s116 = sphi [#allocation1], [#allocation1]
          %s117 = sphi %s1, %s1
        $region50: #{reverse.0} parent=46 // loop_header_branch
          %114 = sbr.rel (%p112) target = $region54
        $region51: #{reverse.0} parent=46 // loop_body
          %v118 = vld [vmem:[%s116] sm:%s109]
          %119 = vst [vmem:[%s117] sm:%s109] %v118
          %v120 = vld [vmem:[%s116 + $0x8] sm:%s109]
          %121 = vst [vmem:[%s117 + $0x8] sm:%s109] %v120
          %v122 = vld [vmem:[%s116 + $0x10] sm:%s109]
          %123 = vst [vmem:[%s117 + $0x10] sm:%s109] %v122
          %v124 = vld [vmem:[%s116 + $0x18] sm:%s109]
          %125 = vst [vmem:[%s117 + $0x18] sm:%s109] %v124
        $region52: #{reverse.0} parent=46 // loop_footer
          %s115 = sadd.s32 1, %s111
        $region53: #{reverse.0} parent=46 // loop_footer_branch
          %110 = sbr.rel target = $region49
        $region54: #{reverse.0} parent=46 // loop_exit
          _
      $region47: #{reverse.0} parent=38 // pred_fallthru
        _
    $region39: #{reverse.0} parent=1 // pred_fallthru
      _
    %146 = vnop

// kernel: ffc_bn_act_forward.5
$region0: #{ffc_bn_act_forward.5}
  #allocation0 [shape = 'u32[]', space=smem, size = 0x4, offset = 0x4, fixed_abs, tag = 'smem constant byte address 0x4 - core index']
  #allocation1 [shape = 'u32[144,128]{1,0:T(1,128)}', space=vmem, size = 0x12000, scoped, tag = 'internal scratch']
  #allocation2 [shape = 'f32[4,1]{1,0:T(4,128)}', space=vmem, size = 0x800, scoped, tag = 'scratch operand']
  #allocation3 [shape = 'f32[4,1]{1,0:T(4,128)}', space=vmem, size = 0x800, scoped, tag = 'scratch operand']
  #allocation4 [shape = 'f32[2,4,256]{2,1,0:T(4,128)}', space=vmem, size = 0x2000, scoped, tag = 'scratch operand']
  %s0 = inlined_call_operand.vmem [shape: f32[2,8,256], index: 0, kind: input, shape index: {}]
  %s1 = inlined_call_operand.vmem [shape: f32[2,2,256], index: 1, kind: input, shape index: {}]
  %s2 = inlined_call_operand.vmem [shape: f32[2,2,256], index: 2, kind: input, shape index: {}]
  %s3 = inlined_call_operand.vmem [shape: f32[2,2,256], index: 3, kind: input, shape index: {}]
  %s4 = inlined_call_operand.vmem [shape: f32[2,4,256], index: 4, kind: input, shape index: {}]
  %s5 = inlined_call_operand.vmem [shape: f32[4,8], index: 5, kind: input, shape index: {}]
  %s6 = inlined_call_operand.vmem [shape: f32[4,2], index: 6, kind: input, shape index: {}]
  %s7 = inlined_call_operand.vmem [shape: f32[4,1], index: 7, kind: input, shape index: {}]
  %s8 = inlined_call_operand.vmem [shape: f32[4,1], index: 8, kind: input, shape index: {}]
  %s9 = inlined_call_operand.vmem [shape: f32[2,8,256], index: 9, kind: output, shape index: {}]
  %s10 = sld [smem:[#allocation0]]
  $region81: #{ffc_bn_act_forward.5} parent=0
    _
  %s12 = ssub.s32 1, %s10
  %s13 = scalar_select 0, %s12, %s10
  loop: start=0, step=1, limit=6
  $region2: #{ffc_bn_act_forward.5} parent=0 // loop_pre_header
    _
  $region3: #{ffc_bn_act_forward.5} parent=0 // loop_header
    %s15 = sphi 0, %s19
    %p16 = scmp.ge.s32.totalorder %s15, 6
    %s22 = sphi 0, %s41
    %s23 = sphi 0, %s37
    %s24 = sphi 0, %s33
    %s25 = sphi 0, %s22
    %s26 = sphi 0, %s23
    %s27 = sphi 0, %s24
    %s28 = sphi 0, %s25
    %s29 = sphi 0, %s26
    %s30 = sphi 0, %s27
    %s52 = sphi 0, %s54
    %s55 = sphi 0, %s52
    %s56 = sphi 0, %s55
    %s72 = sphi 0, %s56
    %s86 = sphi 0, %s88
    %s89 = sphi 0, %s86
    %s90 = sphi 0, %s89
    %s106 = sphi 0, %s90
    %s120 = sphi 0, %s122
    %s123 = sphi 0, %s120
    %s124 = sphi 0, %s123
    %s140 = sphi 0, %s124
    %s154 = sphi 0, %s156
    %s157 = sphi 0, %s154
    %s158 = sphi 0, %s157
    %s174 = sphi 0, %s158
    %s186 = sphi 0, %s188
    %s189 = sphi 0, %s186
    %s190 = sphi 0, %s189
    %s206 = sphi 0, %s190
    %s210 = sphi 0, %s210
    %s212 = sphi 0, %s210
    %s213 = sphi 0, %s212
    %s227 = sphi 0, %s213
    %s231 = sphi 0, %s231
    %s233 = sphi 0, %s231
    %s234 = sphi 0, %s233
    %s248 = sphi 0, %s234
    %s252 = sphi 0, %s252
    %s254 = sphi 0, %s252
    %s255 = sphi 0, %s254
    %s269 = sphi 0, %s255
    %s273 = sphi 0, %s273
    %s275 = sphi 0, %s273
    %s276 = sphi 0, %s275
    %s290 = sphi 0, %s276
    %s302 = sphi 0, %s304
    %s305 = sphi 0, %s302
    %s306 = sphi 0, %s305
    %s322 = sphi 0, %s306
  $region4: #{ffc_bn_act_forward.5} parent=0 // loop_header_branch
    %18 = sbr.rel (%p16) target = $region8
  $region5: #{ffc_bn_act_forward.5} parent=0 // loop_body
    %s20 = ssub.s32 %s15, 1
    %s21 = ssub.s32 %s15, 2
    %s31 = sadd.s32 1, %s24
    %p32 = scmp.ge.s32.totalorder %s31, 1
    %s33 = scalar_select %p32, 0, %s31
    %s34 = sadd.s32 1, %s23
    %s35 = scalar_select %p32, %s34, %s23
    %p36 = scmp.ge.s32.totalorder %s35, 2
    %s37 = scalar_select %p36, 0, %s35
    %s38 = sadd.s32 1, %s22
    %s39 = scalar_select %p36, %s38, %s22
    %p40 = scmp.ge.s32.totalorder %s39, 2
    %s41 = scalar_select %p40, 0, %s39
    %s42 = ssub.s32 1, %s22
    %s43 = smul.u32 %s23, %s42
    %s44 = smul.u32 %s24, %s42
    %s45 = ssub.s32 1, %s41
    %s46 = smul.u32 %s37, %s45
    %s47 = smul.u32 %s33, %s45
    %s48 = ssub.s32 %s43, %s46
    %s49 = ssub.s32 %s44, %s47
    %s50 = sor.u32 %s48, %s49
    %p51 = scmp.eq.s32.totalorder %s50, 0
    %s53 = sadd.s32 %s52, 1
    %s54 = scalar_select %p51, %s52, %s53
    %p57 = pneg %p51
    %p58 = scmp.eq.s32.totalorder %s15, 3
    %p59 = por %p57, %p58
    %p60 = scmp.ne.s32.totalorder %s52, %s55
    %p61 = scmp.eq.s32.totalorder %s15, 0
    %p62 = por %p60, %p61
    %p63 = scmp.ne.s32.totalorder %s52, %s55
    %p64 = scmp.eq.s32.totalorder %s20, 3
    %p65 = por %p63, %p64
    %p66 = scmp.ne.s32.totalorder %s55, %s56
    %p67 = scmp.eq.s32.totalorder %s20, 0
    %p68 = por %p66, %p67
    %p69 = scmp.ne.s32.totalorder %s55, %s56
    %p70 = scmp.eq.s32.totalorder %s21, 3
    %p71 = por %p69, %p70
    %p73 = scmp.ne.s32.totalorder %s56, %s72
    %p74 = scmp.eq.s32.totalorder %s21, 0
    %p75 = por %p73, %p74
    %s76 = ssub.s32 1, %s22
    %s77 = smul.u32 %s23, %s76
    %s78 = smul.u32 %s24, %s76
    %s79 = ssub.s32 1, %s41
    %s80 = smul.u32 %s37, %s79
    %s81 = smul.u32 %s33, %s79
    %s82 = ssub.s32 %s77, %s80
    %s83 = ssub.s32 %s78, %s81
    %s84 = sor.u32 %s82, %s83
    %p85 = scmp.eq.s32.totalorder %s84, 0
    %s87 = sadd.s32 %s86, 1
    %s88 = scalar_select %p85, %s86, %s87
    %p91 = pneg %p85
    %p92 = scmp.eq.s32.totalorder %s15, 3
    %p93 = por %p91, %p92
    %p94 = scmp.ne.s32.totalorder %s86, %s89
    %p95 = scmp.eq.s32.totalorder %s15, 0
    %p96 = por %p94, %p95
    %p97 = scmp.ne.s32.totalorder %s86, %s89
    %p98 = scmp.eq.s32.totalorder %s20, 3
    %p99 = por %p97, %p98
    %p100 = scmp.ne.s32.totalorder %s89, %s90
    %p101 = scmp.eq.s32.totalorder %s20, 0
    %p102 = por %p100, %p101
    %p103 = scmp.ne.s32.totalorder %s89, %s90
    %p104 = scmp.eq.s32.totalorder %s21, 3
    %p105 = por %p103, %p104
    %p107 = scmp.ne.s32.totalorder %s90, %s106
    %p108 = scmp.eq.s32.totalorder %s21, 0
    %p109 = por %p107, %p108
    %s110 = ssub.s32 1, %s22
    %s111 = smul.u32 %s23, %s110
    %s112 = smul.u32 %s24, %s110
    %s113 = ssub.s32 1, %s41
    %s114 = smul.u32 %s37, %s113
    %s115 = smul.u32 %s33, %s113
    %s116 = ssub.s32 %s111, %s114
    %s117 = ssub.s32 %s112, %s115
    %s118 = sor.u32 %s116, %s117
    %p119 = scmp.eq.s32.totalorder %s118, 0
    %s121 = sadd.s32 %s120, 1
    %s122 = scalar_select %p119, %s120, %s121
    %p125 = pneg %p119
    %p126 = scmp.eq.s32.totalorder %s15, 3
    %p127 = por %p125, %p126
    %p128 = scmp.ne.s32.totalorder %s120, %s123
    %p129 = scmp.eq.s32.totalorder %s15, 0
    %p130 = por %p128, %p129
    %p131 = scmp.ne.s32.totalorder %s120, %s123
    %p132 = scmp.eq.s32.totalorder %s20, 3
    %p133 = por %p131, %p132
    %p134 = scmp.ne.s32.totalorder %s123, %s124
    %p135 = scmp.eq.s32.totalorder %s20, 0
    %p136 = por %p134, %p135
    %p137 = scmp.ne.s32.totalorder %s123, %s124
    %p138 = scmp.eq.s32.totalorder %s21, 3
    %p139 = por %p137, %p138
    %p141 = scmp.ne.s32.totalorder %s124, %s140
    %p142 = scmp.eq.s32.totalorder %s21, 0
    %p143 = por %p141, %p142
    %s144 = ssub.s32 1, %s22
    %s145 = smul.u32 %s23, %s144
    %s146 = smul.u32 %s24, %s144
    %s147 = ssub.s32 1, %s41
    %s148 = smul.u32 %s37, %s147
    %s149 = smul.u32 %s33, %s147
    %s150 = ssub.s32 %s145, %s148
    %s151 = ssub.s32 %s146, %s149
    %s152 = sor.u32 %s150, %s151
    %p153 = scmp.eq.s32.totalorder %s152, 0
    %s155 = sadd.s32 %s154, 1
    %s156 = scalar_select %p153, %s154, %s155
    %p159 = pneg %p153
    %p160 = scmp.eq.s32.totalorder %s15, 3
    %p161 = por %p159, %p160
    %p162 = scmp.ne.s32.totalorder %s154, %s157
    %p163 = scmp.eq.s32.totalorder %s15, 0
    %p164 = por %p162, %p163
    %p165 = scmp.ne.s32.totalorder %s154, %s157
    %p166 = scmp.eq.s32.totalorder %s20, 3
    %p167 = por %p165, %p166
    %p168 = scmp.ne.s32.totalorder %s157, %s158
    %p169 = scmp.eq.s32.totalorder %s20, 0
    %p170 = por %p168, %p169
    %p171 = scmp.ne.s32.totalorder %s157, %s158
    %p172 = scmp.eq.s32.totalorder %s21, 3
    %p173 = por %p171, %p172
    %p175 = scmp.ne.s32.totalorder %s158, %s174
    %p176 = scmp.eq.s32.totalorder %s21, 0
    %p177 = por %p175, %p176
    %s178 = smul.u32 %s23, %s22
    %s179 = smul.u32 %s24, %s22
    %s180 = smul.u32 %s37, %s41
    %s181 = smul.u32 %s33, %s41
    %s182 = ssub.s32 %s178, %s180
    %s183 = ssub.s32 %s179, %s181
    %s184 = sor.u32 %s182, %s183
    %p185 = scmp.eq.s32.totalorder %s184, 0
    %s187 = sadd.s32 %s186, 1
    %s188 = scalar_select %p185, %s186, %s187
    %p191 = pneg %p185
    %p192 = scmp.eq.s32.totalorder %s15, 3
    %p193 = por %p191, %p192
    %p194 = scmp.ne.s32.totalorder %s186, %s189
    %p195 = scmp.eq.s32.totalorder %s15, 0
    %p196 = por %p194, %p195
    %p197 = scmp.ne.s32.totalorder %s186, %s189
    %p198 = scmp.eq.s32.totalorder %s20, 3
    %p199 = por %p197, %p198
    %p200 = scmp.ne.s32.totalorder %s189, %s190
    %p201 = scmp.eq.s32.totalorder %s20, 0
    %p202 = por %p200, %p201
    %p203 = scmp.ne.s32.totalorder %s189, %s190
    %p204 = scmp.eq.s32.totalorder %s21, 3
    %p205 = por %p203, %p204
    %p207 = scmp.ne.s32.totalorder %s190, %s206
    %p208 = scmp.eq.s32.totalorder %s21, 0
    %p209 = por %p207, %p208
    %s211 = sadd.s32 %s210, 1
    %p214 = scmp.eq.s32.totalorder %s15, 3
    %p215 = scmp.ne.s32.totalorder %s210, %s212
    %p216 = scmp.eq.s32.totalorder %s15, 0
    %p217 = por %p215, %p216
    %p218 = scmp.ne.s32.totalorder %s210, %s212
    %p219 = scmp.eq.s32.totalorder %s20, 3
    %p220 = por %p218, %p219
    %p221 = scmp.ne.s32.totalorder %s212, %s213
    %p222 = scmp.eq.s32.totalorder %s20, 0
    %p223 = por %p221, %p222
    %p224 = scmp.ne.s32.totalorder %s212, %s213
    %p225 = scmp.eq.s32.totalorder %s21, 3
    %p226 = por %p224, %p225
    %p228 = scmp.ne.s32.totalorder %s213, %s227
    %p229 = scmp.eq.s32.totalorder %s21, 0
    %p230 = por %p228, %p229
    %s232 = sadd.s32 %s231, 1
    %p235 = scmp.eq.s32.totalorder %s15, 3
    %p236 = scmp.ne.s32.totalorder %s231, %s233
    %p237 = scmp.eq.s32.totalorder %s15, 0
    %p238 = por %p236, %p237
    %p239 = scmp.ne.s32.totalorder %s231, %s233
    %p240 = scmp.eq.s32.totalorder %s20, 3
    %p241 = por %p239, %p240
    %p242 = scmp.ne.s32.totalorder %s233, %s234
    %p243 = scmp.eq.s32.totalorder %s20, 0
    %p244 = por %p242, %p243
    %p245 = scmp.ne.s32.totalorder %s233, %s234
    %p246 = scmp.eq.s32.totalorder %s21, 3
    %p247 = por %p245, %p246
    %p249 = scmp.ne.s32.totalorder %s234, %s248
    %p250 = scmp.eq.s32.totalorder %s21, 0
    %p251 = por %p249, %p250
    %s253 = sadd.s32 %s252, 1
    %p256 = scmp.eq.s32.totalorder %s15, 3
    %p257 = scmp.ne.s32.totalorder %s252, %s254
    %p258 = scmp.eq.s32.totalorder %s15, 0
    %p259 = por %p257, %p258
    %p260 = scmp.ne.s32.totalorder %s252, %s254
    %p261 = scmp.eq.s32.totalorder %s20, 3
    %p262 = por %p260, %p261
    %p263 = scmp.ne.s32.totalorder %s254, %s255
    %p264 = scmp.eq.s32.totalorder %s20, 0
    %p265 = por %p263, %p264
    %p266 = scmp.ne.s32.totalorder %s254, %s255
    %p267 = scmp.eq.s32.totalorder %s21, 3
    %p268 = por %p266, %p267
    %p270 = scmp.ne.s32.totalorder %s255, %s269
    %p271 = scmp.eq.s32.totalorder %s21, 0
    %p272 = por %p270, %p271
    %s274 = sadd.s32 %s273, 1
    %p277 = scmp.eq.s32.totalorder %s15, 3
    %p278 = scmp.ne.s32.totalorder %s273, %s275
    %p279 = scmp.eq.s32.totalorder %s15, 0
    %p280 = por %p278, %p279
    %p281 = scmp.ne.s32.totalorder %s273, %s275
    %p282 = scmp.eq.s32.totalorder %s20, 3
    %p283 = por %p281, %p282
    %p284 = scmp.ne.s32.totalorder %s275, %s276
    %p285 = scmp.eq.s32.totalorder %s20, 0
    %p286 = por %p284, %p285
    %p287 = scmp.ne.s32.totalorder %s275, %s276
    %p288 = scmp.eq.s32.totalorder %s21, 3
    %p289 = por %p287, %p288
    %p291 = scmp.ne.s32.totalorder %s276, %s290
    %p292 = scmp.eq.s32.totalorder %s21, 0
    %p293 = por %p291, %p292
    %s294 = smul.u32 %s23, %s22
    %s295 = smul.u32 %s24, %s22
    %s296 = smul.u32 %s37, %s41
    %s297 = smul.u32 %s33, %s41
    %s298 = ssub.s32 %s294, %s296
    %s299 = ssub.s32 %s295, %s297
    %s300 = sor.u32 %s298, %s299
    %p301 = scmp.eq.s32.totalorder %s300, 0
    %s303 = sadd.s32 %s302, 1
    %s304 = scalar_select %p301, %s302, %s303
    %p307 = pneg %p301
    %p308 = scmp.eq.s32.totalorder %s15, 3
    %p309 = por %p307, %p308
    %p310 = scmp.ne.s32.totalorder %s302, %s305
    %p311 = scmp.eq.s32.totalorder %s15, 0
    %p312 = por %p310, %p311
    %p313 = scmp.ne.s32.totalorder %s302, %s305
    %p314 = scmp.eq.s32.totalorder %s20, 3
    %p315 = por %p313, %p314
    %p316 = scmp.ne.s32.totalorder %s305, %s306
    %p317 = scmp.eq.s32.totalorder %s20, 0
    %p318 = por %p316, %p317
    %p319 = scmp.ne.s32.totalorder %s305, %s306
    %p320 = scmp.eq.s32.totalorder %s21, 3
    %p321 = por %p319, %p320
    %p323 = scmp.ne.s32.totalorder %s306, %s322
    %p324 = scmp.eq.s32.totalorder %s21, 0
    %p325 = por %p323, %p324
    %p326 = scmp.le.s32.totalorder 1, %s15
    %p327 = scmp.lt.s32.totalorder %s15, 5
    %p328 = pnand %p326, %p327
    %p329 = pneg %p328
    // Predicated region
    $region9: #{ffc_bn_act_forward.5} parent=5 // pred_check
      _
    $region10: #{ffc_bn_act_forward.5} parent=5 // pred_check_branch
      %331 = sbr.rel (%p328) target = $region12
    $region11: #{ffc_bn_act_forward.5} parent=5 // pred_region
      %s332 = ssub.s32 %s15, 1
      // Predicated region
      $region13: #{ffc_bn_act_forward.5} parent=11 // pred_check
        %p333 = pneg %p223
      $region14: #{ffc_bn_act_forward.5} parent=11 // pred_check_branch
        %335 = sbr.rel (%p333) target = $region16
      $region15: #{ffc_bn_act_forward.5} parent=11 // pred_region
        _
      $region16: #{ffc_bn_act_forward.5} parent=11 // pred_fallthru
        _
      // Predicated region
      $region17: #{ffc_bn_act_forward.5} parent=11 // pred_check
        %p336 = pneg %p244
      $region18: #{ffc_bn_act_forward.5} parent=11 // pred_check_branch
        %338 = sbr.rel (%p336) target = $region20
      $region19: #{ffc_bn_act_forward.5} parent=11 // pred_region
        _
      $region20: #{ffc_bn_act_forward.5} parent=11 // pred_fallthru
        _
      // Predicated region
      $region21: #{ffc_bn_act_forward.5} parent=11 // pred_check
        %p339 = pneg %p265
      $region22: #{ffc_bn_act_forward.5} parent=11 // pred_check_branch
        %341 = sbr.rel (%p339) target = $region24
      $region23: #{ffc_bn_act_forward.5} parent=11 // pred_region
        _
      $region24: #{ffc_bn_act_forward.5} parent=11 // pred_fallthru
        _
      // Predicated region
      $region25: #{ffc_bn_act_forward.5} parent=11 // pred_check
        %p342 = pneg %p286
      $region26: #{ffc_bn_act_forward.5} parent=11 // pred_check_branch
        %344 = sbr.rel (%p342) target = $region28
      $region27: #{ffc_bn_act_forward.5} parent=11 // pred_region
        _
      $region28: #{ffc_bn_act_forward.5} parent=11 // pred_fallthru
        _
    $region12: #{ffc_bn_act_forward.5} parent=5 // pred_fallthru
      _
    %p345 = scmp.lt.s32.totalorder %s15, 4
    // Predicated region
    $region29: #{ffc_bn_act_forward.5} parent=5 // pred_check
      %p346 = pneg %p345
    $region30: #{ffc_bn_act_forward.5} parent=5 // pred_check_branch
      %348 = sbr.rel (%p346) target = $region32
    $region31: #{ffc_bn_act_forward.5} parent=5 // pred_region
      // Predicated region
      $region33: #{ffc_bn_act_forward.5} parent=31 // pred_check
        %p349 = pneg %p62
      $region34: #{ffc_bn_act_forward.5} parent=31 // pred_check_branch
        %351 = sbr.rel (%p349) target = $region36
      $region35: #{ffc_bn_act_forward.5} parent=31 // pred_region
        %s352 = ssub.s32 1, %s22
        %s353 = smul.u32 %s23, %s352
        %s354 = smul.u32 %s24, %s352
        %s355 = smul.u32 2, %s354
        %p356 = scmp.lt.s32.totalorder %s353, 1
        %s357 = scalar_select %p356, %s353, 1
        %p358 = scmp.lt.s32.totalorder %s355, 1
        %s359 = scalar_select %p358, %s355, 1
        %s360 = smul.addr %s357, 2
        %s361 = sadd.s32 %s359, %s360
        %s362 = smul.addr %s361, 8
        %s363 = scalar_lea.vmem %s0, %s362
        %s364 = ssub.s32 1, %s22
        %s365 = smul.u32 %s23, %s364
        %s366 = smul.u32 %s24, %s364
        %s367 = smul.u32 2, %s366
      $region36: #{ffc_bn_act_forward.5} parent=31 // pred_fallthru
        _
      // Predicated region
      $region37: #{ffc_bn_act_forward.5} parent=31 // pred_check
        %p368 = pneg %p96
      $region38: #{ffc_bn_act_forward.5} parent=31 // pred_check_branch
        %370 = sbr.rel (%p368) target = $region40
      $region39: #{ffc_bn_act_forward.5} parent=31 // pred_region
        %s371 = ssub.s32 1, %s22
        %s372 = smul.u32 %s23, %s371
        %s373 = smul.u32 %s24, %s371
        %s374 = smul.u32 2, %s373
        %p375 = scmp.lt.s32.totalorder %s372, 1
        %s376 = scalar_select %p375, %s372, 1
        %p377 = scmp.lt.s32.totalorder %s374, 1
        %s378 = scalar_select %p377, %s374, 1
        %s379 = smul.addr %s376, 2
        %s380 = sadd.s32 %s378, %s379
        %s381 = smul.addr %s380, 2
        %s382 = scalar_lea.vmem %s1, %s381
        %s383 = ssub.s32 1, %s22
        %s384 = smul.u32 %s23, %s383
        %s385 = smul.u32 %s24, %s383
        %s386 = smul.u32 2, %s385
      $region40: #{ffc_bn_act_forward.5} parent=31 // pred_fallthru
        _
      // Predicated region
      $region41: #{ffc_bn_act_forward.5} parent=31 // pred_check
        %p387 = pneg %p130
      $region42: #{ffc_bn_act_forward.5} parent=31 // pred_check_branch
        %389 = sbr.rel (%p387) target = $region44
      $region43: #{ffc_bn_act_forward.5} parent=31 // pred_region
        %s390 = ssub.s32 1, %s22
        %s391 = smul.u32 %s23, %s390
        %s392 = smul.u32 %s24, %s390
        %s393 = smul.u32 2, %s392
        %p394 = scmp.lt.s32.totalorder %s391, 1
        %s395 = scalar_select %p394, %s391, 1
        %p396 = scmp.lt.s32.totalorder %s393, 1
        %s397 = scalar_select %p396, %s393, 1
        %s398 = smul.addr %s395, 2
        %s399 = sadd.s32 %s397, %s398
        %s400 = smul.addr %s399, 2
        %s401 = scalar_lea.vmem %s2, %s400
        %s402 = ssub.s32 1, %s22
        %s403 = smul.u32 %s23, %s402
        %s404 = smul.u32 %s24, %s402
        %s405 = smul.u32 2, %s404
      $region44: #{ffc_bn_act_forward.5} parent=31 // pred_fallthru
        _
      // Predicated region
      $region45: #{ffc_bn_act_forward.5} parent=31 // pred_check
        %p406 = pneg %p164
      $region46: #{ffc_bn_act_forward.5} parent=31 // pred_check_branch
        %408 = sbr.rel (%p406) target = $region48
      $region47: #{ffc_bn_act_forward.5} parent=31 // pred_region
        %s409 = ssub.s32 1, %s22
        %s410 = smul.u32 %s23, %s409
        %s411 = smul.u32 %s24, %s409
        %s412 = smul.u32 2, %s411
        %p413 = scmp.lt.s32.totalorder %s410, 1
        %s414 = scalar_select %p413, %s410, 1
        %p415 = scmp.lt.s32.totalorder %s412, 1
        %s416 = scalar_select %p415, %s412, 1
        %s417 = smul.addr %s414, 2
        %s418 = sadd.s32 %s416, %s417
        %s419 = smul.addr %s418, 2
        %s420 = scalar_lea.vmem %s3, %s419
        %s421 = ssub.s32 1, %s22
        %s422 = smul.u32 %s23, %s421
        %s423 = smul.u32 %s24, %s421
        %s424 = smul.u32 2, %s423
      $region48: #{ffc_bn_act_forward.5} parent=31 // pred_fallthru
        _
      // Predicated region
      $region49: #{ffc_bn_act_forward.5} parent=31 // pred_check
        %p425 = pneg %p196
      $region50: #{ffc_bn_act_forward.5} parent=31 // pred_check_branch
        %427 = sbr.rel (%p425) target = $region52
      $region51: #{ffc_bn_act_forward.5} parent=31 // pred_region
        %s428 = smul.u32 %s23, %s22
        %s429 = smul.u32 %s24, %s22
        %s430 = smul.u32 2, %s429
        %p431 = scmp.lt.s32.totalorder %s428, 1
        %s432 = scalar_select %p431, %s428, 1
        %p433 = scmp.lt.s32.totalorder %s430, 1
        %s434 = scalar_select %p433, %s430, 1
        %s435 = smul.addr %s432, 2
        %s436 = sadd.s32 %s434, %s435
        %s437 = smul.addr %s436, 4
        %s438 = scalar_lea.vmem %s4, %s437
        %s439 = smul.u32 %s23, %s22
        %s440 = smul.u32 %s24, %s22
        %s441 = smul.u32 2, %s440
      $region52: #{ffc_bn_act_forward.5} parent=31 // pred_fallthru
        _
    $region32: #{ffc_bn_act_forward.5} parent=5 // pred_fallthru
      _
    %p442 = scmp.le.s32.totalorder 1, %s15
    %p443 = scmp.lt.s32.totalorder %s15, 5
    %p444 = pnand %p442, %p443
    %p445 = pneg %p444
    // Predicated region
    $region53: #{ffc_bn_act_forward.5} parent=5 // pred_check
      _
    $region54: #{ffc_bn_act_forward.5} parent=5 // pred_check_branch
      %447 = sbr.rel (%p444) target = $region56
    $region55: #{ffc_bn_act_forward.5} parent=5 // pred_region
      %s448 = ssub.s32 %s15, 1
      %s449 = ssub.s32 1, %s25
      %s450 = smul.u32 %s26, %s449
      %s451 = smul.u32 %s27, %s449
      %s452 = smul.u32 2, %s451
      %p453 = scmp.lt.s32.totalorder %s450, 1
      %s454 = scalar_select %p453, %s450, 1
      %p455 = scmp.lt.s32.totalorder %s452, 1
      %s456 = scalar_select %p455, %s452, 1
      %s457 = smul.addr %s454, 2
      %s458 = sadd.s32 %s456, %s457
      %s459 = smul.addr %s458, 8
      %s460 = scalar_lea.vmem %s0, %s459
      %p461 = pneg %p68
      %p462 = pneg %p65
      %s463 = ssub.s32 1, %s25
      %s464 = smul.u32 %s26, %s463
      %s465 = smul.u32 %s27, %s463
      %s466 = smul.u32 2, %s465
      %p467 = scmp.lt.s32.totalorder %s464, 1
      %s468 = scalar_select %p467, %s464, 1
      %p469 = scmp.lt.s32.totalorder %s466, 1
      %s470 = scalar_select %p469, %s466, 1
      %s471 = smul.addr %s468, 2
      %s472 = sadd.s32 %s470, %s471
      %s473 = smul.addr %s472, 2
      %s474 = scalar_lea.vmem %s1, %s473
      %p475 = pneg %p102
      %p476 = pneg %p99
      %s477 = ssub.s32 1, %s25
      %s478 = smul.u32 %s26, %s477
      %s479 = smul.u32 %s27, %s477
      %s480 = smul.u32 2, %s479
      %p481 = scmp.lt.s32.totalorder %s478, 1
      %s482 = scalar_select %p481, %s478, 1
      %p483 = scmp.lt.s32.totalorder %s480, 1
      %s484 = scalar_select %p483, %s480, 1
      %s485 = smul.addr %s482, 2
      %s486 = sadd.s32 %s484, %s485
      %s487 = smul.addr %s486, 2
      %s488 = scalar_lea.vmem %s2, %s487
      %p489 = pneg %p136
      %p490 = pneg %p133
      %s491 = ssub.s32 1, %s25
      %s492 = smul.u32 %s26, %s491
      %s493 = smul.u32 %s27, %s491
      %s494 = smul.u32 2, %s493
      %p495 = scmp.lt.s32.totalorder %s492, 1
      %s496 = scalar_select %p495, %s492, 1
      %p497 = scmp.lt.s32.totalorder %s494, 1
      %s498 = scalar_select %p497, %s494, 1
      %s499 = smul.addr %s496, 2
      %s500 = sadd.s32 %s498, %s499
      %s501 = smul.addr %s500, 2
      %s502 = scalar_lea.vmem %s3, %s501
      %p503 = pneg %p170
      %p504 = pneg %p167
      %s505 = smul.u32 %s26, %s25
      %s506 = smul.u32 %s27, %s25
      %s507 = smul.u32 2, %s506
      %p508 = scmp.lt.s32.totalorder %s505, 1
      %s509 = scalar_select %p508, %s505, 1
      %p510 = scmp.lt.s32.totalorder %s507, 1
      %s511 = scalar_select %p510, %s507, 1
      %s512 = smul.addr %s509, 2
      %s513 = sadd.s32 %s511, %s512
      %s514 = smul.addr %s513, 4
      %s515 = scalar_lea.vmem %s4, %s514
      %p516 = pneg %p202
      %p517 = pneg %p199
      %p518 = pneg %p223
      %p519 = pneg %p220
      %p520 = pneg %p244
      %p521 = pneg %p241
      %p522 = pneg %p265
      %p523 = pneg %p262
      %p524 = pneg %p286
      %p525 = pneg %p283
      %p526 = pneg %p318
      %p527 = pneg %p315
      %s528 = smul.u32 %s26, %s25
      %s529 = smul.u32 %s27, %s25
      %s530 = smul.u32 2, %s529
      %p531 = scmp.lt.s32.totalorder %s528, 1
      %s532 = scalar_select %p531, %s528, 1
      %p533 = scmp.lt.s32.totalorder %s530, 1
      %s534 = scalar_select %p533, %s530, 1
      %s535 = smul.addr %s532, 2
      %s536 = sadd.s32 %s534, %s535
      %s537 = smul.addr %s536, 8
      %s538 = scalar_lea.vmem %s9, %s537
      %s539 = ssub.s32 1, %s25
      %s540 = smul.u32 %s26, %s539
      %s541 = smul.u32 %s27, %s539
      %s542 = smul.u32 2, %s541
      %p543 = scmp.lt.s32.totalorder %s540, 1
      %s544 = scalar_select %p543, %s540, 1
      %p545 = scmp.lt.s32.totalorder %s542, 1
      %s546 = scalar_select %p545, %s542, 1
      %s547 = smul.addr %s544, 2
      %s548 = sadd.s32 %s546, %s547
      %s549 = smul.addr %s548, 8
      %s550 = scalar_lea.vmem %s0, %s549
      %s551 = ssub.s32 1, %s25
      %s552 = smul.u32 %s26, %s551
      %s553 = smul.u32 %s27, %s551
      %s554 = smul.u32 2, %s553
      %s555 = ssub.s32 1, %s25
      %s556 = smul.u32 %s26, %s555
      %s557 = smul.u32 %s27, %s555
      %s558 = smul.u32 2, %s557
      %p559 = scmp.lt.s32.totalorder %s556, 1
      %s560 = scalar_select %p559, %s556, 1
      %p561 = scmp.lt.s32.totalorder %s558, 1
      %s562 = scalar_select %p561, %s558, 1
      %s563 = smul.addr %s560, 2
      %s564 = sadd.s32 %s562, %s563
      %s565 = smul.addr %s564, 2
      %s566 = scalar_lea.vmem %s1, %s565
      %s567 = ssub.s32 1, %s25
      %s568 = smul.u32 %s26, %s567
      %s569 = smul.u32 %s27, %s567
      %s570 = smul.u32 2, %s569
      %s571 = ssub.s32 1, %s25
      %s572 = smul.u32 %s26, %s571
      %s573 = smul.u32 %s27, %s571
      %s574 = smul.u32 2, %s573
      %p575 = scmp.lt.s32.totalorder %s572, 1
      %s576 = scalar_select %p575, %s572, 1
      %p577 = scmp.lt.s32.totalorder %s574, 1
      %s578 = scalar_select %p577, %s574, 1
      %s579 = smul.addr %s576, 2
      %s580 = sadd.s32 %s578, %s579
      %s581 = smul.addr %s580, 2
      %s582 = scalar_lea.vmem %s2, %s581
      %s583 = ssub.s32 1, %s25
      %s584 = smul.u32 %s26, %s583
      %s585 = smul.u32 %s27, %s583
      %s586 = smul.u32 2, %s585
      %s587 = ssub.s32 1, %s25
      %s588 = smul.u32 %s26, %s587
      %s589 = smul.u32 %s27, %s587
      %s590 = smul.u32 2, %s589
      %p591 = scmp.lt.s32.totalorder %s588, 1
      %s592 = scalar_select %p591, %s588, 1
      %p593 = scmp.lt.s32.totalorder %s590, 1
      %s594 = scalar_select %p593, %s590, 1
      %s595 = smul.addr %s592, 2
      %s596 = sadd.s32 %s594, %s595
      %s597 = smul.addr %s596, 2
      %s598 = scalar_lea.vmem %s3, %s597
      %s599 = ssub.s32 1, %s25
      %s600 = smul.u32 %s26, %s599
      %s601 = smul.u32 %s27, %s599
      %s602 = smul.u32 2, %s601
      %s603 = smul.u32 %s26, %s25
      %s604 = smul.u32 %s27, %s25
      %s605 = smul.u32 2, %s604
      %p606 = scmp.lt.s32.totalorder %s603, 1
      %s607 = scalar_select %p606, %s603, 1
      %p608 = scmp.lt.s32.totalorder %s605, 1
      %s609 = scalar_select %p608, %s605, 1
      %s610 = smul.addr %s607, 2
      %s611 = sadd.s32 %s609, %s610
      %s612 = smul.addr %s611, 4
      %s613 = scalar_lea.vmem %s4, %s612
      %s614 = smul.u32 %s26, %s25
      %s615 = smul.u32 %s27, %s25
      %s616 = smul.u32 2, %s615
      %s617 = smul.u32 %s26, %s25
      %s618 = smul.u32 %s27, %s25
      %s619 = smul.u32 2, %s618
      %p620 = scmp.lt.s32.totalorder %s617, 1
      %s621 = scalar_select %p620, %s617, 1
      %p622 = scmp.lt.s32.totalorder %s619, 1
      %s623 = scalar_select %p622, %s619, 1
      %s624 = smul.addr %s621, 2
      %s625 = sadd.s32 %s623, %s624
      %s626 = smul.addr %s625, 8
      %s627 = scalar_lea.vmem %s9, %s626
      %s628 = smul.u32 %s26, %s25
      %s629 = smul.u32 %s27, %s25
      %s630 = smul.u32 2, %s629
      %s631 = sadd.s32 %s26, %s27
      %p632 = scmp.eq.s32.totalorder %s25, 0
      %p633 = scmp.eq.s32.totalorder %s631, 0
      %p634 = pnand %p632, %p633
      %p635 = pneg %p634
      // Predicated region
      $region57: #{ffc_bn_act_forward.5} parent=55 // pred_check
        _
      $region58: #{ffc_bn_act_forward.5} parent=55 // pred_check_branch
        %637 = sbr.rel (%p634) target = $region60
      $region59: #{ffc_bn_act_forward.5} parent=55 // pred_region
        %vm638 = vcmask 3072
        %639 = vst.msk [vmem:[#allocation2] sm:$0xf] %vm638, 0.0
        %640 = vst.msk [vmem:[#allocation3] sm:$0xf] %vm638, 0.0
      $region60: #{ffc_bn_act_forward.5} parent=55 // pred_fallthru
        _
      // Predicated region
      $region61: #{ffc_bn_act_forward.5} parent=55 // pred_check
        %p641 = pneg %p632
      $region62: #{ffc_bn_act_forward.5} parent=55 // pred_check_branch
        %643 = sbr.rel (%p641) target = $region64
      $region63: #{ffc_bn_act_forward.5} parent=55 // pred_region
        %v644 = vld [vmem:[%s566] sm:$0xf]
        %v645 = vld [vmem:[%s582] sm:$0xf]
        %v646 = vadd.f32 %v644, %v645
        %v647 = vld [vmem:[%s598] sm:$0xf]
        %v648 = vadd.f32 %v646, %v647
        %v649 = vld [vmem:[%s5] sm:$0xf]
        %v650 = vld [vmem:[%s550] sm:$0xff]
        %v651 = vld [vmem:[%s550 + $0x8] sm:$0xff]
        %v652 = vld [vmem:[%s6] sm:$0xf]
        %v655 = vunpack.c.l.s4 1983009808
        %v656 = vunpack.c.0.s8 %v655
        %v657 = vlaneseq
        %v658 = vshrl.u32 %v657, 7
        %v659 = vsub.s32 %v656, %v658
        %v660 = vrot.slane %v648, %v659
        %v661 = vcombine.high %v660, %v660
        %vm662 = vcmask 15360
        %v664 = vsel %vm662, %v652, 0
        %vm666 = vcmask 1041408
        %v667 = vsel %vm666, %v660, 0
        %v669 = vsel %vm666, %v661, 0
        %671 = vmatprep.subr.mxu0 0.0
        %672 = vmatpush1.msra.mxu0 0.0
        %673 = vmatprep.subr.mxu0 0.0
        %674 = vmatpush1.msra.mxu0 0.0
        %675 = vmatprep.subr.mxu0 0.0
        %676 = vmatpush1.msra.mxu0 0.0
        %677 = vmatprep.subr.mxu0 0.0
        %678 = vmatpush1.msra.mxu0 0.0
        %679 = vmatprep.subr.mxu0 0.0
        %680 = vmatpush1.msra.mxu0 0.0
        %681 = vmatprep.subr.mxu0 0.0
        %682 = vmatpush1.msra.mxu0 0.0
        %683 = vmatprep.subr.mxu0 0.0
        %684 = vmatpush1.msra.mxu0 0.0
        %685 = vmatprep.subr.mxu0 0.0
        %686 = vmatpush1.msra.mxu0 0.0
        %687 = vmatprep.subr.mxu0 0.0
        %688 = vmatpush1.msra.mxu0 0.0
        %689 = vmatprep.subr.mxu0 0.0
        %690 = vmatpush1.msra.mxu0 0.0
        %691 = vmatprep.subr.mxu0 0.0
        %692 = vmatpush1.msra.mxu0 0.0
        %693 = vmatprep.subr.mxu0 0.0
        %694 = vmatpush1.msra.mxu0 0.0
        %695 = vmatprep.subr.mxu0 0.0
        %696 = vmatpush1.msra.mxu0 0.0
        %697 = vmatprep.subr.mxu0 0.0
        %698 = vmatpush1.msra.mxu0 0.0
        %699 = vmatprep.subr.mxu0 0.0
        %700 = vmatpush1.msra.mxu0 0.0
        %701 = vmatprep.subr.mxu0 %v669
        %702 = vmatpush1.msra.mxu0 %v667
        %703 = vmatprep.subr.mxu0 0.0
        %704 = vmatpush2.msra.mxu0 0.0
        %705 = vmatprep.subr.mxu0 0.0
        %706 = vmatpush2.msra.mxu0 0.0
        %707 = vmatprep.subr.mxu0 0.0
        %708 = vmatpush2.msra.mxu0 0.0
        %709 = vmatprep.subr.mxu0 0.0
        %710 = vmatpush2.msra.mxu0 0.0
        %711 = vmatprep.subr.mxu0 0.0
        %712 = vmatpush2.msra.mxu0 0.0
        %713 = vmatprep.subr.mxu0 0.0
        %714 = vmatpush2.msra.mxu0 0.0
        %715 = vmatprep.subr.mxu0 0.0
        %716 = vmatpush2.msra.mxu0 0.0
        %717 = vmatprep.subr.mxu0 0.0
        %718 = vmatpush2.msra.mxu0 0.0
        %719 = vmatprep.subr.mxu0 0.0
        %720 = vmatpush2.msra.mxu0 0.0
        %721 = vmatprep.subr.mxu0 0.0
        %722 = vmatpush2.msra.mxu0 0.0
        %723 = vmatprep.subr.mxu0 0.0
        %724 = vmatpush2.msra.mxu0 0.0
        %725 = vmatprep.subr.mxu0 0.0
        %726 = vmatpush2.msra.mxu0 0.0
        %727 = vmatprep.subr.mxu0 0.0
        %728 = vmatpush2.msra.mxu0 0.0
        %729 = vmatprep.subr.mxu0 0.0
        %730 = vmatpush2.msra.mxu0 0.0
        %731 = vmatprep.subr.mxu0 0.0
        %732 = vmatpush2.msra.mxu0 0.0
        %733 = vmatprep.subr.mxu0 0.0
        %734 = vmatpush2.msra.mxu0 0.0
        %735 = vmatprep.mubr.f32.mxu0 0.0
        %736 = vmatmul.mubr.f32.gmra.mxu0 %v664
        %v737 = vpop.f32.mrf.mxu0
        %v738 = vadd.f32 0.0, %v737
        %v739 = vpop.f32.mrf.mxu0
        %v740 = vadd.f32 0.0, %v739
        %741 = vdwg.mxu0
        %vm742 = vcmask 64512
        %v744 = vsel %vm742, %v649, 0
        %746 = vmatprep.subr.mxu0 0.0
        %747 = vmatpush1.msra.mxu0 0.0
        %748 = vmatprep.subr.mxu0 0.0
        %749 = vmatpush1.msra.mxu0 0.0
        %750 = vmatprep.subr.mxu0 0.0
        %751 = vmatpush1.msra.mxu0 0.0
        %752 = vmatprep.subr.mxu0 0.0
        %753 = vmatpush1.msra.mxu0 0.0
        %754 = vmatprep.subr.mxu0 0.0
        %755 = vmatpush1.msra.mxu0 0.0
        %756 = vmatprep.subr.mxu0 0.0
        %757 = vmatpush1.msra.mxu0 0.0
        %758 = vmatprep.subr.mxu0 0.0
        %759 = vmatpush1.msra.mxu0 0.0
        %760 = vmatprep.subr.mxu0 0.0
        %761 = vmatpush1.msra.mxu0 0.0
        %762 = vmatprep.subr.mxu0 0.0
        %763 = vmatpush1.msra.mxu0 0.0
        %764 = vmatprep.subr.mxu0 0.0
        %765 = vmatpush1.msra.mxu0 0.0
        %766 = vmatprep.subr.mxu0 0.0
        %767 = vmatpush1.msra.mxu0 0.0
        %768 = vmatprep.subr.mxu0 0.0
        %769 = vmatpush1.msra.mxu0 0.0
        %770 = vmatprep.subr.mxu0 0.0
        %771 = vmatpush1.msra.mxu0 0.0
        %772 = vmatprep.subr.mxu0 0.0
        %773 = vmatpush1.msra.mxu0 0.0
        %774 = vmatprep.subr.mxu0 0.0
        %775 = vmatpush1.msra.mxu0 0.0
        %776 = vmatprep.subr.mxu0 %v651
        %777 = vmatpush1.msra.mxu0 %v650
        %778 = vmatprep.subr.mxu0 0.0
        %779 = vmatpush2.msra.mxu0 0.0
        %780 = vmatprep.subr.mxu0 0.0
        %781 = vmatpush2.msra.mxu0 0.0
        %782 = vmatprep.subr.mxu0 0.0
        %783 = vmatpush2.msra.mxu0 0.0
        %784 = vmatprep.subr.mxu0 0.0
        %785 = vmatpush2.msra.mxu0 0.0
        %786 = vmatprep.subr.mxu0 0.0
        %787 = vmatpush2.msra.mxu0 0.0
        %788 = vmatprep.subr.mxu0 0.0
        %789 = vmatpush2.msra.mxu0 0.0
        %790 = vmatprep.subr.mxu0 0.0
        %791 = vmatpush2.msra.mxu0 0.0
        %792 = vmatprep.subr.mxu0 0.0
        %793 = vmatpush2.msra.mxu0 0.0
        %794 = vmatprep.subr.mxu0 0.0
        %795 = vmatpush2.msra.mxu0 0.0
        %796 = vmatprep.subr.mxu0 0.0
        %797 = vmatpush2.msra.mxu0 0.0
        %798 = vmatprep.subr.mxu0 0.0
        %799 = vmatpush2.msra.mxu0 0.0
        %800 = vmatprep.subr.mxu0 0.0
        %801 = vmatpush2.msra.mxu0 0.0
        %802 = vmatprep.subr.mxu0 0.0
        %803 = vmatpush2.msra.mxu0 0.0
        %804 = vmatprep.subr.mxu0 0.0
        %805 = vmatpush2.msra.mxu0 0.0
        %806 = vmatprep.subr.mxu0 0.0
        %807 = vmatpush2.msra.mxu0 0.0
        %808 = vmatprep.subr.mxu0 0.0
        %809 = vmatpush2.msra.mxu0 0.0
        %810 = vmatprep.mubr.f32.mxu0 0.0
        %811 = vmatmul.mubr.f32.gmra.mxu0 %v744
        %v812 = vpop.f32.mrf.mxu0
        %v813 = vadd.f32 %v738, %v812
        %v814 = vpop.f32.mrf.mxu0
        %v815 = vadd.f32 %v740, %v814
        %816 = vdwg.mxu0
        %v817 = vld [vmem:[#allocation2] sm:$0xf]
        %vm818 = vcmask 1043456
        %v819 = vsel %vm818, %v813, 0.0
        %v820 = vsel %vm818, %v815, 0.0
        %v821 = vadd.f32 %v819, %v820
        %822 = vadd.xlane.f32.xlu0 %v821
        %v823 = vpop.xlane.xlu0 %822
        %v824 = vadd.f32 %v817, %v823
        %vm825 = vcmask 3072
        %826 = vst.msk [vmem:[#allocation2] sm:$0xf] %vm825, %v824
        %v827 = vld [vmem:[#allocation3] sm:$0xf]
        %v828 = vmul.f32 %v813, %v813
        %v829 = vmul.f32 %v815, %v815
        %v830 = vsel %vm818, %v828, 0.0
        %v831 = vsel %vm818, %v829, 0.0
        %v832 = vadd.f32 %v830, %v831
        %833 = vadd.xlane.f32.xlu0 %v832
        %v834 = vpop.xlane.xlu0 %833
        %v835 = vadd.f32 %v827, %v834
        %836 = vst.msk [vmem:[#allocation3] sm:$0xf] %vm825, %v835
        %v839 = vcombine.low %v813, %v815
        %s841 = smul.u32 %s631, 2
        %s842 = smul.addr %s841, 4
        %s843 = scalar_lea.vmem [#allocation4], %s842
        %844 = vst [vmem:[%s843] sm:$0xff] %v839
      $region64: #{ffc_bn_act_forward.5} parent=55 // pred_fallthru
        _
      %p845 = scmp.eq.s32.totalorder %s25, 1
      // Predicated region
      $region65: #{ffc_bn_act_forward.5} parent=55 // pred_check
        %p846 = pneg %p845
      $region66: #{ffc_bn_act_forward.5} parent=55 // pred_check_branch
        %848 = sbr.rel (%p846) target = $region68
      $region67: #{ffc_bn_act_forward.5} parent=55 // pred_region
        %s849 = smul.u32 %s631, 2
        %s850 = smul.addr %s849, 4
        %s851 = scalar_lea.vmem [#allocation4], %s850
        %v852 = vld [vmem:[%s851] sm:$0xff]
        %v853 = vld [vmem:[#allocation2] sm:$0xf]
        %v854 = vmul.f32 %v853, 0.001953125
        %v855 = vld [vmem:[#allocation3] sm:$0xf]
        %v856 = vmul.f32 %v855, 0.001953125
        %v857 = vmul.f32 %v854, %v854
        %v858 = vsub.f32 %v856, %v857
        %v859 = vld [vmem:[%s7] sm:$0xf]
        %v860 = vadd.f32 %v858, 1e-05
        %v861 = vrsqrt.pop %v860
        %v862 = vmul.f32 %v859, %v861
        %v863 = vld [vmem:[%s8] sm:$0xf]
        %v864 = vmul.f32 %v854, %v862
        %v865 = vsub.f32 %v863, %v864
        %867 = vset.pattern.permute.xlu0 0
        %868 = vperm.xlu0 %867, %v862
        %v869 = vpop.permute.xlu0 %868
        %v871 = vunpack.c.l.s4 839922192
        %v872 = vunpack.c.0.s8 %v871
        %v873 = vlaneseq
        %v874 = vshrl.u32 %v873, 7
        %v875 = vsub.s32 %v872, %v874
        %v876 = vrot.slane %v869, %v875
        %v878 = vmul.f32 %v852, %v876
        %880 = vset.pattern.permute.xlu0 0
        %881 = vperm.xlu0 %880, %v865
        %v882 = vpop.permute.xlu0 %881
        %v884 = vunpack.c.l.s4 839922192
        %v885 = vunpack.c.0.s8 %v884
        %v886 = vlaneseq
        %v887 = vshrl.u32 %v886, 7
        %v888 = vsub.s32 %v885, %v887
        %v889 = vrot.slane %v882, %v888
        %v891 = vadd.f32 %v878, %v889
        %v892 = vld [vmem:[%s613] sm:$0xff]
        %v894 = vcombine.high %v892, %v892
        %v897 = vcombine.low %v891, %v891
        %vm899 = vcmask 1043456
        %v900 = vsel %vm899, %v892, %v897
        %v901 = vsel %vm899, %v894, %v891
        %902 = vst [vmem:[%s627] sm:$0xff] %v900
        %903 = vst [vmem:[%s627 + $0x8] sm:$0xff] %v901
      $region68: #{ffc_bn_act_forward.5} parent=55 // pred_fallthru
        _
      %s904 = smul.u32 %s26, %s25
      %s905 = smul.u32 %s27, %s25
      %s906 = smul.u32 2, %s905
      %p907 = scmp.lt.s32.totalorder %s904, 1
      %s908 = scalar_select %p907, %s904, 1
      %p909 = scmp.lt.s32.totalorder %s906, 1
      %s910 = scalar_select %p909, %s906, 1
      %s911 = smul.addr %s908, 2
      %s912 = sadd.s32 %s910, %s911
      %s913 = smul.addr %s912, 8
      %s914 = scalar_lea.vmem %s9, %s913
      // Predicated region
      $region69: #{ffc_bn_act_forward.5} parent=55 // pred_check
        %p915 = pneg %p315
      $region70: #{ffc_bn_act_forward.5} parent=55 // pred_check_branch
        %917 = sbr.rel (%p915) target = $region72
      $region71: #{ffc_bn_act_forward.5} parent=55 // pred_region
        %s918 = smul.u32 %s26, %s25
        %s919 = smul.u32 %s27, %s25
        %s920 = smul.u32 2, %s919
      $region72: #{ffc_bn_act_forward.5} parent=55 // pred_fallthru
        _
    $region56: #{ffc_bn_act_forward.5} parent=5 // pred_fallthru
      _
    %p921 = scmp.le.s32.totalorder 2, %s15
    // Predicated region
    $region73: #{ffc_bn_act_forward.5} parent=5 // pred_check
      %p922 = pneg %p921
    $region74: #{ffc_bn_act_forward.5} parent=5 // pred_check_branch
      %924 = sbr.rel (%p922) target = $region76
    $region75: #{ffc_bn_act_forward.5} parent=5 // pred_region
      %s925 = ssub.s32 %s15, 2
      // Predicated region
      $region77: #{ffc_bn_act_forward.5} parent=75 // pred_check
        %p926 = pneg %p321
      $region78: #{ffc_bn_act_forward.5} parent=75 // pred_check_branch
        %928 = sbr.rel (%p926) target = $region80
      $region79: #{ffc_bn_act_forward.5} parent=75 // pred_region
        %s929 = smul.u32 %s29, %s28
        %s930 = smul.u32 %s30, %s28
        %s931 = smul.u32 2, %s930
        %p932 = scmp.lt.s32.totalorder %s929, 1
        %s933 = scalar_select %p932, %s929, 1
        %p934 = scmp.lt.s32.totalorder %s931, 1
        %s935 = scalar_select %p934, %s931, 1
        %s936 = smul.addr %s933, 2
        %s937 = sadd.s32 %s935, %s936
        %s938 = smul.addr %s937, 8
        %s939 = scalar_lea.vmem %s9, %s938
      $region80: #{ffc_bn_act_forward.5} parent=75 // pred_fallthru
        _
    $region76: #{ffc_bn_act_forward.5} parent=5 // pred_fallthru
      _
  $region6: #{ffc_bn_act_forward.5} parent=0 // loop_footer
    %s19 = sadd.s32 1, %s15
  $region7: #{ffc_bn_act_forward.5} parent=0 // loop_footer_branch
    %14 = sbr.rel target = $region3
  $region8: #{ffc_bn_act_forward.5} parent=0 // loop_exit
    _

</llo_original>
